<compile_context>
chip_gen: v7x
topology: tpu7x:2x2x1
jax: 0.10.0
libtpu: 0.0.40
codegen_flags: <defaults>
</compile_context>

<pallas_src>
import jax
import jax.numpy as jnp
from jax.experimental import pallas as pl
from jax.experimental.pallas import tpu as pltpu

LANE = 128  # lane-dense padding target for every feature axis


# ----------------------------------------------------------------------------
# helpers (plain JAX, setup / weight folding only)
# ----------------------------------------------------------------------------

def _pad2(a, rows, cols):
    out = jnp.zeros((rows, cols), a.dtype)
    return out.at[: a.shape[0], : a.shape[1]].set(a)


def _head_expand(att):
    # att: [H, C] -> A: [H*C, H*C] with A[i, j] = att[h_i, c_i] * (h_i == h_j), so
    # (x.view(N,H,C) * att).sum(-1), replicated C times per head, equals x @ A.
    h, c = att.shape
    hc = h * c
    flat = att.reshape(hc)
    same_head = (jnp.arange(hc)[:, None] // c) == (jnp.arange(hc)[None, :] // c)
    return flat[:, None] * same_head.astype(att.dtype)


def glorot(key, shape):
    fan_in, fan_out = shape[0], shape[-1]
    s = (2.0 / (fan_in + fan_out)) ** 0.5
    return (s * jax.random.normal(key, shape)).astype(jnp.float32)


# ----------------------------------------------------------------------------
# fused Pallas kernel (single invocation, dense segment ops, no scalar loops)
# ----------------------------------------------------------------------------

def _make_gat_kernel(n, e, n_layers, heads, hidden):
    et = e + n          # real edges + one self loop per node
    f32 = jnp.float32
    bf16 = jnp.bfloat16
    NEG = -1e30

    def kernel(x_ref, ts_ref, eattr_ref, rmask_ref, tkw_ref, tkb_ref,
               s_ref, d_ref, dt_ref, hmask_ref,
               wall_ref, medge_ref, bias_ref, projw_ref, projb_ref,
               out_ref):
        s_f = s_ref[...]          # [ET, N]  src one-hot (keep mask folded in)
        d_f = d_ref[...]          # [ET, N]  dst one-hot (keep mask folded in)
        dt_f = dt_ref[...]        # [N, ET]  transposed dst one-hot
        rmask = rmask_ref[...]    # [ET, 1]  1.0 for real edges, 0.0 for self loops
        hmask = hmask_ref[...]    # [H, 128] per-head lane masks

        # -------- prologue: time2vec, packed edge features, self-loop 'mean' rows --
        # TODO(synk): TimeKernel implemented as time2vec sin(t*W + b).
        t2v = jnp.sin(ts_ref[...] * tkw_ref[...] + tkb_ref[...])       # [ET, 128]
        e_real = (t2v + eattr_ref[...]) * rmask                        # loop rows -> 0
        in_deg = jnp.sum(dt_f, axis=1, keepdims=True) - 1.0            # kept in-degree
        mean_attr = (jnp.dot(dt_f, e_real, preferred_element_type=f32)
                     / jnp.maximum(in_deg, 1.0))                       # scatter-mean
        eall = e_real + (1.0 - rmask) * jnp.dot(d_f, mean_attr,
                                                preferred_element_type=f32)
        eall_b = eall.astype(bf16)

        xcur = x_ref[...]                                              # [N, 128]

        # -------- GATConv layers (python-unrolled, state stays in values/VMEM) -----
        for l in range(n_layers):
            # fused node matmul: [ h | alpha_src | alpha_dst ] in one MXU dot
            feats = jnp.dot(xcur.astype(bf16), wall_ref[l],
                            preferred_element_type=f32)                # [N, 384]
            # edge-attr attention term (time + edge lanes share one fused RHS)
            eatt = jnp.dot(eall_b, medge_ref[l],
                           preferred_element_type=f32)                 # [ET, 128]
            # gather node terms to edges via one-hot matmuls (src terms fused)
            g_src = jnp.dot(s_f, feats[:, :2 * LANE],
                            preferred_element_type=f32)                # [ET, 256]
            msg = g_src[:, :LANE]                                      # h[src]
            asrc_e = g_src[:, LANE:]                                   # alpha_src[src]
            adst_e = jnp.dot(d_f, feats[:, 2 * LANE:],
                             preferred_element_type=f32)               # alpha_dst[dst]

            logit = asrc_e + adst_e + eatt
            logit = jnp.where(logit >= 0.0, logit, 0.2 * logit)        # LeakyReLU(0.2)

            # exact per-destination max (per head), gathered back to edges.
            m_edges = jnp.zeros_like(logit)
            for h in range(heads):
                hm = hmask[h:h + 1, :]                                 # [1, 128]
                lg_h = jnp.max(jnp.where(hm > 0.0, logit, NEG),
                               axis=1, keepdims=True)                  # [ET, 1]
                m_h = jnp.max(jnp.where(d_f > 0.0, lg_h, NEG),
                              axis=0, keepdims=True)                   # [1, N]
                m_g = jnp.sum(d_f * m_h, axis=1, keepdims=True)        # [ET, 1] gather
                m_edges = m_edges + m_g * hm
            # Kept edges: logit <= segment max, clamp is a no-op (exact softmax).
            # Dropped edges: zero one-hot rows exclude them; clamp keeps exp finite.
            p = jnp.exp(jnp.minimum(logit - m_edges, 0.0))             # [ET, 128]

            # segment softmax + aggregation as two scatter matmuls
            den = jnp.dot(dt_f, p, preferred_element_type=f32)         # [N, 128]
            num = jnp.dot(dt_f, p * msg, preferred_element_type=f32)   # [N, 128]
            xcur = jnp.maximum(num / den + bias_ref[l], 0.0)           # bias + ReLU
            # TODO(synk): nn.Dropout after each layer treated as eval-mode identity.

        # -------- epilogue: final Linear projection --------------------------------
        out_ref[...] = (jnp.dot(xcur.astype(bf16), projw_ref[...],
                                preferred_element_type=f32) + projb_ref[...])

    return kernel


# ----------------------------------------------------------------------------
# wrapper
# ----------------------------------------------------------------------------

def gat_forward(params, x, edge_index, edge_attr, edge_ts, drop_key, drop=0.5):
    n = x.shape[0]
    e = edge_index.shape[1]
    et = e + n
    out_dim = params["out_dim"]
    heads = params["heads"]
    hidden = params["hidden"]
    hc = heads * hidden
    n_layers = len(params["layers"])
    t_feats = params["tk_w"].shape[1]
    edge_feats = edge_attr.shape[1]
    assert hc <= LANE and t_feats + edge_feats <= LANE

    # --- edge subsampling: torch.rand(E) > drop (self loops always kept) ---------
    keep = (jax.random.uniform(drop_key, (e,)) > drop).astype(jnp.float32)
    src = edge_index[0].astype(jnp.int32)
    dst = edge_index[1].astype(jnp.int32)
    loops = jnp.arange(n, dtype=jnp.int32)
    src_all = jnp.concatenate([src, loops])
    dst_all = jnp.concatenate([dst, loops])
    keep_all = jnp.concatenate([keep, jnp.ones((n,), jnp.float32)])

    # one-hot gather/scatter operators (keep mask folded into the edge rows)
    s_oh = jax.nn.one_hot(src_all, n, dtype=jnp.float32) * keep_all[:, None]
    d_oh = jax.nn.one_hot(dst_all, n, dtype=jnp.float32) * keep_all[:, None]
    dt_oh = d_oh.T

    # per-head lane masks
    hmask = jnp.zeros((heads, LANE), jnp.float32)
    for h in range(heads):
        hmask = hmask.at[h, h * hidden:(h + 1) * hidden].set(1.0)

    # per-layer weights: fold head selectors + attention projections, lane-pad
    wall_s, medge_s, bias_s = [], [], []
    for lp in params["layers"]:
        w = lp["w"]
        fin = w.shape[0]
        a_src = _head_expand(lp["att_src"])
        a_dst = _head_expand(lp["att_dst"])
        a_edge = _head_expand(lp["att_edge"])
        wall = jnp.zeros((LANE, 3 * LANE), jnp.float32)
        wall = wall.at[:fin, 0:hc].set(w)
        wall = wall.at[:fin, LANE:LANE + hc].set(w @ a_src)
        wall = wall.at[:fin, 2 * LANE:2 * LANE + hc].set(w @ a_dst)
        medge = jnp.zeros((LANE, LANE), jnp.float32)
        medge = medge.at[:t_feats + edge_feats, :hc].set(lp["w_edge"] @ a_edge)
        wall_s.append(wall)
        medge_s.append(medge)
        bias_s.append(_pad2(lp["bias"], 1, LANE))
    wall_stack = jnp.stack(wall_s).astype(jnp.bfloat16)     # [L, 128, 384]
    medge_stack = jnp.stack(medge_s).astype(jnp.bfloat16)   # [L, 128, 128]
    bias_stack = jnp.stack(bias_s).astype(jnp.float32)      # [L, 1, 128]

    x_pad = _pad2(x, n, LANE).astype(jnp.float32)
    ts_all = jnp.zeros((et, 1), jnp.float32).at[:e, 0].set(edge_ts)
    eattr_shift = jnp.zeros((et, LANE), jnp.float32)
    eattr_shift = eattr_shift.at[:e, t_feats:t_feats + edge_feats].set(edge_attr)
    rmask = jnp.zeros((et, 1), jnp.float32).at[:e, :].set(1.0)
    tkw = _pad2(params["tk_w"], 1, LANE).astype(jnp.float32)
    tkb = _pad2(params["tk_b"], 1, LANE).astype(jnp.float32)
    projw = _pad2(params["proj_w"], LANE, LANE).astype(jnp.bfloat16)
    projb = _pad2(params["proj_b"], 1, LANE).astype(jnp.float32)

    inputs = (x_pad, ts_all, eattr_shift, rmask, tkw, tkb,
              s_oh, d_oh, dt_oh, hmask,
              wall_stack, medge_stack, bias_stack, projw, projb)

    def full_spec(a):
        nd = a.ndim
        return pl.BlockSpec(a.shape, lambda i, nd=nd: (0,) * nd)

    # VMEM budget derived from the actual footprint (capped for v7x's 64 MiB VMEM).
    footprint = sum(int(a.size) * a.dtype.itemsize for a in inputs) + n * LANE * 4
    vmem_limit = int(min(max(6 * footprint, 8 * 1024 * 1024), 48 * 1024 * 1024))

    # Advisory cost estimate (matmuls dominate; sin/exp go to the EUP).
    mm = 2 * n * et * LANE + 2 * et * n * LANE                     # prologue mean
    per_layer = (2 * n * LANE * 3 * LANE + 2 * et * LANE * LANE
                 + 2 * et * n * 2 * LANE + 2 * et * n * LANE
                 + 2 * 2 * n * et * LANE)
    mm += n_layers * per_layer + 2 * n * LANE * LANE               # layers + proj
    flops = int(mm + n_layers * et * LANE * 8)
    transcendentals = int(et * LANE * (1 + n_layers))
    bytes_accessed = int(footprint)

    out_pad = pl.pallas_call(
        _make_gat_kernel(n, e, n_layers, heads, hidden),
        grid=(1,),
        in_specs=[full_spec(a) for a in inputs],
        out_specs=pl.BlockSpec((n, LANE), lambda i: (0, 0)),
        out_shape=jax.ShapeDtypeStruct((n, LANE), jnp.float32),
        compiler_params=pltpu.CompilerParams(
            dimension_semantics=("arbitrary",),
            vmem_limit_bytes=vmem_limit),
        cost_estimate=pl.CostEstimate(flops=flops,
                                      transcendentals=transcendentals,
                                      bytes_accessed=bytes_accessed),
    )(*inputs)

    return out_pad[:, :out_dim]


# ----------------------------------------------------------------------------
# main
# ----------------------------------------------------------------------------

if __name__ == "__main__":
    # GAT(in_feats=8, edge_feats=4, t_feats=4, hidden=8, out=6, layers=2, heads=2)
    in_feats, edge_feats, t_feats = 8, 4, 4
    hidden, out_dim, n_layers, heads = 8, 6, 2, 2
    N, E = 16, 32
    edge_dim = t_feats + edge_feats

    root = jax.random.PRNGKey(0)
    k_param, k_x, k_ei, k_attr, k_ts, k_drop = jax.random.split(root, 6)

    # --- deterministic parameter init ---
    pkeys = iter(jax.random.split(k_param, 5 * n_layers + 2))
    layers = []
    fin = in_feats
    for _ in range(n_layers):
        layers.append(dict(
            w=glorot(next(pkeys), (fin, heads * hidden)),
            w_edge=glorot(next(pkeys), (edge_dim, heads * hidden)),
            att_src=glorot(next(pkeys), (heads, hidden)),
            att_dst=glorot(next(pkeys), (heads, hidden)),
            att_edge=glorot(next(pkeys), (heads, hidden)),
            bias=jnp.zeros((1, heads * hidden), jnp.float32)))
        fin = heads * hidden

    params = dict(
        heads=heads, hidden=hidden, out_dim=out_dim, layers=layers,
        tk_w=glorot(next(pkeys), (1, t_feats)),
        tk_b=jnp.zeros((1, t_feats), jnp.float32),
        proj_w=glorot(next(pkeys), (heads * hidden, out_dim)),
        proj_b=jnp.zeros((1, out_dim), jnp.float32))

    # --- deterministic graph inputs ---
    x = jax.random.normal(k_x, (N, in_feats), dtype=jnp.float32)
    edge_index = jax.random.randint(k_ei, (2, E), 0, N, dtype=jnp.int32)
    edge_attr = jax.random.normal(k_attr, (E, edge_feats), dtype=jnp.float32)
    edge_ts = jax.random.uniform(k_ts, (E,), dtype=jnp.float32) * 10.0

    out = gat_forward(params, x, edge_index, edge_attr, edge_ts, k_drop, drop=0.5)
    out = jax.block_until_ready(out)
    assert out.shape == (N, out_dim) and out.dtype == jnp.float32
    assert bool(jnp.all(jnp.isfinite(out)))
    print("KERNEL_OK")
</pallas_src>

<mosaic_0001>
module attributes {stable_mosaic.version = 11 : i64} {
  func.func @kernel(%arg0: i32, %arg1: memref<16x128xf32, #tpu.memory_space<vmem>>, %arg2: memref<48x1xf32, #tpu.memory_space<vmem>>, %arg3: memref<48x128xf32, #tpu.memory_space<vmem>>, %arg4: memref<48x1xf32, #tpu.memory_space<vmem>>, %arg5: memref<1x128xf32, #tpu.memory_space<vmem>>, %arg6: memref<1x128xf32, #tpu.memory_space<vmem>>, %arg7: memref<48x16xf32, #tpu.memory_space<vmem>>, %arg8: memref<48x16xf32, #tpu.memory_space<vmem>>, %arg9: memref<16x48xf32, #tpu.memory_space<vmem>>, %arg10: memref<2x128xf32, #tpu.memory_space<vmem>>, %arg11: memref<2x128x384xbf16, #tpu.memory_space<vmem>>, %arg12: memref<2x128x128xbf16, #tpu.memory_space<vmem>>, %arg13: memref<2x1x128xf32, #tpu.memory_space<vmem>>, %arg14: memref<128x128xbf16, #tpu.memory_space<vmem>>, %arg15: memref<1x128xf32, #tpu.memory_space<vmem>>, %arg16: memref<16x128xf32, #tpu.memory_space<vmem>>) attributes {dimension_semantics = [#tpu.dimension_semantics<arbitrary>], iteration_bounds = array<i64: 1>, scalar_prefetch = 0 : i64, scratch_operands = 0 : i64, tpu.core_type = #tpu.core_type<tc>, window_params = [{pipeline_mode = #tpu.pipeline_mode<synchronous>, transform_indices = @transform_0, window_bounds = array<i64: 16, 128>}, {pipeline_mode = #tpu.pipeline_mode<synchronous>, transform_indices = @transform_1, window_bounds = array<i64: 48, 1>}, {pipeline_mode = #tpu.pipeline_mode<synchronous>, transform_indices = @transform_2, window_bounds = array<i64: 48, 128>}, {pipeline_mode = #tpu.pipeline_mode<synchronous>, transform_indices = @transform_3, window_bounds = array<i64: 48, 1>}, {pipeline_mode = #tpu.pipeline_mode<synchronous>, transform_indices = @transform_4, window_bounds = array<i64: 1, 128>}, {pipeline_mode = #tpu.pipeline_mode<synchronous>, transform_indices = @transform_5, window_bounds = array<i64: 1, 128>}, {pipeline_mode = #tpu.pipeline_mode<synchronous>, transform_indices = @transform_6, window_bounds = array<i64: 48, 16>}, {pipeline_mode = #tpu.pipeline_mode<synchronous>, transform_indices = @transform_7, window_bounds = array<i64: 48, 16>}, {pipeline_mode = #tpu.pipeline_mode<synchronous>, transform_indices = @transform_8, window_bounds = array<i64: 16, 48>}, {pipeline_mode = #tpu.pipeline_mode<synchronous>, transform_indices = @transform_9, window_bounds = array<i64: 2, 128>}, {pipeline_mode = #tpu.pipeline_mode<synchronous>, transform_indices = @transform_10, window_bounds = array<i64: 2, 128, 384>}, {pipeline_mode = #tpu.pipeline_mode<synchronous>, transform_indices = @transform_11, window_bounds = array<i64: 2, 128, 128>}, {pipeline_mode = #tpu.pipeline_mode<synchronous>, transform_indices = @transform_12, window_bounds = array<i64: 2, 1, 128>}, {pipeline_mode = #tpu.pipeline_mode<synchronous>, transform_indices = @transform_13, window_bounds = array<i64: 128, 128>}, {pipeline_mode = #tpu.pipeline_mode<synchronous>, transform_indices = @transform_14, window_bounds = array<i64: 1, 128>}, {pipeline_mode = #tpu.pipeline_mode<synchronous>, transform_indices = @transform_15, window_bounds = array<i64: 16, 128>}]} {
    %c0 = arith.constant 0 : index
    %c0_0 = arith.constant 0 : index
    %0 = vector.load %arg7[%c0, %c0_0] : memref<48x16xf32, #tpu.memory_space<vmem>>, vector<48x16xf32>
    %c0_1 = arith.constant 0 : index
    %c0_2 = arith.constant 0 : index
    %1 = vector.load %arg8[%c0_1, %c0_2] : memref<48x16xf32, #tpu.memory_space<vmem>>, vector<48x16xf32>
    %c0_3 = arith.constant 0 : index
    %c0_4 = arith.constant 0 : index
    %2 = vector.load %arg9[%c0_3, %c0_4] : memref<16x48xf32, #tpu.memory_space<vmem>>, vector<16x48xf32>
    %c0_5 = arith.constant 0 : index
    %c0_6 = arith.constant 0 : index
    %3 = vector.load %arg4[%c0_5, %c0_6] : memref<48x1xf32, #tpu.memory_space<vmem>>, vector<48x1xf32>
    %c0_7 = arith.constant 0 : index
    %c0_8 = arith.constant 0 : index
    %4 = vector.load %arg10[%c0_7, %c0_8] : memref<2x128xf32, #tpu.memory_space<vmem>>, vector<2x128xf32>
    %c0_9 = arith.constant 0 : index
    %c0_10 = arith.constant 0 : index
    %5 = vector.load %arg2[%c0_9, %c0_10] : memref<48x1xf32, #tpu.memory_space<vmem>>, vector<48x1xf32>
    %c0_11 = arith.constant 0 : index
    %c0_12 = arith.constant 0 : index
    %6 = vector.load %arg5[%c0_11, %c0_12] : memref<1x128xf32, #tpu.memory_space<vmem>>, vector<1x128xf32>
    %7 = vector.broadcast %5 : vector<48x1xf32> to vector<48x128xf32>
    %8 = vector.broadcast %6 : vector<1x128xf32> to vector<48x128xf32>
    %9 = arith.mulf %7, %8 : vector<48x128xf32>
    %c0_13 = arith.constant 0 : index
    %c0_14 = arith.constant 0 : index
    %10 = vector.load %arg6[%c0_13, %c0_14] : memref<1x128xf32, #tpu.memory_space<vmem>>, vector<1x128xf32>
    %11 = vector.broadcast %10 : vector<1x128xf32> to vector<48x128xf32>
    %12 = arith.addf %9, %11 : vector<48x128xf32>
    %13 = math.sin %12 : vector<48x128xf32>
    %c0_15 = arith.constant 0 : index
    %c0_16 = arith.constant 0 : index
    %14 = vector.load %arg3[%c0_15, %c0_16] : memref<48x128xf32, #tpu.memory_space<vmem>>, vector<48x128xf32>
    %15 = arith.addf %13, %14 : vector<48x128xf32>
    %16 = vector.broadcast %3 : vector<48x1xf32> to vector<48x128xf32>
    %17 = arith.mulf %15, %16 : vector<48x128xf32>
    %cst = arith.constant dense<0.000000e+00> : vector<16xf32>
    %18 = vector.multi_reduction <add>, %2, %cst [1] : vector<16x48xf32> to vector<16xf32>
    %19 = vector.shape_cast %18 : vector<16xf32> to vector<16x1xf32>
    %cst_17 = arith.constant 1.000000e+00 : f32
    %20 = vector.broadcast %cst_17 : f32 to vector<16x1xf32>
    %21 = arith.subf %19, %20 : vector<16x1xf32>
    %cst_18 = arith.constant dense<0.000000e+00> : vector<16x128xf32>
    %22 = tpu.matmul %2, %17, %cst_18 {dimension_numbers = #tpu.dot_dimension_numbers<[1], [0], [0], [1], [0, 0, 1, 1], [], []>} : vector<16x48xf32>, vector<48x128xf32>, vector<16x128xf32> -> vector<16x128xf32>
    %cst_19 = arith.constant 1.000000e+00 : f32
    %23 = vector.broadcast %cst_19 : f32 to vector<16x1xf32>
    %24 = arith.maximumf %21, %23 : vector<16x1xf32>
    %25 = vector.broadcast %24 : vector<16x1xf32> to vector<16x128xf32>
    %26 = arith.divf %22, %25 : vector<16x128xf32>
    %cst_20 = arith.constant 1.000000e+00 : f32
    %27 = vector.broadcast %cst_20 : f32 to vector<48x1xf32>
    %28 = arith.subf %27, %3 : vector<48x1xf32>
    %cst_21 = arith.constant dense<0.000000e+00> : vector<48x128xf32>
    %29 = tpu.matmul %1, %26, %cst_21 {dimension_numbers = #tpu.dot_dimension_numbers<[1], [0], [0], [1], [0, 0, 1, 1], [], []>} : vector<48x16xf32>, vector<16x128xf32>, vector<48x128xf32> -> vector<48x128xf32>
    %30 = vector.broadcast %28 : vector<48x1xf32> to vector<48x128xf32>
    %31 = arith.mulf %30, %29 : vector<48x128xf32>
    %32 = arith.addf %17, %31 : vector<48x128xf32>
    %33 = arith.truncf %32 : vector<48x128xf32> to vector<48x128xbf16>
    %c0_22 = arith.constant 0 : index
    %c0_23 = arith.constant 0 : index
    %34 = vector.load %arg1[%c0_22, %c0_23] : memref<16x128xf32, #tpu.memory_space<vmem>>, vector<16x128xf32>
    %35 = arith.truncf %34 : vector<16x128xf32> to vector<16x128xbf16>
    %c0_24 = arith.constant 0 : index
    %c0_25 = arith.constant 0 : index
    %c0_26 = arith.constant 0 : index
    %36 = vector.load %arg11[%c0_24, %c0_25, %c0_26] : memref<2x128x384xbf16, #tpu.memory_space<vmem>>, vector<1x128x384xbf16>
    %37 = vector.shape_cast %36 : vector<1x128x384xbf16> to vector<128x384xbf16>
    %cst_27 = arith.constant dense<0.000000e+00> : vector<16x384xf32>
    %38 = tpu.matmul %35, %37, %cst_27 {dimension_numbers = #tpu.dot_dimension_numbers<[1], [0], [0], [1], [0, 0, 1, 1], [], []>} : vector<16x128xbf16>, vector<128x384xbf16>, vector<16x384xf32> -> vector<16x384xf32>
    %c0_28 = arith.constant 0 : index
    %c0_29 = arith.constant 0 : index
    %c0_30 = arith.constant 0 : index
    %39 = vector.load %arg12[%c0_28, %c0_29, %c0_30] : memref<2x128x128xbf16, #tpu.memory_space<vmem>>, vector<1x128x128xbf16>
    %40 = vector.shape_cast %39 : vector<1x128x128xbf16> to vector<128x128xbf16>
    %cst_31 = arith.constant dense<0.000000e+00> : vector<48x128xf32>
    %41 = tpu.matmul %33, %40, %cst_31 {dimension_numbers = #tpu.dot_dimension_numbers<[1], [0], [0], [1], [0, 0, 1, 1], [], []>} : vector<48x128xbf16>, vector<128x128xbf16>, vector<48x128xf32> -> vector<48x128xf32>
    %42 = vector.extract_strided_slice %38 {offsets = [0, 0], sizes = [16, 256], strides = [1, 1]} : vector<16x384xf32> to vector<16x256xf32>
    %cst_32 = arith.constant dense<0.000000e+00> : vector<48x256xf32>
    %43 = tpu.matmul %0, %42, %cst_32 {dimension_numbers = #tpu.dot_dimension_numbers<[1], [0], [0], [1], [0, 0, 1, 1], [], []>} : vector<48x16xf32>, vector<16x256xf32>, vector<48x256xf32> -> vector<48x256xf32>
    %44 = vector.extract_strided_slice %43 {offsets = [0, 0], sizes = [48, 128], strides = [1, 1]} : vector<48x256xf32> to vector<48x128xf32>
    %45 = vector.extract_strided_slice %43 {offsets = [0, 128], sizes = [48, 128], strides = [1, 1]} : vector<48x256xf32> to vector<48x128xf32>
    %46 = vector.extract_strided_slice %38 {offsets = [0, 256], sizes = [16, 128], strides = [1, 1]} : vector<16x384xf32> to vector<16x128xf32>
    %cst_33 = arith.constant dense<0.000000e+00> : vector<48x128xf32>
    %47 = tpu.matmul %1, %46, %cst_33 {dimension_numbers = #tpu.dot_dimension_numbers<[1], [0], [0], [1], [0, 0, 1, 1], [], []>} : vector<48x16xf32>, vector<16x128xf32>, vector<48x128xf32> -> vector<48x128xf32>
    %48 = arith.addf %45, %47 : vector<48x128xf32>
    %49 = arith.addf %48, %41 : vector<48x128xf32>
    %cst_34 = arith.constant 0.000000e+00 : f32
    %50 = vector.broadcast %cst_34 : f32 to vector<48x128xf32>
    %51 = arith.cmpf oge, %49, %50 : vector<48x128xf32>
    %cst_35 = arith.constant 2.000000e-01 : f32
    %52 = vector.broadcast %cst_35 : f32 to vector<48x128xf32>
    %53 = arith.mulf %52, %49 : vector<48x128xf32>
    %54 = arith.select %51, %49, %53 : vector<48x128xi1>, vector<48x128xf32>
    %cst_36 = arith.constant 0.000000e+00 : f32
    %55 = vector.broadcast %cst_36 : f32 to vector<48x128xf32>
    %56 = vector.extract_strided_slice %4 {offsets = [0, 0], sizes = [1, 128], strides = [1, 1]} : vector<2x128xf32> to vector<1x128xf32>
    %cst_37 = arith.constant 0.000000e+00 : f32
    %57 = vector.broadcast %cst_37 : f32 to vector<1x128xf32>
    %58 = arith.cmpf ogt, %56, %57 : vector<1x128xf32>
    %cst_38 = arith.constant -1.000000e+30 : f32
    %59 = vector.shape_cast %58 : vector<1x128xi1> to vector<1x128xi1>
    %60 = vector.broadcast %59 : vector<1x128xi1> to vector<48x128xi1>
    %61 = vector.broadcast %cst_38 : f32 to vector<48x128xf32>
    %62 = arith.select %60, %54, %61 : vector<48x128xi1>, vector<48x128xf32>
    %cst_39 = arith.constant dense<0xFF800000> : vector<48xf32>
    %63 = vector.multi_reduction <maximumf>, %62, %cst_39 [1] : vector<48x128xf32> to vector<48xf32>
    %64 = vector.shape_cast %63 : vector<48xf32> to vector<48x1xf32>
    %cst_40 = arith.constant 0.000000e+00 : f32
    %65 = vector.broadcast %cst_40 : f32 to vector<48x16xf32>
    %66 = arith.cmpf ogt, %1, %65 : vector<48x16xf32>
    %cst_41 = arith.constant -1.000000e+30 : f32
    %67 = vector.shape_cast %64 : vector<48x1xf32> to vector<48x1xf32>
    %68 = vector.broadcast %67 : vector<48x1xf32> to vector<48x16xf32>
    %69 = vector.broadcast %cst_41 : f32 to vector<48x16xf32>
    %70 = arith.select %66, %68, %69 : vector<48x16xi1>, vector<48x16xf32>
    %cst_42 = arith.constant dense<0xFF800000> : vector<16xf32>
    %71 = vector.multi_reduction <maximumf>, %70, %cst_42 [0] : vector<48x16xf32> to vector<16xf32>
    %72 = vector.shape_cast %71 : vector<16xf32> to vector<1x16xf32>
    %73 = vector.broadcast %72 : vector<1x16xf32> to vector<48x16xf32>
    %74 = arith.mulf %1, %73 : vector<48x16xf32>
    %cst_43 = arith.constant dense<0.000000e+00> : vector<48xf32>
    %75 = vector.multi_reduction <add>, %74, %cst_43 [1] : vector<48x16xf32> to vector<48xf32>
    %76 = vector.shape_cast %75 : vector<48xf32> to vector<48x1xf32>
    %77 = vector.broadcast %76 : vector<48x1xf32> to vector<48x128xf32>
    %78 = vector.broadcast %56 : vector<1x128xf32> to vector<48x128xf32>
    %79 = arith.mulf %77, %78 : vector<48x128xf32>
    %80 = arith.addf %55, %79 : vector<48x128xf32>
    %81 = vector.extract_strided_slice %4 {offsets = [1, 0], sizes = [1, 128], strides = [1, 1]} : vector<2x128xf32> to vector<1x128xf32>
    %cst_44 = arith.constant 0.000000e+00 : f32
    %82 = vector.broadcast %cst_44 : f32 to vector<1x128xf32>
    %83 = arith.cmpf ogt, %81, %82 : vector<1x128xf32>
    %cst_45 = arith.constant -1.000000e+30 : f32
    %84 = vector.shape_cast %83 : vector<1x128xi1> to vector<1x128xi1>
    %85 = vector.broadcast %84 : vector<1x128xi1> to vector<48x128xi1>
    %86 = vector.broadcast %cst_45 : f32 to vector<48x128xf32>
    %87 = arith.select %85, %54, %86 : vector<48x128xi1>, vector<48x128xf32>
    %cst_46 = arith.constant dense<0xFF800000> : vector<48xf32>
    %88 = vector.multi_reduction <maximumf>, %87, %cst_46 [1] : vector<48x128xf32> to vector<48xf32>
    %89 = vector.shape_cast %88 : vector<48xf32> to vector<48x1xf32>
    %cst_47 = arith.constant 0.000000e+00 : f32
    %90 = vector.broadcast %cst_47 : f32 to vector<48x16xf32>
    %91 = arith.cmpf ogt, %1, %90 : vector<48x16xf32>
    %cst_48 = arith.constant -1.000000e+30 : f32
    %92 = vector.shape_cast %89 : vector<48x1xf32> to vector<48x1xf32>
    %93 = vector.broadcast %92 : vector<48x1xf32> to vector<48x16xf32>
    %94 = vector.broadcast %cst_48 : f32 to vector<48x16xf32>
    %95 = arith.select %91, %93, %94 : vector<48x16xi1>, vector<48x16xf32>
    %cst_49 = arith.constant dense<0xFF800000> : vector<16xf32>
    %96 = vector.multi_reduction <maximumf>, %95, %cst_49 [0] : vector<48x16xf32> to vector<16xf32>
    %97 = vector.shape_cast %96 : vector<16xf32> to vector<1x16xf32>
    %98 = vector.broadcast %97 : vector<1x16xf32> to vector<48x16xf32>
    %99 = arith.mulf %1, %98 : vector<48x16xf32>
    %cst_50 = arith.constant dense<0.000000e+00> : vector<48xf32>
    %100 = vector.multi_reduction <add>, %99, %cst_50 [1] : vector<48x16xf32> to vector<48xf32>
    %101 = vector.shape_cast %100 : vector<48xf32> to vector<48x1xf32>
    %102 = vector.broadcast %101 : vector<48x1xf32> to vector<48x128xf32>
    %103 = vector.broadcast %81 : vector<1x128xf32> to vector<48x128xf32>
    %104 = arith.mulf %102, %103 : vector<48x128xf32>
    %105 = arith.addf %80, %104 : vector<48x128xf32>
    %106 = arith.subf %54, %105 : vector<48x128xf32>
    %cst_51 = arith.constant 0.000000e+00 : f32
    %107 = vector.broadcast %cst_51 : f32 to vector<48x128xf32>
    %108 = arith.minimumf %106, %107 : vector<48x128xf32>
    %109 = math.exp %108 : vector<48x128xf32>
    %cst_52 = arith.constant dense<0.000000e+00> : vector<16x128xf32>
    %110 = tpu.matmul %2, %109, %cst_52 {dimension_numbers = #tpu.dot_dimension_numbers<[1], [0], [0], [1], [0, 0, 1, 1], [], []>} : vector<16x48xf32>, vector<48x128xf32>, vector<16x128xf32> -> vector<16x128xf32>
    %111 = arith.mulf %109, %44 : vector<48x128xf32>
    %cst_53 = arith.constant dense<0.000000e+00> : vector<16x128xf32>
    %112 = tpu.matmul %2, %111, %cst_53 {dimension_numbers = #tpu.dot_dimension_numbers<[1], [0], [0], [1], [0, 0, 1, 1], [], []>} : vector<16x48xf32>, vector<48x128xf32>, vector<16x128xf32> -> vector<16x128xf32>
    %113 = arith.divf %112, %110 : vector<16x128xf32>
    %c0_54 = arith.constant 0 : index
    %c0_55 = arith.constant 0 : index
    %c0_56 = arith.constant 0 : index
    %114 = vector.load %arg13[%c0_54, %c0_55, %c0_56] : memref<2x1x128xf32, #tpu.memory_space<vmem>>, vector<1x1x128xf32>
    %115 = vector.shape_cast %114 : vector<1x1x128xf32> to vector<1x128xf32>
    %116 = vector.broadcast %115 : vector<1x128xf32> to vector<16x128xf32>
    %117 = arith.addf %113, %116 : vector<16x128xf32>
    %cst_57 = arith.constant 0.000000e+00 : f32
    %118 = vector.broadcast %cst_57 : f32 to vector<16x128xf32>
    %119 = arith.maximumf %117, %118 : vector<16x128xf32>
    %120 = arith.truncf %119 : vector<16x128xf32> to vector<16x128xbf16>
    %c1 = arith.constant 1 : index
    %c0_58 = arith.constant 0 : index
    %c0_59 = arith.constant 0 : index
    %121 = vector.load %arg11[%c1, %c0_58, %c0_59] : memref<2x128x384xbf16, #tpu.memory_space<vmem>>, vector<1x128x384xbf16>
    %122 = vector.shape_cast %121 : vector<1x128x384xbf16> to vector<128x384xbf16>
    %cst_60 = arith.constant dense<0.000000e+00> : vector<16x384xf32>
    %123 = tpu.matmul %120, %122, %cst_60 {dimension_numbers = #tpu.dot_dimension_numbers<[1], [0], [0], [1], [0, 0, 1, 1], [], []>} : vector<16x128xbf16>, vector<128x384xbf16>, vector<16x384xf32> -> vector<16x384xf32>
    %c1_61 = arith.constant 1 : index
    %c0_62 = arith.constant 0 : index
    %c0_63 = arith.constant 0 : index
    %124 = vector.load %arg12[%c1_61, %c0_62, %c0_63] : memref<2x128x128xbf16, #tpu.memory_space<vmem>>, vector<1x128x128xbf16>
    %125 = vector.shape_cast %124 : vector<1x128x128xbf16> to vector<128x128xbf16>
    %cst_64 = arith.constant dense<0.000000e+00> : vector<48x128xf32>
    %126 = tpu.matmul %33, %125, %cst_64 {dimension_numbers = #tpu.dot_dimension_numbers<[1], [0], [0], [1], [0, 0, 1, 1], [], []>} : vector<48x128xbf16>, vector<128x128xbf16>, vector<48x128xf32> -> vector<48x128xf32>
    %127 = vector.extract_strided_slice %123 {offsets = [0, 0], sizes = [16, 256], strides = [1, 1]} : vector<16x384xf32> to vector<16x256xf32>
    %cst_65 = arith.constant dense<0.000000e+00> : vector<48x256xf32>
    %128 = tpu.matmul %0, %127, %cst_65 {dimension_numbers = #tpu.dot_dimension_numbers<[1], [0], [0], [1], [0, 0, 1, 1], [], []>} : vector<48x16xf32>, vector<16x256xf32>, vector<48x256xf32> -> vector<48x256xf32>
    %129 = vector.extract_strided_slice %128 {offsets = [0, 0], sizes = [48, 128], strides = [1, 1]} : vector<48x256xf32> to vector<48x128xf32>
    %130 = vector.extract_strided_slice %128 {offsets = [0, 128], sizes = [48, 128], strides = [1, 1]} : vector<48x256xf32> to vector<48x128xf32>
    %131 = vector.extract_strided_slice %123 {offsets = [0, 256], sizes = [16, 128], strides = [1, 1]} : vector<16x384xf32> to vector<16x128xf32>
    %cst_66 = arith.constant dense<0.000000e+00> : vector<48x128xf32>
    %132 = tpu.matmul %1, %131, %cst_66 {dimension_numbers = #tpu.dot_dimension_numbers<[1], [0], [0], [1], [0, 0, 1, 1], [], []>} : vector<48x16xf32>, vector<16x128xf32>, vector<48x128xf32> -> vector<48x128xf32>
    %133 = arith.addf %130, %132 : vector<48x128xf32>
    %134 = arith.addf %133, %126 : vector<48x128xf32>
    %cst_67 = arith.constant 0.000000e+00 : f32
    %135 = vector.broadcast %cst_67 : f32 to vector<48x128xf32>
    %136 = arith.cmpf oge, %134, %135 : vector<48x128xf32>
    %cst_68 = arith.constant 2.000000e-01 : f32
    %137 = vector.broadcast %cst_68 : f32 to vector<48x128xf32>
    %138 = arith.mulf %137, %134 : vector<48x128xf32>
    %139 = arith.select %136, %134, %138 : vector<48x128xi1>, vector<48x128xf32>
    %cst_69 = arith.constant 0.000000e+00 : f32
    %140 = vector.broadcast %cst_69 : f32 to vector<48x128xf32>
    %141 = vector.extract_strided_slice %4 {offsets = [0, 0], sizes = [1, 128], strides = [1, 1]} : vector<2x128xf32> to vector<1x128xf32>
    %cst_70 = arith.constant 0.000000e+00 : f32
    %142 = vector.broadcast %cst_70 : f32 to vector<1x128xf32>
    %143 = arith.cmpf ogt, %141, %142 : vector<1x128xf32>
    %cst_71 = arith.constant -1.000000e+30 : f32
    %144 = vector.shape_cast %143 : vector<1x128xi1> to vector<1x128xi1>
    %145 = vector.broadcast %144 : vector<1x128xi1> to vector<48x128xi1>
    %146 = vector.broadcast %cst_71 : f32 to vector<48x128xf32>
    %147 = arith.select %145, %139, %146 : vector<48x128xi1>, vector<48x128xf32>
    %cst_72 = arith.constant dense<0xFF800000> : vector<48xf32>
    %148 = vector.multi_reduction <maximumf>, %147, %cst_72 [1] : vector<48x128xf32> to vector<48xf32>
    %149 = vector.shape_cast %148 : vector<48xf32> to vector<48x1xf32>
    %cst_73 = arith.constant 0.000000e+00 : f32
    %150 = vector.broadcast %cst_73 : f32 to vector<48x16xf32>
    %151 = arith.cmpf ogt, %1, %150 : vector<48x16xf32>
    %cst_74 = arith.constant -1.000000e+30 : f32
    %152 = vector.shape_cast %149 : vector<48x1xf32> to vector<48x1xf32>
    %153 = vector.broadcast %152 : vector<48x1xf32> to vector<48x16xf32>
    %154 = vector.broadcast %cst_74 : f32 to vector<48x16xf32>
    %155 = arith.select %151, %153, %154 : vector<48x16xi1>, vector<48x16xf32>
    %cst_75 = arith.constant dense<0xFF800000> : vector<16xf32>
    %156 = vector.multi_reduction <maximumf>, %155, %cst_75 [0] : vector<48x16xf32> to vector<16xf32>
    %157 = vector.shape_cast %156 : vector<16xf32> to vector<1x16xf32>
    %158 = vector.broadcast %157 : vector<1x16xf32> to vector<48x16xf32>
    %159 = arith.mulf %1, %158 : vector<48x16xf32>
    %cst_76 = arith.constant dense<0.000000e+00> : vector<48xf32>
    %160 = vector.multi_reduction <add>, %159, %cst_76 [1] : vector<48x16xf32> to vector<48xf32>
    %161 = vector.shape_cast %160 : vector<48xf32> to vector<48x1xf32>
    %162 = vector.broadcast %161 : vector<48x1xf32> to vector<48x128xf32>
    %163 = vector.broadcast %141 : vector<1x128xf32> to vector<48x128xf32>
    %164 = arith.mulf %162, %163 : vector<48x128xf32>
    %165 = arith.addf %140, %164 : vector<48x128xf32>
    %166 = vector.extract_strided_slice %4 {offsets = [1, 0], sizes = [1, 128], strides = [1, 1]} : vector<2x128xf32> to vector<1x128xf32>
    %cst_77 = arith.constant 0.000000e+00 : f32
    %167 = vector.broadcast %cst_77 : f32 to vector<1x128xf32>
    %168 = arith.cmpf ogt, %166, %167 : vector<1x128xf32>
    %cst_78 = arith.constant -1.000000e+30 : f32
    %169 = vector.shape_cast %168 : vector<1x128xi1> to vector<1x128xi1>
    %170 = vector.broadcast %169 : vector<1x128xi1> to vector<48x128xi1>
    %171 = vector.broadcast %cst_78 : f32 to vector<48x128xf32>
    %172 = arith.select %170, %139, %171 : vector<48x128xi1>, vector<48x128xf32>
    %cst_79 = arith.constant dense<0xFF800000> : vector<48xf32>
    %173 = vector.multi_reduction <maximumf>, %172, %cst_79 [1] : vector<48x128xf32> to vector<48xf32>
    %174 = vector.shape_cast %173 : vector<48xf32> to vector<48x1xf32>
    %cst_80 = arith.constant 0.000000e+00 : f32
    %175 = vector.broadcast %cst_80 : f32 to vector<48x16xf32>
    %176 = arith.cmpf ogt, %1, %175 : vector<48x16xf32>
    %cst_81 = arith.constant -1.000000e+30 : f32
    %177 = vector.shape_cast %174 : vector<48x1xf32> to vector<48x1xf32>
    %178 = vector.broadcast %177 : vector<48x1xf32> to vector<48x16xf32>
    %179 = vector.broadcast %cst_81 : f32 to vector<48x16xf32>
    %180 = arith.select %176, %178, %179 : vector<48x16xi1>, vector<48x16xf32>
    %cst_82 = arith.constant dense<0xFF800000> : vector<16xf32>
    %181 = vector.multi_reduction <maximumf>, %180, %cst_82 [0] : vector<48x16xf32> to vector<16xf32>
    %182 = vector.shape_cast %181 : vector<16xf32> to vector<1x16xf32>
    %183 = vector.broadcast %182 : vector<1x16xf32> to vector<48x16xf32>
    %184 = arith.mulf %1, %183 : vector<48x16xf32>
    %cst_83 = arith.constant dense<0.000000e+00> : vector<48xf32>
    %185 = vector.multi_reduction <add>, %184, %cst_83 [1] : vector<48x16xf32> to vector<48xf32>
    %186 = vector.shape_cast %185 : vector<48xf32> to vector<48x1xf32>
    %187 = vector.broadcast %186 : vector<48x1xf32> to vector<48x128xf32>
    %188 = vector.broadcast %166 : vector<1x128xf32> to vector<48x128xf32>
    %189 = arith.mulf %187, %188 : vector<48x128xf32>
    %190 = arith.addf %165, %189 : vector<48x128xf32>
    %191 = arith.subf %139, %190 : vector<48x128xf32>
    %cst_84 = arith.constant 0.000000e+00 : f32
    %192 = vector.broadcast %cst_84 : f32 to vector<48x128xf32>
    %193 = arith.minimumf %191, %192 : vector<48x128xf32>
    %194 = math.exp %193 : vector<48x128xf32>
    %cst_85 = arith.constant dense<0.000000e+00> : vector<16x128xf32>
    %195 = tpu.matmul %2, %194, %cst_85 {dimension_numbers = #tpu.dot_dimension_numbers<[1], [0], [0], [1], [0, 0, 1, 1], [], []>} : vector<16x48xf32>, vector<48x128xf32>, vector<16x128xf32> -> vector<16x128xf32>
    %196 = arith.mulf %194, %129 : vector<48x128xf32>
    %cst_86 = arith.constant dense<0.000000e+00> : vector<16x128xf32>
    %197 = tpu.matmul %2, %196, %cst_86 {dimension_numbers = #tpu.dot_dimension_numbers<[1], [0], [0], [1], [0, 0, 1, 1], [], []>} : vector<16x48xf32>, vector<48x128xf32>, vector<16x128xf32> -> vector<16x128xf32>
    %198 = arith.divf %197, %195 : vector<16x128xf32>
    %c1_87 = arith.constant 1 : index
    %c0_88 = arith.constant 0 : index
    %c0_89 = arith.constant 0 : index
    %199 = vector.load %arg13[%c1_87, %c0_88, %c0_89] : memref<2x1x128xf32, #tpu.memory_space<vmem>>, vector<1x1x128xf32>
    %200 = vector.shape_cast %199 : vector<1x1x128xf32> to vector<1x128xf32>
    %201 = vector.broadcast %200 : vector<1x128xf32> to vector<16x128xf32>
    %202 = arith.addf %198, %201 : vector<16x128xf32>
    %cst_90 = arith.constant 0.000000e+00 : f32
    %203 = vector.broadcast %cst_90 : f32 to vector<16x128xf32>
    %204 = arith.maximumf %202, %203 : vector<16x128xf32>
    %205 = arith.truncf %204 : vector<16x128xf32> to vector<16x128xbf16>
    %c0_91 = arith.constant 0 : index
    %c0_92 = arith.constant 0 : index
    %206 = vector.load %arg14[%c0_91, %c0_92] : memref<128x128xbf16, #tpu.memory_space<vmem>>, vector<128x128xbf16>
    %cst_93 = arith.constant dense<0.000000e+00> : vector<16x128xf32>
    %207 = tpu.matmul %205, %206, %cst_93 {dimension_numbers = #tpu.dot_dimension_numbers<[1], [0], [0], [1], [0, 0, 1, 1], [], []>} : vector<16x128xbf16>, vector<128x128xbf16>, vector<16x128xf32> -> vector<16x128xf32>
    %c0_94 = arith.constant 0 : index
    %c0_95 = arith.constant 0 : index
    %208 = vector.load %arg15[%c0_94, %c0_95] : memref<1x128xf32, #tpu.memory_space<vmem>>, vector<1x128xf32>
    %209 = vector.broadcast %208 : vector<1x128xf32> to vector<16x128xf32>
    %210 = arith.addf %207, %209 : vector<16x128xf32>
    %c0_96 = arith.constant 0 : index
    %c0_97 = arith.constant 0 : index
    %211 = vector.load %arg16[%c0_96, %c0_97] : memref<16x128xf32, #tpu.memory_space<vmem>>, vector<16x128xf32>
    tpu.vector_store %arg16[%c0_96, %c0_97], %210 {strides = array<i32>} : memref<16x128xf32, #tpu.memory_space<vmem>>, vector<16x128xf32>,
    return
  }
  func.func @transform_0(%arg0: i32) -> (i32, i32) {
    %c0_i32 = arith.constant 0 : i32
    %c0_i32_0 = arith.constant 0 : i32
    %c0_i32_1 = arith.constant 0 : i32
    return %c0_i32, %c0_i32_0 : i32, i32
  }
  func.func @transform_1(%arg0: i32) -> (i32, i32) {
    %c0_i32 = arith.constant 0 : i32
    %c0_i32_0 = arith.constant 0 : i32
    %c0_i32_1 = arith.constant 0 : i32
    return %c0_i32, %c0_i32_0 : i32, i32
  }
  func.func @transform_2(%arg0: i32) -> (i32, i32) {
    %c0_i32 = arith.constant 0 : i32
    %c0_i32_0 = arith.constant 0 : i32
    %c0_i32_1 = arith.constant 0 : i32
    return %c0_i32, %c0_i32_0 : i32, i32
  }
  func.func @transform_3(%arg0: i32) -> (i32, i32) {
    %c0_i32 = arith.constant 0 : i32
    %c0_i32_0 = arith.constant 0 : i32
    %c0_i32_1 = arith.constant 0 : i32
    return %c0_i32, %c0_i32_0 : i32, i32
  }
  func.func @transform_4(%arg0: i32) -> (i32, i32) {
    %c0_i32 = arith.constant 0 : i32
    %c0_i32_0 = arith.constant 0 : i32
    %c0_i32_1 = arith.constant 0 : i32
    return %c0_i32, %c0_i32_0 : i32, i32
  }
  func.func @transform_5(%arg0: i32) -> (i32, i32) {
    %c0_i32 = arith.constant 0 : i32
    %c0_i32_0 = arith.constant 0 : i32
    %c0_i32_1 = arith.constant 0 : i32
    return %c0_i32, %c0_i32_0 : i32, i32
  }
  func.func @transform_6(%arg0: i32) -> (i32, i32) {
    %c0_i32 = arith.constant 0 : i32
    %c0_i32_0 = arith.constant 0 : i32
    %c0_i32_1 = arith.constant 0 : i32
    return %c0_i32, %c0_i32_0 : i32, i32
  }
  func.func @transform_7(%arg0: i32) -> (i32, i32) {
    %c0_i32 = arith.constant 0 : i32
    %c0_i32_0 = arith.constant 0 : i32
    %c0_i32_1 = arith.constant 0 : i32
    return %c0_i32, %c0_i32_0 : i32, i32
  }
  func.func @transform_8(%arg0: i32) -> (i32, i32) {
    %c0_i32 = arith.constant 0 : i32
    %c0_i32_0 = arith.constant 0 : i32
    %c0_i32_1 = arith.constant 0 : i32
    return %c0_i32, %c0_i32_0 : i32, i32
  }
  func.func @transform_9(%arg0: i32) -> (i32, i32) {
    %c0_i32 = arith.constant 0 : i32
    %c0_i32_0 = arith.constant 0 : i32
    %c0_i32_1 = arith.constant 0 : i32
    return %c0_i32, %c0_i32_0 : i32, i32
  }
  func.func @transform_10(%arg0: i32) -> (i32, i32, i32) {
    %c0_i32 = arith.constant 0 : i32
    %c0_i32_0 = arith.constant 0 : i32
    %c0_i32_1 = arith.constant 0 : i32
    %c0_i32_2 = arith.constant 0 : i32
    return %c0_i32, %c0_i32_0, %c0_i32_1 : i32, i32, i32
  }
  func.func @transform_11(%arg0: i32) -> (i32, i32, i32) {
    %c0_i32 = arith.constant 0 : i32
    %c0_i32_0 = arith.constant 0 : i32
    %c0_i32_1 = arith.constant 0 : i32
    %c0_i32_2 = arith.constant 0 : i32
    return %c0_i32, %c0_i32_0, %c0_i32_1 : i32, i32, i32
  }
  func.func @transform_12(%arg0: i32) -> (i32, i32, i32) {
    %c0_i32 = arith.constant 0 : i32
    %c0_i32_0 = arith.constant 0 : i32
    %c0_i32_1 = arith.constant 0 : i32
    %c0_i32_2 = arith.constant 0 : i32
    return %c0_i32, %c0_i32_0, %c0_i32_1 : i32, i32, i32
  }
  func.func @transform_13(%arg0: i32) -> (i32, i32) {
    %c0_i32 = arith.constant 0 : i32
    %c0_i32_0 = arith.constant 0 : i32
    %c0_i32_1 = arith.constant 0 : i32
    return %c0_i32, %c0_i32_0 : i32, i32
  }
  func.func @transform_14(%arg0: i32) -> (i32, i32) {
    %c0_i32 = arith.constant 0 : i32
    %c0_i32_0 = arith.constant 0 : i32
    %c0_i32_1 = arith.constant 0 : i32
    return %c0_i32, %c0_i32_0 : i32, i32
  }
  func.func @transform_15(%arg0: i32) -> (i32, i32) {
    %c0_i32 = arith.constant 0 : i32
    %c0_i32_0 = arith.constant 0 : i32
    %c0_i32_1 = arith.constant 0 : i32
    return %c0_i32, %c0_i32_0 : i32, i32
  }
}

</mosaic_0001>

<llo_original>
// kernel: tpu_custom_call.1
$region0: #{tpu_custom_call.1}
  #allocation0 [shape = 'u32[]', space=smem, size = 0x4, offset = 0x4, fixed_abs, tag = 'smem constant byte address 0x4 - core index']
  #allocation1 [shape = 'u32[144,128]{1,0:T(1,128)}', space=vmem, size = 0x12000, scoped, tag = 'internal scratch']
  %s0 = inlined_call_operand.vmem [shape: f32[16,128], index: 0, kind: input, shape index: {}]
  %s1 = inlined_call_operand.vmem [shape: f32[48,1], index: 1, kind: input, shape index: {}]
  %s2 = inlined_call_operand.vmem [shape: f32[48,128], index: 2, kind: input, shape index: {}]
  %s3 = inlined_call_operand.vmem [shape: f32[48,1], index: 3, kind: input, shape index: {}]
  %s4 = inlined_call_operand.hbm [shape: f32[1,128], index: 4, kind: input, shape index: {}]
  %s5 = inlined_call_operand.hbm [shape: f32[1,128], index: 5, kind: input, shape index: {}]
  %s6 = inlined_call_operand.vmem [shape: f32[48,16], index: 6, kind: input, shape index: {}]
  %s7 = inlined_call_operand.vmem [shape: f32[48,16], index: 7, kind: input, shape index: {}]
  %s8 = inlined_call_operand.hbm [shape: f32[16,48], index: 8, kind: input, shape index: {}]
  %s9 = inlined_call_operand.vmem [shape: f32[2,128], index: 9, kind: input, shape index: {}]
  %s10 = inlined_call_operand.hbm [shape: bf16[2,128,384], index: 10, kind: input, shape index: {}]
  %s11 = inlined_call_operand.vmem [shape: bf16[2,128,128], index: 11, kind: input, shape index: {}]
  %s12 = inlined_call_operand.vmem [shape: f32[2,1,128], index: 12, kind: input, shape index: {}]
  %s13 = inlined_call_operand.vmem [shape: bf16[128,128], index: 13, kind: input, shape index: {}]
  %s14 = inlined_call_operand.vmem [shape: f32[1,128], index: 14, kind: input, shape index: {}]
  %s15 = inlined_call_operand.hbm [shape: f32[16,128], index: 15, kind: output, shape index: {}]
  %s16 = sld [smem:[#allocation0]]
  $region86: #{tpu_custom_call.1} parent=0
    _
  %s18 = ssub.s32 1, %s16
  %s19 = scalar_select 0, %s18, %s16
  $region1: #{tpu_custom_call.1} parent=0
    #allocation2 [shape = 'u8[512]{0}', space=vmem, size = 0x400, scoped, tag = 'input window, operand 4, single buffered']
    #allocation3 [shape = 's32[1]{0}', space=sflag, size = 0x4, scoped, tag = 'scoped memory for tpu_custom_call.1']
    #allocation4 [shape = 's32[1]{0}', space=sflag, size = 0x4, scoped, tag = 'scoped memory for tpu_custom_call.1']
    #allocation5 [shape = 'u8[512]{0}', space=vmem, size = 0x400, scoped, tag = 'input window, operand 5, single buffered']
    #allocation6 [shape = 's32[1]{0}', space=sflag, size = 0x4, scoped, tag = 'scoped memory for tpu_custom_call.1']
    #allocation7 [shape = 'u8[8192]{0}', space=vmem, size = 0x2000, scoped, tag = 'input window, operand 8, single buffered']
    #allocation8 [shape = 'u8[196608]{0}', space=vmem, size = 0x30000, scoped, tag = 'input window, operand 10, single buffered']
    #allocation9 [shape = 's32[1]{0}', space=sflag, size = 0x4, scoped, tag = 'scoped memory for tpu_custom_call.1']
    #allocation10 [shape = 'u8[8192]{0}', space=vmem, size = 0x2000, scoped, tag = 'output window, operand 0, single buffered']
    %20 = vsyncpa [#allocation3], 0
    %21 = vsyncpa [#allocation6], 0
    %22 = vsyncpa [#allocation9], 0
    %23 = vsyncpa [#allocation4], 0
    // Predicated region
    $region2: #{tpu_custom_call.1} parent=1 // pred_check
      _
    $region3: #{tpu_custom_call.1} parent=1 // pred_check_branch
      %25 = sbr.rel (0) target = $region5
    $region4: #{tpu_custom_call.1} parent=1 // pred_region
      _
    $region5: #{tpu_custom_call.1} parent=1 // pred_fallthru
      _
    // Predicated region
    $region6: #{tpu_custom_call.1} parent=1 // pred_check
      _
    $region7: #{tpu_custom_call.1} parent=1 // pred_check_branch
      %27 = sbr.rel (0) target = $region9
    $region8: #{tpu_custom_call.1} parent=1 // pred_region
      _
    $region9: #{tpu_custom_call.1} parent=1 // pred_fallthru
      _
    // Predicated region
    $region10: #{tpu_custom_call.1} parent=1 // pred_check
      _
    $region11: #{tpu_custom_call.1} parent=1 // pred_check_branch
      %29 = sbr.rel (0) target = $region13
    $region12: #{tpu_custom_call.1} parent=1 // pred_region
      _
    $region13: #{tpu_custom_call.1} parent=1 // pred_fallthru
      _
    // Predicated region
    $region14: #{tpu_custom_call.1} parent=1 // pred_check
      _
    $region15: #{tpu_custom_call.1} parent=1 // pred_check_branch
      %31 = sbr.rel (0) target = $region17
    $region16: #{tpu_custom_call.1} parent=1 // pred_region
      _
    $region17: #{tpu_custom_call.1} parent=1 // pred_fallthru
      _
    // Predicated region
    $region18: #{tpu_custom_call.1} parent=1 // pred_check
      _
    $region19: #{tpu_custom_call.1} parent=1 // pred_check_branch
      %33 = sbr.rel (0) target = $region21
    $region20: #{tpu_custom_call.1} parent=1 // pred_region
      %s35 = ssub.s32 16, 16
      %36 = vsyncadd [#allocation3], %s35
      %s38 = sshll.u32 [#allocation2], 4
      %s39 = int_to_ptr.vmem [resolvable:$true] %s38
      %41 = dma.hbm_to_vmem [thread:$0]  %s4, 16, %s39, [#allocation3]
    $region21: #{tpu_custom_call.1} parent=1 // pred_fallthru
      _
    // Predicated region
    $region22: #{tpu_custom_call.1} parent=1 // pred_check
      _
    $region23: #{tpu_custom_call.1} parent=1 // pred_check_branch
      %43 = sbr.rel (0) target = $region25
    $region24: #{tpu_custom_call.1} parent=1 // pred_region
      %s45 = ssub.s32 16, 16
      %46 = vsyncadd [#allocation6], %s45
      %s48 = sshll.u32 [#allocation5], 4
      %s49 = int_to_ptr.vmem [resolvable:$true] %s48
      %51 = dma.hbm_to_vmem [thread:$0]  %s5, 16, %s49, [#allocation6]
    $region25: #{tpu_custom_call.1} parent=1 // pred_fallthru
      _
    // Predicated region
    $region26: #{tpu_custom_call.1} parent=1 // pred_check
      _
    $region27: #{tpu_custom_call.1} parent=1 // pred_check_branch
      %53 = sbr.rel (0) target = $region29
    $region28: #{tpu_custom_call.1} parent=1 // pred_region
      _
    $region29: #{tpu_custom_call.1} parent=1 // pred_fallthru
      _
    // Predicated region
    $region30: #{tpu_custom_call.1} parent=1 // pred_check
      _
    $region31: #{tpu_custom_call.1} parent=1 // pred_check_branch
      %55 = sbr.rel (0) target = $region33
    $region32: #{tpu_custom_call.1} parent=1 // pred_region
      _
    $region33: #{tpu_custom_call.1} parent=1 // pred_fallthru
      _
    // Predicated region
    $region34: #{tpu_custom_call.1} parent=1 // pred_check
      _
    $region35: #{tpu_custom_call.1} parent=1 // pred_check_branch
      %57 = sbr.rel (0) target = $region37
    $region36: #{tpu_custom_call.1} parent=1 // pred_region
      %s59 = ssub.s32 256, 256
      %60 = vsyncadd [#allocation6], %s59
      %s61 = sshll.u32 [#allocation7], 4
      %s62 = int_to_ptr.vmem [resolvable:$true] %s61
      %67 = dma.hbm_to_vmem [thread:$0]  %s8, 256, %s62, [#allocation6], 128, 128, 8
    $region37: #{tpu_custom_call.1} parent=1 // pred_fallthru
      _
    // Predicated region
    $region38: #{tpu_custom_call.1} parent=1 // pred_check
      _
    $region39: #{tpu_custom_call.1} parent=1 // pred_check_branch
      %69 = sbr.rel (0) target = $region41
    $region40: #{tpu_custom_call.1} parent=1 // pred_region
      _
    $region41: #{tpu_custom_call.1} parent=1 // pred_fallthru
      _
    // Predicated region
    $region42: #{tpu_custom_call.1} parent=1 // pred_check
      _
    $region43: #{tpu_custom_call.1} parent=1 // pred_check_branch
      %71 = sbr.rel (0) target = $region45
    $region44: #{tpu_custom_call.1} parent=1 // pred_region
      %s73 = ssub.s32 6144, 6144
      %74 = vsyncadd [#allocation9], %s73
      %s75 = sshll.u32 [#allocation8], 4
      %s76 = int_to_ptr.vmem [resolvable:$true] %s75
      %81 = dma.hbm_to_vmem [thread:$0]  %s10, 6144, %s76, [#allocation9], 192, 192, 12
    $region45: #{tpu_custom_call.1} parent=1 // pred_fallthru
      _
    // Predicated region
    $region46: #{tpu_custom_call.1} parent=1 // pred_check
      _
    $region47: #{tpu_custom_call.1} parent=1 // pred_check_branch
      %83 = sbr.rel (0) target = $region49
    $region48: #{tpu_custom_call.1} parent=1 // pred_region
      _
    $region49: #{tpu_custom_call.1} parent=1 // pred_fallthru
      _
    // Predicated region
    $region50: #{tpu_custom_call.1} parent=1 // pred_check
      _
    $region51: #{tpu_custom_call.1} parent=1 // pred_check_branch
      %85 = sbr.rel (0) target = $region53
    $region52: #{tpu_custom_call.1} parent=1 // pred_region
      _
    $region53: #{tpu_custom_call.1} parent=1 // pred_fallthru
      _
    // Predicated region
    $region54: #{tpu_custom_call.1} parent=1 // pred_check
      _
    $region55: #{tpu_custom_call.1} parent=1 // pred_check_branch
      %87 = sbr.rel (0) target = $region57
    $region56: #{tpu_custom_call.1} parent=1 // pred_region
      _
    $region57: #{tpu_custom_call.1} parent=1 // pred_fallthru
      _
    // Predicated region
    $region58: #{tpu_custom_call.1} parent=1 // pred_check
      _
    $region59: #{tpu_custom_call.1} parent=1 // pred_check_branch
      %89 = sbr.rel (0) target = $region61
    $region60: #{tpu_custom_call.1} parent=1 // pred_region
      _
    $region61: #{tpu_custom_call.1} parent=1 // pred_fallthru
      _
    // Predicated region
    $region62: #{tpu_custom_call.1} parent=1 // pred_check
      _
    $region63: #{tpu_custom_call.1} parent=1 // pred_check_branch
      %91 = sbr.rel (0) target = $region65
    $region64: #{tpu_custom_call.1} parent=1 // pred_region
      %92 = dma.done [#allocation3], 16
    $region65: #{tpu_custom_call.1} parent=1 // pred_fallthru
      _
    // Predicated region
    $region66: #{tpu_custom_call.1} parent=1 // pred_check
      _
    $region67: #{tpu_custom_call.1} parent=1 // pred_check_branch
      %94 = sbr.rel (0) target = $region69
    $region68: #{tpu_custom_call.1} parent=1 // pred_region
      %95 = dma.done [#allocation6], 16
    $region69: #{tpu_custom_call.1} parent=1 // pred_fallthru
      _
    // Predicated region
    $region70: #{tpu_custom_call.1} parent=1 // pred_check
      _
    $region71: #{tpu_custom_call.1} parent=1 // pred_check_branch
      %97 = sbr.rel (0) target = $region73
    $region72: #{tpu_custom_call.1} parent=1 // pred_region
      %98 = dma.done [#allocation6], 256
    $region73: #{tpu_custom_call.1} parent=1 // pred_fallthru
      _
    // Predicated region
    $region74: #{tpu_custom_call.1} parent=1 // pred_check
      _
    $region75: #{tpu_custom_call.1} parent=1 // pred_check_branch
      %100 = sbr.rel (0) target = $region77
    $region76: #{tpu_custom_call.1} parent=1 // pred_region
      %101 = dma.done [#allocation9], 6144
    $region77: #{tpu_custom_call.1} parent=1 // pred_fallthru
      _
    %v103 = vld [vmem:[%s6] sm:$0xff]
    %v104 = vld [vmem:[%s6 + $0x8] sm:$0xff]
    %v105 = vld [vmem:[%s6 + $0x10] sm:$0xff]
    %v106 = vld [vmem:[%s6 + $0x18] sm:$0xff]
    %v107 = vld [vmem:[%s6 + $0x20] sm:$0xff]
    %v108 = vld [vmem:[%s6 + $0x28] sm:$0xff]
    %v109 = vld [vmem:[%s7] sm:$0xff]
    %v110 = vld [vmem:[%s7 + $0x8] sm:$0xff]
    %v111 = vld [vmem:[%s7 + $0x10] sm:$0xff]
    %v112 = vld [vmem:[%s7 + $0x18] sm:$0xff]
    %v113 = vld [vmem:[%s7 + $0x20] sm:$0xff]
    %v114 = vld [vmem:[%s7 + $0x28] sm:$0xff]
    %v115 = vld [vmem:[#allocation7] sm:$0xff]
    %v116 = vld [vmem:[#allocation7 + $0x8] sm:$0xff]
    %v117 = vld [vmem:[%s3] sm:$0xff]
    %v118 = vld [vmem:[%s3 + $0x8] sm:$0xff]
    %v119 = vld [vmem:[%s3 + $0x10] sm:$0xff]
    %v120 = vld [vmem:[%s3 + $0x18] sm:$0xff]
    %v121 = vld [vmem:[%s3 + $0x20] sm:$0xff]
    %v122 = vld [vmem:[%s3 + $0x28] sm:$0xff]
    %v123 = vld [vmem:[%s9] sm:$0x3]
    %v124 = vld [vmem:[%s1] sm:$0xff]
    %v125 = vld [vmem:[%s1 + $0x8] sm:$0xff]
    %v126 = vld [vmem:[%s1 + $0x10] sm:$0xff]
    %v127 = vld [vmem:[%s1 + $0x18] sm:$0xff]
    %v128 = vld [vmem:[%s1 + $0x20] sm:$0xff]
    %v129 = vld [vmem:[%s1 + $0x28] sm:$0xff]
    %v130 = vld [vmem:[#allocation2] sm:$0x1]
    %132 = vset.pattern.permute.xlu0 0
    %133 = vperm.xlu0 %132, %v124
    %v134 = vpop.permute.xlu0 %133
    %137 = vset.pattern.permute.xlu0 0
    %138 = vperm.xlu0 %137, %v125
    %v139 = vpop.permute.xlu0 %138
    %142 = vset.pattern.permute.xlu0 0
    %143 = vperm.xlu0 %142, %v126
    %v144 = vpop.permute.xlu0 %143
    %147 = vset.pattern.permute.xlu0 0
    %148 = vperm.xlu0 %147, %v127
    %v149 = vpop.permute.xlu0 %148
    %152 = vset.pattern.permute.xlu0 0
    %153 = vperm.xlu0 %152, %v128
    %v154 = vpop.permute.xlu0 %153
    %157 = vset.pattern.permute.xlu0 0
    %158 = vperm.xlu0 %157, %v129
    %v159 = vpop.permute.xlu0 %158
    %v162 = vlaneseq
    %v163 = vshrl.u32 %v162, 7
    %v164 = vsub.s32 0, %v163
    %v165 = vrot.slane %v130, %v164
    %v167 = vmul.f32 %v134, %v165
    %v168 = vmul.f32 %v139, %v165
    %v169 = vmul.f32 %v144, %v165
    %v170 = vmul.f32 %v149, %v165
    %v171 = vmul.f32 %v154, %v165
    %v172 = vmul.f32 %v159, %v165
    %v173 = vld [vmem:[#allocation5] sm:$0x1]
    %v175 = vlaneseq
    %v176 = vshrl.u32 %v175, 7
    %v177 = vsub.s32 0, %v176
    %v178 = vrot.slane %v173, %v177
    %v180 = vadd.f32 %v167, %v178
    %v181 = vadd.f32 %v168, %v178
    %v182 = vadd.f32 %v169, %v178
    %v183 = vadd.f32 %v170, %v178
    %v184 = vadd.f32 %v171, %v178
    %v185 = vadd.f32 %v172, %v178
    %v186 = vand.u32 2147483647, %v180
    %vm187 = vcmp.le.f32.partialorder %v186, 0.7853982
    %vm188 = vcmp.lt.s32.totalorder %v180, 0
    %v189 = vand.u32 %v180, 2139095040
    %v190 = vshrl.u32 %v189, 23
    %v191 = vsub.s32 %v190, 127
    %v192 = vand.u32 2147483647, %v180
    %v193 = vand.u32 %v192, 8388607
    %v194 = vor.u32 %v193, 8388608
    %v195 = vsub.s32 0, %v194
    %v196 = vadd.s32 %v191, 1
    %vm197 = vcmp.gt.s32.totalorder %v196, 0
    %v198 = vsel %vm197, %v196, 0
    %v199 = vshrl.u32 %v198, 5
    %v200 = vand.u32 %v198, 31
    %v201 = vsub.s32 32, %v200
    %v202 = vshrl.u32 683565275, %v201
    %v203 = vshll.u32 683565275, %v200
    %v204 = vshrl.u32 2475754826, %v201
    %v205 = vor.u32 %v203, %v204
    %v206 = vshll.u32 2475754826, %v200
    %v207 = vshrl.u32 2131351028, %v201
    %v208 = vor.u32 %v206, %v207
    %v209 = vshll.u32 2131351028, %v200
    %v210 = vshrl.u32 2102212464, %v201
    %v211 = vor.u32 %v209, %v210
    %v212 = vshll.u32 2102212464, %v200
    %v213 = vshrl.u32 920167782, %v201
    %v214 = vor.u32 %v212, %v213
    %v215 = vshll.u32 920167782, %v200
    %v216 = vshrl.u32 1326507024, %v201
    %v217 = vor.u32 %v215, %v216
    %vm218 = vcmp.lt.s32.totalorder %v199, 1
    %vm219 = vcmp.lt.s32.totalorder %v199, 2
    %vm220 = vcmp.lt.s32.totalorder %v199, 3
    %vm221 = vcmp.lt.s32.totalorder %v199, 4
    %v222 = vsel %vm218, %v202, %v205
    %v223 = vsel %vm221, %v211, 2102212464
    %v224 = vsel %vm220, %v208, %v223
    %v225 = vsel %vm219, %v222, %v224
    %v226 = vsel %vm218, %v205, %v208
    %v227 = vsel %vm221, %v214, 920167782
    %v228 = vsel %vm220, %v211, %v227
    %v229 = vsel %vm219, %v226, %v228
    %v230 = vsel %vm218, %v208, %v211
    %v231 = vsel %vm221, %v217, 1326507024
    %v232 = vsel %vm220, %v214, %v231
    %v233 = vsel %vm219, %v230, %v232
    %v234 = vshll.u32 %v194, 8
    %v235 = vmul.u32.u64.compose %v234, %v233
    %v236 = vextract.low.u32 %v235
    %v237 = vextract.high.u32 %v235
    %v238 = vmul.u32.u64.compose %v234, %v229
    %v239 = vextract.low.u32 %v238
    %v240 = vextract.high.u32 %v238
    %v241 = vmul.u32 %v234, %v225
    %v242 = vadd.s32 %v237, %v239
    %vm243 = vc.u32 %v237, %v239
    %v244 = vadd.s32 %v240, 1
    %v245 = vsel %vm243, %v244, %v240
    %v246 = vadd.s32 %v241, %v245
    %v247 = vadd.s32 %v246, 536870912
    %v248 = vshrl.u32 %v247, 30
    %v249 = vshll.u32 %v248, 30
    %v250 = vsub.s32 %v246, %v249
    %vm251 = vcmp.lt.s32.totalorder %v250, 0
    %v252 = vsub.s32 0, %v250
    %v253 = vsel %vm251, %v252, %v250
    %v254 = vclz %v253
    %v255 = vsub.s32 %v254, 2
    %vm256 = vcmp.gt.s32.totalorder 0, %v255
    %v257 = vsel %vm256, 0, %v255
    %v258 = vsub.s32 32, %v257
    %v259 = vshll.u32 %v250, %v257
    %v260 = vshrl.u32 %v242, %v258
    %v261 = vor.u32 %v259, %v260
    %v262 = vsub.s32 4294967266, %v257
    %v263 = vadd.s32 %v262, 127
    %v264 = vshll.u32 %v263, 23
    %v265 = vor.u32 4788187, %v264
    %v266 = vand.u32 2147483647, %v265
    %v268 = vcvt.s32.f32 %v261
    %v269 = vmul.f32 %v268, %v266
    %v270 = vxor.u32 %v269, 2147483648
    %v271 = vsel %vm188, %v270, %v269
    %v272 = vsub.s32 4, %v248
    %v273 = vsel %vm188, %v272, %v248
    %v274 = vsel %vm187, %v180, %v271
    %v275 = vsel %vm187, 0, %v273
    %v276 = vcosq.f32.pop %v274
    %v277 = vsinq.f32.pop %v274
    %vm278 = vweird.f32 %v180
    %v279 = vadd.s32 %v275, 3
    %v280 = vand.u32 %v279, 3
    %vm281 = vcmp.lt.s32.totalorder %v280, 2
    %vm282 = vcmp.eq.s32.totalorder %v280, 0
    %v283 = vxor.u32 %v277, 2147483648
    %v284 = vsel %vm282, %v276, %v283
    %vm285 = vcmp.eq.s32.totalorder %v280, 2
    %v286 = vxor.u32 %v276, 2147483648
    %v287 = vsel %vm285, %v286, %v277
    %v288 = vsel %vm281, %v284, %v287
    %v289 = vsel %vm278, nan, %v288
    %v290 = vand.u32 2147483647, %v181
    %vm291 = vcmp.le.f32.partialorder %v290, 0.7853982
    %vm292 = vcmp.lt.s32.totalorder %v181, 0
    %v293 = vand.u32 %v181, 2139095040
    %v294 = vshrl.u32 %v293, 23
    %v295 = vsub.s32 %v294, 127
    %v296 = vand.u32 2147483647, %v181
    %v297 = vand.u32 %v296, 8388607
    %v298 = vor.u32 %v297, 8388608
    %v299 = vsub.s32 0, %v298
    %v300 = vadd.s32 %v295, 1
    %vm301 = vcmp.gt.s32.totalorder %v300, 0
    %v302 = vsel %vm301, %v300, 0
    %v303 = vshrl.u32 %v302, 5
    %v304 = vand.u32 %v302, 31
    %v305 = vsub.s32 32, %v304
    %v306 = vshrl.u32 683565275, %v305
    %v307 = vshll.u32 683565275, %v304
    %v308 = vshrl.u32 2475754826, %v305
    %v309 = vor.u32 %v307, %v308
    %v310 = vshll.u32 2475754826, %v304
    %v311 = vshrl.u32 2131351028, %v305
    %v312 = vor.u32 %v310, %v311
    %v313 = vshll.u32 2131351028, %v304
    %v314 = vshrl.u32 2102212464, %v305
    %v315 = vor.u32 %v313, %v314
    %v316 = vshll.u32 2102212464, %v304
    %v317 = vshrl.u32 920167782, %v305
    %v318 = vor.u32 %v316, %v317
    %v319 = vshll.u32 920167782, %v304
    %v320 = vshrl.u32 1326507024, %v305
    %v321 = vor.u32 %v319, %v320
    %vm322 = vcmp.lt.s32.totalorder %v303, 1
    %vm323 = vcmp.lt.s32.totalorder %v303, 2
    %vm324 = vcmp.lt.s32.totalorder %v303, 3
    %vm325 = vcmp.lt.s32.totalorder %v303, 4
    %v326 = vsel %vm322, %v306, %v309
    %v327 = vsel %vm325, %v315, 2102212464
    %v328 = vsel %vm324, %v312, %v327
    %v329 = vsel %vm323, %v326, %v328
    %v330 = vsel %vm322, %v309, %v312
    %v331 = vsel %vm325, %v318, 920167782
    %v332 = vsel %vm324, %v315, %v331
    %v333 = vsel %vm323, %v330, %v332
    %v334 = vsel %vm322, %v312, %v315
    %v335 = vsel %vm325, %v321, 1326507024
    %v336 = vsel %vm324, %v318, %v335
    %v337 = vsel %vm323, %v334, %v336
    %v338 = vshll.u32 %v298, 8
    %v339 = vmul.u32.u64.compose %v338, %v337
    %v340 = vextract.low.u32 %v339
    %v341 = vextract.high.u32 %v339
    %v342 = vmul.u32.u64.compose %v338, %v333
    %v343 = vextract.low.u32 %v342
    %v344 = vextract.high.u32 %v342
    %v345 = vmul.u32 %v338, %v329
    %v346 = vadd.s32 %v341, %v343
    %vm347 = vc.u32 %v341, %v343
    %v348 = vadd.s32 %v344, 1
    %v349 = vsel %vm347, %v348, %v344
    %v350 = vadd.s32 %v345, %v349
    %v351 = vadd.s32 %v350, 536870912
    %v352 = vshrl.u32 %v351, 30
    %v353 = vshll.u32 %v352, 30
    %v354 = vsub.s32 %v350, %v353
    %vm355 = vcmp.lt.s32.totalorder %v354, 0
    %v356 = vsub.s32 0, %v354
    %v357 = vsel %vm355, %v356, %v354
    %v358 = vclz %v357
    %v359 = vsub.s32 %v358, 2
    %vm360 = vcmp.gt.s32.totalorder 0, %v359
    %v361 = vsel %vm360, 0, %v359
    %v362 = vsub.s32 32, %v361
    %v363 = vshll.u32 %v354, %v361
    %v364 = vshrl.u32 %v346, %v362
    %v365 = vor.u32 %v363, %v364
    %v366 = vsub.s32 4294967266, %v361
    %v367 = vadd.s32 %v366, 127
    %v368 = vshll.u32 %v367, 23
    %v369 = vor.u32 4788187, %v368
    %v370 = vand.u32 2147483647, %v369
    %v372 = vcvt.s32.f32 %v365
    %v373 = vmul.f32 %v372, %v370
    %v374 = vxor.u32 %v373, 2147483648
    %v375 = vsel %vm292, %v374, %v373
    %v376 = vsub.s32 4, %v352
    %v377 = vsel %vm292, %v376, %v352
    %v378 = vsel %vm291, %v181, %v375
    %v379 = vsel %vm291, 0, %v377
    %v380 = vcosq.f32.pop %v378
    %v381 = vsinq.f32.pop %v378
    %vm382 = vweird.f32 %v181
    %v383 = vadd.s32 %v379, 3
    %v384 = vand.u32 %v383, 3
    %vm385 = vcmp.lt.s32.totalorder %v384, 2
    %vm386 = vcmp.eq.s32.totalorder %v384, 0
    %v387 = vxor.u32 %v381, 2147483648
    %v388 = vsel %vm386, %v380, %v387
    %vm389 = vcmp.eq.s32.totalorder %v384, 2
    %v390 = vxor.u32 %v380, 2147483648
    %v391 = vsel %vm389, %v390, %v381
    %v392 = vsel %vm385, %v388, %v391
    %v393 = vsel %vm382, nan, %v392
    %v394 = vand.u32 2147483647, %v182
    %vm395 = vcmp.le.f32.partialorder %v394, 0.7853982
    %vm396 = vcmp.lt.s32.totalorder %v182, 0
    %v397 = vand.u32 %v182, 2139095040
    %v398 = vshrl.u32 %v397, 23
    %v399 = vsub.s32 %v398, 127
    %v400 = vand.u32 2147483647, %v182
    %v401 = vand.u32 %v400, 8388607
    %v402 = vor.u32 %v401, 8388608
    %v403 = vsub.s32 0, %v402
    %v404 = vadd.s32 %v399, 1
    %vm405 = vcmp.gt.s32.totalorder %v404, 0
    %v406 = vsel %vm405, %v404, 0
    %v407 = vshrl.u32 %v406, 5
    %v408 = vand.u32 %v406, 31
    %v409 = vsub.s32 32, %v408
    %v410 = vshrl.u32 683565275, %v409
    %v411 = vshll.u32 683565275, %v408
    %v412 = vshrl.u32 2475754826, %v409
    %v413 = vor.u32 %v411, %v412
    %v414 = vshll.u32 2475754826, %v408
    %v415 = vshrl.u32 2131351028, %v409
    %v416 = vor.u32 %v414, %v415
    %v417 = vshll.u32 2131351028, %v408
    %v418 = vshrl.u32 2102212464, %v409
    %v419 = vor.u32 %v417, %v418
    %v420 = vshll.u32 2102212464, %v408
    %v421 = vshrl.u32 920167782, %v409
    %v422 = vor.u32 %v420, %v421
    %v423 = vshll.u32 920167782, %v408
    %v424 = vshrl.u32 1326507024, %v409
    %v425 = vor.u32 %v423, %v424
    %vm426 = vcmp.lt.s32.totalorder %v407, 1
    %vm427 = vcmp.lt.s32.totalorder %v407, 2
    %vm428 = vcmp.lt.s32.totalorder %v407, 3
    %vm429 = vcmp.lt.s32.totalorder %v407, 4
    %v430 = vsel %vm426, %v410, %v413
    %v431 = vsel %vm429, %v419, 2102212464
    %v432 = vsel %vm428, %v416, %v431
    %v433 = vsel %vm427, %v430, %v432
    %v434 = vsel %vm426, %v413, %v416
    %v435 = vsel %vm429, %v422, 920167782
    %v436 = vsel %vm428, %v419, %v435
    %v437 = vsel %vm427, %v434, %v436
    %v438 = vsel %vm426, %v416, %v419
    %v439 = vsel %vm429, %v425, 1326507024
    %v440 = vsel %vm428, %v422, %v439
    %v441 = vsel %vm427, %v438, %v440
    %v442 = vshll.u32 %v402, 8
    %v443 = vmul.u32.u64.compose %v442, %v441
    %v444 = vextract.low.u32 %v443
    %v445 = vextract.high.u32 %v443
    %v446 = vmul.u32.u64.compose %v442, %v437
    %v447 = vextract.low.u32 %v446
    %v448 = vextract.high.u32 %v446
    %v449 = vmul.u32 %v442, %v433
    %v450 = vadd.s32 %v445, %v447
    %vm451 = vc.u32 %v445, %v447
    %v452 = vadd.s32 %v448, 1
    %v453 = vsel %vm451, %v452, %v448
    %v454 = vadd.s32 %v449, %v453
    %v455 = vadd.s32 %v454, 536870912
    %v456 = vshrl.u32 %v455, 30
    %v457 = vshll.u32 %v456, 30
    %v458 = vsub.s32 %v454, %v457
    %vm459 = vcmp.lt.s32.totalorder %v458, 0
    %v460 = vsub.s32 0, %v458
    %v461 = vsel %vm459, %v460, %v458
    %v462 = vclz %v461
    %v463 = vsub.s32 %v462, 2
    %vm464 = vcmp.gt.s32.totalorder 0, %v463
    %v465 = vsel %vm464, 0, %v463
    %v466 = vsub.s32 32, %v465
    %v467 = vshll.u32 %v458, %v465
    %v468 = vshrl.u32 %v450, %v466
    %v469 = vor.u32 %v467, %v468
    %v470 = vsub.s32 4294967266, %v465
    %v471 = vadd.s32 %v470, 127
    %v472 = vshll.u32 %v471, 23
    %v473 = vor.u32 4788187, %v472
    %v474 = vand.u32 2147483647, %v473
    %v476 = vcvt.s32.f32 %v469
    %v477 = vmul.f32 %v476, %v474
    %v478 = vxor.u32 %v477, 2147483648
    %v479 = vsel %vm396, %v478, %v477
    %v480 = vsub.s32 4, %v456
    %v481 = vsel %vm396, %v480, %v456
    %v482 = vsel %vm395, %v182, %v479
    %v483 = vsel %vm395, 0, %v481
    %v484 = vcosq.f32.pop %v482
    %v485 = vsinq.f32.pop %v482
    %vm486 = vweird.f32 %v182
    %v487 = vadd.s32 %v483, 3
    %v488 = vand.u32 %v487, 3
    %vm489 = vcmp.lt.s32.totalorder %v488, 2
    %vm490 = vcmp.eq.s32.totalorder %v488, 0
    %v491 = vxor.u32 %v485, 2147483648
    %v492 = vsel %vm490, %v484, %v491
    %vm493 = vcmp.eq.s32.totalorder %v488, 2
    %v494 = vxor.u32 %v484, 2147483648
    %v495 = vsel %vm493, %v494, %v485
    %v496 = vsel %vm489, %v492, %v495
    %v497 = vsel %vm486, nan, %v496
    %v498 = vand.u32 2147483647, %v183
    %vm499 = vcmp.le.f32.partialorder %v498, 0.7853982
    %vm500 = vcmp.lt.s32.totalorder %v183, 0
    %v501 = vand.u32 %v183, 2139095040
    %v502 = vshrl.u32 %v501, 23
    %v503 = vsub.s32 %v502, 127
    %v504 = vand.u32 2147483647, %v183
    %v505 = vand.u32 %v504, 8388607
    %v506 = vor.u32 %v505, 8388608
    %v507 = vsub.s32 0, %v506
    %v508 = vadd.s32 %v503, 1
    %vm509 = vcmp.gt.s32.totalorder %v508, 0
    %v510 = vsel %vm509, %v508, 0
    %v511 = vshrl.u32 %v510, 5
    %v512 = vand.u32 %v510, 31
    %v513 = vsub.s32 32, %v512
    %v514 = vshrl.u32 683565275, %v513
    %v515 = vshll.u32 683565275, %v512
    %v516 = vshrl.u32 2475754826, %v513
    %v517 = vor.u32 %v515, %v516
    %v518 = vshll.u32 2475754826, %v512
    %v519 = vshrl.u32 2131351028, %v513
    %v520 = vor.u32 %v518, %v519
    %v521 = vshll.u32 2131351028, %v512
    %v522 = vshrl.u32 2102212464, %v513
    %v523 = vor.u32 %v521, %v522
    %v524 = vshll.u32 2102212464, %v512
    %v525 = vshrl.u32 920167782, %v513
    %v526 = vor.u32 %v524, %v525
    %v527 = vshll.u32 920167782, %v512
    %v528 = vshrl.u32 1326507024, %v513
    %v529 = vor.u32 %v527, %v528
    %vm530 = vcmp.lt.s32.totalorder %v511, 1
    %vm531 = vcmp.lt.s32.totalorder %v511, 2
    %vm532 = vcmp.lt.s32.totalorder %v511, 3
    %vm533 = vcmp.lt.s32.totalorder %v511, 4
    %v534 = vsel %vm530, %v514, %v517
    %v535 = vsel %vm533, %v523, 2102212464
    %v536 = vsel %vm532, %v520, %v535
    %v537 = vsel %vm531, %v534, %v536
    %v538 = vsel %vm530, %v517, %v520
    %v539 = vsel %vm533, %v526, 920167782
    %v540 = vsel %vm532, %v523, %v539
    %v541 = vsel %vm531, %v538, %v540
    %v542 = vsel %vm530, %v520, %v523
    %v543 = vsel %vm533, %v529, 1326507024
    %v544 = vsel %vm532, %v526, %v543
    %v545 = vsel %vm531, %v542, %v544
    %v546 = vshll.u32 %v506, 8
    %v547 = vmul.u32.u64.compose %v546, %v545
    %v548 = vextract.low.u32 %v547
    %v549 = vextract.high.u32 %v547
    %v550 = vmul.u32.u64.compose %v546, %v541
    %v551 = vextract.low.u32 %v550
    %v552 = vextract.high.u32 %v550
    %v553 = vmul.u32 %v546, %v537
    %v554 = vadd.s32 %v549, %v551
    %vm555 = vc.u32 %v549, %v551
    %v556 = vadd.s32 %v552, 1
    %v557 = vsel %vm555, %v556, %v552
    %v558 = vadd.s32 %v553, %v557
    %v559 = vadd.s32 %v558, 536870912
    %v560 = vshrl.u32 %v559, 30
    %v561 = vshll.u32 %v560, 30
    %v562 = vsub.s32 %v558, %v561
    %vm563 = vcmp.lt.s32.totalorder %v562, 0
    %v564 = vsub.s32 0, %v562
    %v565 = vsel %vm563, %v564, %v562
    %v566 = vclz %v565
    %v567 = vsub.s32 %v566, 2
    %vm568 = vcmp.gt.s32.totalorder 0, %v567
    %v569 = vsel %vm568, 0, %v567
    %v570 = vsub.s32 32, %v569
    %v571 = vshll.u32 %v562, %v569
    %v572 = vshrl.u32 %v554, %v570
    %v573 = vor.u32 %v571, %v572
    %v574 = vsub.s32 4294967266, %v569
    %v575 = vadd.s32 %v574, 127
    %v576 = vshll.u32 %v575, 23
    %v577 = vor.u32 4788187, %v576
    %v578 = vand.u32 2147483647, %v577
    %v580 = vcvt.s32.f32 %v573
    %v581 = vmul.f32 %v580, %v578
    %v582 = vxor.u32 %v581, 2147483648
    %v583 = vsel %vm500, %v582, %v581
    %v584 = vsub.s32 4, %v560
    %v585 = vsel %vm500, %v584, %v560
    %v586 = vsel %vm499, %v183, %v583
    %v587 = vsel %vm499, 0, %v585
    %v588 = vcosq.f32.pop %v586
    %v589 = vsinq.f32.pop %v586
    %vm590 = vweird.f32 %v183
    %v591 = vadd.s32 %v587, 3
    %v592 = vand.u32 %v591, 3
    %vm593 = vcmp.lt.s32.totalorder %v592, 2
    %vm594 = vcmp.eq.s32.totalorder %v592, 0
    %v595 = vxor.u32 %v589, 2147483648
    %v596 = vsel %vm594, %v588, %v595
    %vm597 = vcmp.eq.s32.totalorder %v592, 2
    %v598 = vxor.u32 %v588, 2147483648
    %v599 = vsel %vm597, %v598, %v589
    %v600 = vsel %vm593, %v596, %v599
    %v601 = vsel %vm590, nan, %v600
    %v602 = vand.u32 2147483647, %v184
    %vm603 = vcmp.le.f32.partialorder %v602, 0.7853982
    %vm604 = vcmp.lt.s32.totalorder %v184, 0
    %v605 = vand.u32 %v184, 2139095040
    %v606 = vshrl.u32 %v605, 23
    %v607 = vsub.s32 %v606, 127
    %v608 = vand.u32 2147483647, %v184
    %v609 = vand.u32 %v608, 8388607
    %v610 = vor.u32 %v609, 8388608
    %v611 = vsub.s32 0, %v610
    %v612 = vadd.s32 %v607, 1
    %vm613 = vcmp.gt.s32.totalorder %v612, 0
    %v614 = vsel %vm613, %v612, 0
    %v615 = vshrl.u32 %v614, 5
    %v616 = vand.u32 %v614, 31
    %v617 = vsub.s32 32, %v616
    %v618 = vshrl.u32 683565275, %v617
    %v619 = vshll.u32 683565275, %v616
    %v620 = vshrl.u32 2475754826, %v617
    %v621 = vor.u32 %v619, %v620
    %v622 = vshll.u32 2475754826, %v616
    %v623 = vshrl.u32 2131351028, %v617
    %v624 = vor.u32 %v622, %v623
    %v625 = vshll.u32 2131351028, %v616
    %v626 = vshrl.u32 2102212464, %v617
    %v627 = vor.u32 %v625, %v626
    %v628 = vshll.u32 2102212464, %v616
    %v629 = vshrl.u32 920167782, %v617
    %v630 = vor.u32 %v628, %v629
    %v631 = vshll.u32 920167782, %v616
    %v632 = vshrl.u32 1326507024, %v617
    %v633 = vor.u32 %v631, %v632
    %vm634 = vcmp.lt.s32.totalorder %v615, 1
    %vm635 = vcmp.lt.s32.totalorder %v615, 2
    %vm636 = vcmp.lt.s32.totalorder %v615, 3
    %vm637 = vcmp.lt.s32.totalorder %v615, 4
    %v638 = vsel %vm634, %v618, %v621
    %v639 = vsel %vm637, %v627, 2102212464
    %v640 = vsel %vm636, %v624, %v639
    %v641 = vsel %vm635, %v638, %v640
    %v642 = vsel %vm634, %v621, %v624
    %v643 = vsel %vm637, %v630, 920167782
    %v644 = vsel %vm636, %v627, %v643
    %v645 = vsel %vm635, %v642, %v644
    %v646 = vsel %vm634, %v624, %v627
    %v647 = vsel %vm637, %v633, 1326507024
    %v648 = vsel %vm636, %v630, %v647
    %v649 = vsel %vm635, %v646, %v648
    %v650 = vshll.u32 %v610, 8
    %v651 = vmul.u32.u64.compose %v650, %v649
    %v652 = vextract.low.u32 %v651
    %v653 = vextract.high.u32 %v651
    %v654 = vmul.u32.u64.compose %v650, %v645
    %v655 = vextract.low.u32 %v654
    %v656 = vextract.high.u32 %v654
    %v657 = vmul.u32 %v650, %v641
    %v658 = vadd.s32 %v653, %v655
    %vm659 = vc.u32 %v653, %v655
    %v660 = vadd.s32 %v656, 1
    %v661 = vsel %vm659, %v660, %v656
    %v662 = vadd.s32 %v657, %v661
    %v663 = vadd.s32 %v662, 536870912
    %v664 = vshrl.u32 %v663, 30
    %v665 = vshll.u32 %v664, 30
    %v666 = vsub.s32 %v662, %v665
    %vm667 = vcmp.lt.s32.totalorder %v666, 0
    %v668 = vsub.s32 0, %v666
    %v669 = vsel %vm667, %v668, %v666
    %v670 = vclz %v669
    %v671 = vsub.s32 %v670, 2
    %vm672 = vcmp.gt.s32.totalorder 0, %v671
    %v673 = vsel %vm672, 0, %v671
    %v674 = vsub.s32 32, %v673
    %v675 = vshll.u32 %v666, %v673
    %v676 = vshrl.u32 %v658, %v674
    %v677 = vor.u32 %v675, %v676
    %v678 = vsub.s32 4294967266, %v673
    %v679 = vadd.s32 %v678, 127
    %v680 = vshll.u32 %v679, 23
    %v681 = vor.u32 4788187, %v680
    %v682 = vand.u32 2147483647, %v681
    %v684 = vcvt.s32.f32 %v677
    %v685 = vmul.f32 %v684, %v682
    %v686 = vxor.u32 %v685, 2147483648
    %v687 = vsel %vm604, %v686, %v685
    %v688 = vsub.s32 4, %v664
    %v689 = vsel %vm604, %v688, %v664
    %v690 = vsel %vm603, %v184, %v687
    %v691 = vsel %vm603, 0, %v689
    %v692 = vcosq.f32.pop %v690
    %v693 = vsinq.f32.pop %v690
    %vm694 = vweird.f32 %v184
    %v695 = vadd.s32 %v691, 3
    %v696 = vand.u32 %v695, 3
    %vm697 = vcmp.lt.s32.totalorder %v696, 2
    %vm698 = vcmp.eq.s32.totalorder %v696, 0
    %v699 = vxor.u32 %v693, 2147483648
    %v700 = vsel %vm698, %v692, %v699
    %vm701 = vcmp.eq.s32.totalorder %v696, 2
    %v702 = vxor.u32 %v692, 2147483648
    %v703 = vsel %vm701, %v702, %v693
    %v704 = vsel %vm697, %v700, %v703
    %v705 = vsel %vm694, nan, %v704
    %v706 = vand.u32 2147483647, %v185
    %vm707 = vcmp.le.f32.partialorder %v706, 0.7853982
    %vm708 = vcmp.lt.s32.totalorder %v185, 0
    %v709 = vand.u32 %v185, 2139095040
    %v710 = vshrl.u32 %v709, 23
    %v711 = vsub.s32 %v710, 127
    %v712 = vand.u32 2147483647, %v185
    %v713 = vand.u32 %v712, 8388607
    %v714 = vor.u32 %v713, 8388608
    %v715 = vsub.s32 0, %v714
    %v716 = vadd.s32 %v711, 1
    %vm717 = vcmp.gt.s32.totalorder %v716, 0
    %v718 = vsel %vm717, %v716, 0
    %v719 = vshrl.u32 %v718, 5
    %v720 = vand.u32 %v718, 31
    %v721 = vsub.s32 32, %v720
    %v722 = vshrl.u32 683565275, %v721
    %v723 = vshll.u32 683565275, %v720
    %v724 = vshrl.u32 2475754826, %v721
    %v725 = vor.u32 %v723, %v724
    %v726 = vshll.u32 2475754826, %v720
    %v727 = vshrl.u32 2131351028, %v721
    %v728 = vor.u32 %v726, %v727
    %v729 = vshll.u32 2131351028, %v720
    %v730 = vshrl.u32 2102212464, %v721
    %v731 = vor.u32 %v729, %v730
    %v732 = vshll.u32 2102212464, %v720
    %v733 = vshrl.u32 920167782, %v721
    %v734 = vor.u32 %v732, %v733
    %v735 = vshll.u32 920167782, %v720
    %v736 = vshrl.u32 1326507024, %v721
    %v737 = vor.u32 %v735, %v736
    %vm738 = vcmp.lt.s32.totalorder %v719, 1
    %vm739 = vcmp.lt.s32.totalorder %v719, 2
    %vm740 = vcmp.lt.s32.totalorder %v719, 3
    %vm741 = vcmp.lt.s32.totalorder %v719, 4
    %v742 = vsel %vm738, %v722, %v725
    %v743 = vsel %vm741, %v731, 2102212464
    %v744 = vsel %vm740, %v728, %v743
    %v745 = vsel %vm739, %v742, %v744
    %v746 = vsel %vm738, %v725, %v728
    %v747 = vsel %vm741, %v734, 920167782
    %v748 = vsel %vm740, %v731, %v747
    %v749 = vsel %vm739, %v746, %v748
    %v750 = vsel %vm738, %v728, %v731
    %v751 = vsel %vm741, %v737, 1326507024
    %v752 = vsel %vm740, %v734, %v751
    %v753 = vsel %vm739, %v750, %v752
    %v754 = vshll.u32 %v714, 8
    %v755 = vmul.u32.u64.compose %v754, %v753
    %v756 = vextract.low.u32 %v755
    %v757 = vextract.high.u32 %v755
    %v758 = vmul.u32.u64.compose %v754, %v749
    %v759 = vextract.low.u32 %v758
    %v760 = vextract.high.u32 %v758
    %v761 = vmul.u32 %v754, %v745
    %v762 = vadd.s32 %v757, %v759
    %vm763 = vc.u32 %v757, %v759
    %v764 = vadd.s32 %v760, 1
    %v765 = vsel %vm763, %v764, %v760
    %v766 = vadd.s32 %v761, %v765
    %v767 = vadd.s32 %v766, 536870912
    %v768 = vshrl.u32 %v767, 30
    %v769 = vshll.u32 %v768, 30
    %v770 = vsub.s32 %v766, %v769
    %vm771 = vcmp.lt.s32.totalorder %v770, 0
    %v772 = vsub.s32 0, %v770
    %v773 = vsel %vm771, %v772, %v770
    %v774 = vclz %v773
    %v775 = vsub.s32 %v774, 2
    %vm776 = vcmp.gt.s32.totalorder 0, %v775
    %v777 = vsel %vm776, 0, %v775
    %v778 = vsub.s32 32, %v777
    %v779 = vshll.u32 %v770, %v777
    %v780 = vshrl.u32 %v762, %v778
    %v781 = vor.u32 %v779, %v780
    %v782 = vsub.s32 4294967266, %v777
    %v783 = vadd.s32 %v782, 127
    %v784 = vshll.u32 %v783, 23
    %v785 = vor.u32 4788187, %v784
    %v786 = vand.u32 2147483647, %v785
    %v788 = vcvt.s32.f32 %v781
    %v789 = vmul.f32 %v788, %v786
    %v790 = vxor.u32 %v789, 2147483648
    %v791 = vsel %vm708, %v790, %v789
    %v792 = vsub.s32 4, %v768
    %v793 = vsel %vm708, %v792, %v768
    %v794 = vsel %vm707, %v185, %v791
    %v795 = vsel %vm707, 0, %v793
    %v796 = vcosq.f32.pop %v794
    %v797 = vsinq.f32.pop %v794
    %vm798 = vweird.f32 %v185
    %v799 = vadd.s32 %v795, 3
    %v800 = vand.u32 %v799, 3
    %vm801 = vcmp.lt.s32.totalorder %v800, 2
    %vm802 = vcmp.eq.s32.totalorder %v800, 0
    %v803 = vxor.u32 %v797, 2147483648
    %v804 = vsel %vm802, %v796, %v803
    %vm805 = vcmp.eq.s32.totalorder %v800, 2
    %v806 = vxor.u32 %v796, 2147483648
    %v807 = vsel %vm805, %v806, %v797
    %v808 = vsel %vm801, %v804, %v807
    %v809 = vsel %vm798, nan, %v808
    %v810 = vld [vmem:[%s2] sm:$0xff]
    %v811 = vld [vmem:[%s2 + $0x8] sm:$0xff]
    %v812 = vld [vmem:[%s2 + $0x10] sm:$0xff]
    %v813 = vld [vmem:[%s2 + $0x18] sm:$0xff]
    %v814 = vld [vmem:[%s2 + $0x20] sm:$0xff]
    %v815 = vld [vmem:[%s2 + $0x28] sm:$0xff]
    %v816 = vadd.f32 %v289, %v810
    %v817 = vadd.f32 %v393, %v811
    %v818 = vadd.f32 %v497, %v812
    %v819 = vadd.f32 %v601, %v813
    %v820 = vadd.f32 %v705, %v814
    %v821 = vadd.f32 %v809, %v815
    %823 = vset.pattern.permute.xlu0 0
    %824 = vperm.xlu0 %823, %v117
    %v825 = vpop.permute.xlu0 %824
    %828 = vset.pattern.permute.xlu0 0
    %829 = vperm.xlu0 %828, %v118
    %v830 = vpop.permute.xlu0 %829
    %833 = vset.pattern.permute.xlu0 0
    %834 = vperm.xlu0 %833, %v119
    %v835 = vpop.permute.xlu0 %834
    %838 = vset.pattern.permute.xlu0 0
    %839 = vperm.xlu0 %838, %v120
    %v840 = vpop.permute.xlu0 %839
    %843 = vset.pattern.permute.xlu0 0
    %844 = vperm.xlu0 %843, %v121
    %v845 = vpop.permute.xlu0 %844
    %848 = vset.pattern.permute.xlu0 0
    %849 = vperm.xlu0 %848, %v122
    %v850 = vpop.permute.xlu0 %849
    %v852 = vmul.f32 %v816, %v825
    %v853 = vmul.f32 %v817, %v830
    %v854 = vmul.f32 %v818, %v835
    %v855 = vmul.f32 %v819, %v840
    %v856 = vmul.f32 %v820, %v845
    %v857 = vmul.f32 %v821, %v850
    %vm858 = vcmask 392192
    %v859 = vsel %vm858, %v115, 0.0
    %860 = vadd.xlane.f32.xlu0 %v859
    %v861 = vpop.xlane.xlu0 %860
    %v862 = vsel %vm858, %v116, 0.0
    %863 = vadd.xlane.f32.xlu0 %v862
    %v864 = vpop.xlane.xlu0 %863
    %v865 = vsub.f32 %v861, 1.0
    %v866 = vsub.f32 %v864, 1.0
    %v868 = vsel %vm858, %v115, 0
    %v871 = vsel %vm858, %v116, 0
    %873 = vmatprep.subr.mxu0 0.0
    %874 = vmatpush1.msra.mxu0 %v852
    %875 = vmatprep.subr.mxu0 0.0
    %876 = vmatpush1.msra.mxu0 %v853
    %877 = vmatprep.subr.mxu0 0.0
    %878 = vmatpush1.msra.mxu0 %v854
    %879 = vmatprep.subr.mxu0 0.0
    %880 = vmatpush1.msra.mxu0 %v855
    %881 = vmatprep.subr.mxu0 0.0
    %882 = vmatpush1.msra.mxu0 %v856
    %883 = vmatprep.subr.mxu0 0.0
    %884 = vmatpush1.msra.mxu0 %v857
    %885 = vmatprep.subr.mxu0 0.0
    %886 = vmatpush1.msra.mxu0 0.0
    %887 = vmatprep.subr.mxu0 0.0
    %888 = vmatpush1.msra.mxu0 0.0
    %889 = vmatprep.subr.mxu0 0.0
    %890 = vmatpush1.msra.mxu0 0.0
    %891 = vmatprep.subr.mxu0 0.0
    %892 = vmatpush1.msra.mxu0 0.0
    %893 = vmatprep.subr.mxu0 0.0
    %894 = vmatpush1.msra.mxu0 0.0
    %895 = vmatprep.subr.mxu0 0.0
    %896 = vmatpush1.msra.mxu0 0.0
    %897 = vmatprep.subr.mxu0 0.0
    %898 = vmatpush1.msra.mxu0 0.0
    %899 = vmatprep.subr.mxu0 0.0
    %900 = vmatpush1.msra.mxu0 0.0
    %901 = vmatprep.subr.mxu0 0.0
    %902 = vmatpush1.msra.mxu0 0.0
    %903 = vmatprep.subr.mxu0 0.0
    %904 = vmatpush1.msra.mxu0 0.0
    %905 = vmatprep.subr.mxu0 0.0
    %906 = vmatpush1.msra.mxu0 0.0
    %907 = vmatprep.subr.mxu0 0.0
    %908 = vmatpush1.msra.mxu0 0.0
    %909 = vmatprep.subr.mxu0 0.0
    %910 = vmatpush1.msra.mxu0 0.0
    %911 = vmatprep.subr.mxu0 0.0
    %912 = vmatpush1.msra.mxu0 0.0
    %913 = vmatprep.subr.mxu0 0.0
    %914 = vmatpush1.msra.mxu0 0.0
    %915 = vmatprep.subr.mxu0 0.0
    %916 = vmatpush1.msra.mxu0 0.0
    %917 = vmatprep.subr.mxu0 0.0
    %918 = vmatpush1.msra.mxu0 0.0
    %919 = vmatprep.subr.mxu0 0.0
    %920 = vmatpush1.msra.mxu0 0.0
    %921 = vmatprep.subr.mxu0 0.0
    %922 = vmatpush1.msra.mxu0 0.0
    %923 = vmatprep.subr.mxu0 0.0
    %924 = vmatpush1.msra.mxu0 0.0
    %925 = vmatprep.subr.mxu0 0.0
    %926 = vmatpush1.msra.mxu0 0.0
    %927 = vmatprep.subr.mxu0 0.0
    %928 = vmatpush1.msra.mxu0 0.0
    %929 = vmatprep.subr.mxu0 0.0
    %930 = vmatpush1.msra.mxu0 0.0
    %931 = vmatprep.subr.mxu0 0.0
    %932 = vmatpush1.msra.mxu0 0.0
    %933 = vmatprep.subr.mxu0 0.0
    %934 = vmatpush1.msra.mxu0 0.0
    %935 = vmatprep.subr.mxu0 0.0
    %936 = vmatpush1.msra.mxu0 0.0
    %937 = vmatprep.mubr.f32.mxu0 0.0
    %938 = vmatmul.mubr.f32.gmra.mrb[0].mxu0 %v868
    %v939 = vpop.f32.mrb[0].mxu0
    %v940 = vadd.f32 0.0, %v939
    %v941 = vpop.f32.mrb[0].mxu0
    %942 = vmatprep.mubr.f32.mxu0 0.0
    %943 = vmatmul.mubr.f32.gmra.mrb[0].mxu0 %v871
    %v944 = vpop.f32.mrb[0].mxu0
    %v945 = vadd.f32 0.0, %v944
    %v946 = vpop.f32.mrb[0].mxu0
    %947 = vdwg.mxu0
    %v948 = vmax.f32 %v865, 1.0
    %v949 = vmax.f32 %v866, 1.0
    %v950 = vrcp.pop %v948
    %v951 = vmul.f32 %v940, %v950
    %v952 = vrcp.pop %v949
    %v953 = vmul.f32 %v945, %v952
    %v954 = vsub.f32 1.0, %v117
    %v955 = vsub.f32 1.0, %v118
    %v956 = vsub.f32 1.0, %v119
    %v957 = vsub.f32 1.0, %v120
    %v958 = vsub.f32 1.0, %v121
    %v959 = vsub.f32 1.0, %v122
    %vm960 = vcmask 130048
    %v962 = vsel %vm960, %v109, 0
    %v965 = vsel %vm960, %v110, 0
    %v968 = vsel %vm960, %v111, 0
    %v971 = vsel %vm960, %v112, 0
    %v974 = vsel %vm960, %v113, 0
    %v977 = vsel %vm960, %v114, 0
    %979 = vmatprep.subr.mxu0 0.0
    %980 = vmatpush1.msra.mxu0 %v951
    %981 = vmatprep.subr.mxu0 0.0
    %982 = vmatpush1.msra.mxu0 %v953
    %983 = vmatprep.subr.mxu0 0.0
    %984 = vmatpush1.msra.mxu0 0.0
    %985 = vmatprep.subr.mxu0 0.0
    %986 = vmatpush1.msra.mxu0 0.0
    %987 = vmatprep.subr.mxu0 0.0
    %988 = vmatpush1.msra.mxu0 0.0
    %989 = vmatprep.subr.mxu0 0.0
    %990 = vmatpush1.msra.mxu0 0.0
    %991 = vmatprep.subr.mxu0 0.0
    %992 = vmatpush1.msra.mxu0 0.0
    %993 = vmatprep.subr.mxu0 0.0
    %994 = vmatpush1.msra.mxu0 0.0
    %995 = vmatprep.subr.mxu0 0.0
    %996 = vmatpush1.msra.mxu0 0.0
    %997 = vmatprep.subr.mxu0 0.0
    %998 = vmatpush1.msra.mxu0 0.0
    %999 = vmatprep.subr.mxu0 0.0
    %1000 = vmatpush1.msra.mxu0 0.0
    %1001 = vmatprep.subr.mxu0 0.0
    %1002 = vmatpush1.msra.mxu0 0.0
    %1003 = vmatprep.subr.mxu0 0.0
    %1004 = vmatpush1.msra.mxu0 0.0
    %1005 = vmatprep.subr.mxu0 0.0
    %1006 = vmatpush1.msra.mxu0 0.0
    %1007 = vmatprep.subr.mxu0 0.0
    %1008 = vmatpush1.msra.mxu0 0.0
    %1009 = vmatprep.subr.mxu0 0.0
    %1010 = vmatpush1.msra.mxu0 0.0
    %1011 = vmatprep.subr.mxu0 0.0
    %1012 = vmatpush1.msra.mxu0 0.0
    %1013 = vmatprep.subr.mxu0 0.0
    %1014 = vmatpush1.msra.mxu0 0.0
    %1015 = vmatprep.subr.mxu0 0.0
    %1016 = vmatpush1.msra.mxu0 0.0
    %1017 = vmatprep.subr.mxu0 0.0
    %1018 = vmatpush1.msra.mxu0 0.0
    %1019 = vmatprep.subr.mxu0 0.0
    %1020 = vmatpush1.msra.mxu0 0.0
    %1021 = vmatprep.subr.mxu0 0.0
    %1022 = vmatpush1.msra.mxu0 0.0
    %1023 = vmatprep.subr.mxu0 0.0
    %1024 = vmatpush1.msra.mxu0 0.0
    %1025 = vmatprep.subr.mxu0 0.0
    %1026 = vmatpush1.msra.mxu0 0.0
    %1027 = vmatprep.subr.mxu0 0.0
    %1028 = vmatpush1.msra.mxu0 0.0
    %1029 = vmatprep.subr.mxu0 0.0
    %1030 = vmatpush1.msra.mxu0 0.0
    %1031 = vmatprep.subr.mxu0 0.0
    %1032 = vmatpush1.msra.mxu0 0.0
    %1033 = vmatprep.subr.mxu0 0.0
    %1034 = vmatpush1.msra.mxu0 0.0
    %1035 = vmatprep.subr.mxu0 0.0
    %1036 = vmatpush1.msra.mxu0 0.0
    %1037 = vmatprep.subr.mxu0 0.0
    %1038 = vmatpush1.msra.mxu0 0.0
    %1039 = vmatprep.subr.mxu0 0.0
    %1040 = vmatpush1.msra.mxu0 0.0
    %1041 = vmatprep.subr.mxu0 0.0
    %1042 = vmatpush1.msra.mxu0 0.0
    %1043 = vmatprep.mubr.f32.mxu0 0.0
    %1044 = vmatmul.mubr.f32.gmra.mrb[0].mxu0 %v962
    %v1045 = vpop.f32.mrb[0].mxu0
    %v1046 = vadd.f32 0.0, %v1045
    %v1047 = vpop.f32.mrb[0].mxu0
    %1048 = vmatprep.mubr.f32.mxu0 0.0
    %1049 = vmatmul.mubr.f32.gmra.mrb[0].mxu0 %v965
    %v1050 = vpop.f32.mrb[0].mxu0
    %v1051 = vadd.f32 0.0, %v1050
    %v1052 = vpop.f32.mrb[0].mxu0
    %1053 = vmatprep.mubr.f32.mxu0 0.0
    %1054 = vmatmul.mubr.f32.gmra.mrb[0].mxu0 %v968
    %v1055 = vpop.f32.mrb[0].mxu0
    %v1056 = vadd.f32 0.0, %v1055
    %v1057 = vpop.f32.mrb[0].mxu0
    %1058 = vmatprep.mubr.f32.mxu0 0.0
    %1059 = vmatmul.mubr.f32.gmra.mrb[0].mxu0 %v971
    %v1060 = vpop.f32.mrb[0].mxu0
    %v1061 = vadd.f32 0.0, %v1060
    %v1062 = vpop.f32.mrb[0].mxu0
    %1063 = vmatprep.mubr.f32.mxu0 0.0
    %1064 = vmatmul.mubr.f32.gmra.mrb[0].mxu0 %v974
    %v1065 = vpop.f32.mrb[0].mxu0
    %v1066 = vadd.f32 0.0, %v1065
    %v1067 = vpop.f32.mrb[0].mxu0
    %1068 = vmatprep.mubr.f32.mxu0 0.0
    %1069 = vmatmul.mubr.f32.gmra.mrb[0].mxu0 %v977
    %v1070 = vpop.f32.mrb[0].mxu0
    %v1071 = vadd.f32 0.0, %v1070
    %v1072 = vpop.f32.mrb[0].mxu0
    %1073 = vdwg.mxu0
    %1075 = vset.pattern.permute.xlu0 0
    %1076 = vperm.xlu0 %1075, %v954
    %v1077 = vpop.permute.xlu0 %1076
    %1080 = vset.pattern.permute.xlu0 0
    %1081 = vperm.xlu0 %1080, %v955
    %v1082 = vpop.permute.xlu0 %1081
    %1085 = vset.pattern.permute.xlu0 0
    %1086 = vperm.xlu0 %1085, %v956
    %v1087 = vpop.permute.xlu0 %1086
    %1090 = vset.pattern.permute.xlu0 0
    %1091 = vperm.xlu0 %1090, %v957
    %v1092 = vpop.permute.xlu0 %1091
    %1095 = vset.pattern.permute.xlu0 0
    %1096 = vperm.xlu0 %1095, %v958
    %v1097 = vpop.permute.xlu0 %1096
    %1100 = vset.pattern.permute.xlu0 0
    %1101 = vperm.xlu0 %1100, %v959
    %v1102 = vpop.permute.xlu0 %1101
    %v1104 = vmul.f32 %v1077, %v1046
    %v1105 = vmul.f32 %v1082, %v1051
    %v1106 = vmul.f32 %v1087, %v1056
    %v1107 = vmul.f32 %v1092, %v1061
    %v1108 = vmul.f32 %v1097, %v1066
    %v1109 = vmul.f32 %v1102, %v1071
    %v1110 = vadd.f32 %v852, %v1104
    %v1111 = vadd.f32 %v853, %v1105
    %v1112 = vadd.f32 %v854, %v1106
    %v1113 = vadd.f32 %v855, %v1107
    %v1114 = vadd.f32 %v856, %v1108
    %v1115 = vadd.f32 %v857, %v1109
    %v1116 = vpack.c.bf16 %v1111, %v1110
    %v1117 = vpack.c.bf16 %v1113, %v1112
    %v1118 = vpack.c.bf16 %v1115, %v1114
    %v1119 = vld [vmem:[%s0] sm:$0xff]
    %v1120 = vld [vmem:[%s0 + $0x8] sm:$0xff]
    %v1121 = vpack.c.bf16 %v1120, %v1119
    %v1122 = vld [vmem:[#allocation8] sm:$0xff]
    %v1123 = vld [vmem:[#allocation8 + $0x8] sm:$0xf]
    %v1124 = vld [vmem:[#allocation8 + $0xc] sm:$0xff]
    %v1125 = vld [vmem:[#allocation8 + $0x14] sm:$0xf]
    %v1126 = vld [vmem:[#allocation8 + $0x18] sm:$0xff]
    %v1127 = vld [vmem:[#allocation8 + $0x20] sm:$0xf]
    %v1128 = vld [vmem:[#allocation8 + $0x24] sm:$0xff]
    %v1129 = vld [vmem:[#allocation8 + $0x2c] sm:$0xf]
    %v1130 = vld [vmem:[#allocation8 + $0x30] sm:$0xff]
    %v1131 = vld [vmem:[#allocation8 + $0x38] sm:$0xf]
    %v1132 = vld [vmem:[#allocation8 + $0x3c] sm:$0xff]
    %v1133 = vld [vmem:[#allocation8 + $0x44] sm:$0xf]
    %v1134 = vld [vmem:[#allocation8 + $0x48] sm:$0xff]
    %v1135 = vld [vmem:[#allocation8 + $0x50] sm:$0xf]
    %v1136 = vld [vmem:[#allocation8 + $0x54] sm:$0xff]
    %v1137 = vld [vmem:[#allocation8 + $0x5c] sm:$0xf]
    %v1138 = vld [vmem:[#allocation8 + $0x60] sm:$0xff]
    %v1139 = vld [vmem:[#allocation8 + $0x68] sm:$0xf]
    %v1140 = vld [vmem:[#allocation8 + $0x6c] sm:$0xff]
    %v1141 = vld [vmem:[#allocation8 + $0x74] sm:$0xf]
    %v1142 = vld [vmem:[#allocation8 + $0x78] sm:$0xff]
    %v1143 = vld [vmem:[#allocation8 + $0x80] sm:$0xf]
    %v1144 = vld [vmem:[#allocation8 + $0x84] sm:$0xff]
    %v1145 = vld [vmem:[#allocation8 + $0x8c] sm:$0xf]
    %v1146 = vld [vmem:[#allocation8 + $0x90] sm:$0xff]
    %v1147 = vld [vmem:[#allocation8 + $0x98] sm:$0xf]
    %v1148 = vld [vmem:[#allocation8 + $0x9c] sm:$0xff]
    %v1149 = vld [vmem:[#allocation8 + $0xa4] sm:$0xf]
    %v1150 = vld [vmem:[#allocation8 + $0xa8] sm:$0xff]
    %v1151 = vld [vmem:[#allocation8 + $0xb0] sm:$0xf]
    %v1152 = vld [vmem:[#allocation8 + $0xb4] sm:$0xff]
    %v1153 = vld [vmem:[#allocation8 + $0xbc] sm:$0xf]
    %v1186 = vunpack.c.l.b16 %v1122
    %v1187 = vunpack.c.h.b16 %v1122
    %v1188 = vunpack.c.l.b16 %v1123
    %v1189 = vunpack.c.l.b16 %v1124
    %v1190 = vunpack.c.h.b16 %v1124
    %v1191 = vunpack.c.l.b16 %v1125
    %v1192 = vunpack.c.l.b16 %v1126
    %v1193 = vunpack.c.h.b16 %v1126
    %v1194 = vunpack.c.l.b16 %v1127
    %v1195 = vunpack.c.l.b16 %v1128
    %v1196 = vunpack.c.h.b16 %v1128
    %v1197 = vunpack.c.l.b16 %v1129
    %v1198 = vunpack.c.l.b16 %v1130
    %v1199 = vunpack.c.h.b16 %v1130
    %v1200 = vunpack.c.l.b16 %v1131
    %v1201 = vunpack.c.l.b16 %v1132
    %v1202 = vunpack.c.h.b16 %v1132
    %v1203 = vunpack.c.l.b16 %v1133
    %v1204 = vunpack.c.l.b16 %v1134
    %v1205 = vunpack.c.h.b16 %v1134
    %v1206 = vunpack.c.l.b16 %v1135
    %v1207 = vunpack.c.l.b16 %v1136
    %v1208 = vunpack.c.h.b16 %v1136
    %v1209 = vunpack.c.l.b16 %v1137
    %v1210 = vunpack.c.l.b16 %v1138
    %v1211 = vunpack.c.h.b16 %v1138
    %v1212 = vunpack.c.l.b16 %v1139
    %v1213 = vunpack.c.l.b16 %v1140
    %v1214 = vunpack.c.h.b16 %v1140
    %v1215 = vunpack.c.l.b16 %v1141
    %v1216 = vunpack.c.l.b16 %v1142
    %v1217 = vunpack.c.h.b16 %v1142
    %v1218 = vunpack.c.l.b16 %v1143
    %v1219 = vunpack.c.l.b16 %v1144
    %v1220 = vunpack.c.h.b16 %v1144
    %v1221 = vunpack.c.l.b16 %v1145
    %v1222 = vunpack.c.l.b16 %v1146
    %v1223 = vunpack.c.h.b16 %v1146
    %v1224 = vunpack.c.l.b16 %v1147
    %v1225 = vunpack.c.l.b16 %v1148
    %v1226 = vunpack.c.h.b16 %v1148
    %v1227 = vunpack.c.l.b16 %v1149
    %v1228 = vunpack.c.l.b16 %v1150
    %v1229 = vunpack.c.h.b16 %v1150
    %v1230 = vunpack.c.l.b16 %v1151
    %v1231 = vunpack.c.l.b16 %v1152
    %v1232 = vunpack.c.h.b16 %v1152
    %v1233 = vunpack.c.l.b16 %v1153
    %v1234 = vpack.c.b16 %v1189, %v1186
    %v1235 = vpack.c.b16 %v1190, %v1187
    %v1236 = vpack.c.b16 %v1191, %v1188
    %v1237 = vpack.c.b16 %v1195, %v1192
    %v1238 = vpack.c.b16 %v1196, %v1193
    %v1239 = vpack.c.b16 %v1197, %v1194
    %v1240 = vpack.c.b16 %v1201, %v1198
    %v1241 = vpack.c.b16 %v1202, %v1199
    %v1242 = vpack.c.b16 %v1203, %v1200
    %v1243 = vpack.c.b16 %v1207, %v1204
    %v1244 = vpack.c.b16 %v1208, %v1205
    %v1245 = vpack.c.b16 %v1209, %v1206
    %v1246 = vpack.c.b16 %v1213, %v1210
    %v1247 = vpack.c.b16 %v1214, %v1211
    %v1248 = vpack.c.b16 %v1215, %v1212
    %v1249 = vpack.c.b16 %v1219, %v1216
    %v1250 = vpack.c.b16 %v1220, %v1217
    %v1251 = vpack.c.b16 %v1221, %v1218
    %v1252 = vpack.c.b16 %v1225, %v1222
    %v1253 = vpack.c.b16 %v1226, %v1223
    %v1254 = vpack.c.b16 %v1227, %v1224
    %v1255 = vpack.c.b16 %v1231, %v1228
    %v1256 = vpack.c.b16 %v1232, %v1229
    %v1257 = vpack.c.b16 %v1233, %v1230
    %1282 = vmatprep.subr.bf16.mxu0 %v1235
    %1283 = vmatpush1.bf16.msra.mxu0 %v1234
    %1284 = vmatprep.subr.bf16.mxu0 %v1238
    %1285 = vmatpush1.bf16.msra.mxu0 %v1237
    %1286 = vmatprep.subr.bf16.mxu0 %v1241
    %1287 = vmatpush1.bf16.msra.mxu0 %v1240
    %1288 = vmatprep.subr.bf16.mxu0 %v1244
    %1289 = vmatpush1.bf16.msra.mxu0 %v1243
    %1290 = vmatprep.subr.bf16.mxu0 %v1247
    %1291 = vmatpush1.bf16.msra.mxu0 %v1246
    %1292 = vmatprep.subr.bf16.mxu0 %v1250
    %1293 = vmatpush1.bf16.msra.mxu0 %v1249
    %1294 = vmatprep.subr.bf16.mxu0 %v1253
    %1295 = vmatpush1.bf16.msra.mxu0 %v1252
    %1296 = vmatprep.subr.bf16.mxu0 %v1256
    %1297 = vmatpush1.bf16.msra.mxu0 %v1255
    %1298 = vmatprep.subr.bf16.mxu0 0
    %1299 = vmatpush1.bf16.msra.mxu0 0
    %1300 = vmatprep.subr.bf16.mxu0 0
    %1301 = vmatpush1.bf16.msra.mxu0 0
    %1302 = vmatprep.subr.bf16.mxu0 0
    %1303 = vmatpush1.bf16.msra.mxu0 0
    %1304 = vmatprep.subr.bf16.mxu0 0
    %1305 = vmatpush1.bf16.msra.mxu0 0
    %1306 = vmatprep.subr.bf16.mxu0 0
    %1307 = vmatpush1.bf16.msra.mxu0 0
    %1308 = vmatprep.subr.bf16.mxu0 0
    %1309 = vmatpush1.bf16.msra.mxu0 0
    %1310 = vmatprep.subr.bf16.mxu0 0
    %1311 = vmatpush1.bf16.msra.mxu0 0
    %1312 = vmatprep.subr.bf16.mxu0 0
    %1313 = vmatpush1.bf16.msra.mxu0 0
    %1314 = vmatprep.mubr.bf16.mxu0 0
    %1315 = vmatmul.mubr.bf16.gmra.mrb[0].mxu0 %v1121
    %v1316 = vpop.f32.mrb[0].mxu0
    %v1317 = vadd.f32 0.0, %v1316
    %v1318 = vpop.f32.mrb[0].mxu0
    %v1319 = vadd.f32 0.0, %v1318
    %v1320 = vpop.f32.mrb[0].mxu0
    %v1321 = vadd.f32 0.0, %v1320
    %v1322 = vpop.f32.mrb[0].mxu0
    %v1323 = vadd.f32 0.0, %v1322
    %1324 = vdwg.mxu0
    %1325 = vmatprep.subr.bf16.mxu0 0
    %1326 = vmatpush1.bf16.msra.mxu0 %v1236
    %1327 = vmatprep.subr.bf16.mxu0 0
    %1328 = vmatpush1.bf16.msra.mxu0 %v1239
    %1329 = vmatprep.subr.bf16.mxu0 0
    %1330 = vmatpush1.bf16.msra.mxu0 %v1242
    %1331 = vmatprep.subr.bf16.mxu0 0
    %1332 = vmatpush1.bf16.msra.mxu0 %v1245
    %1333 = vmatprep.subr.bf16.mxu0 0
    %1334 = vmatpush1.bf16.msra.mxu0 %v1248
    %1335 = vmatprep.subr.bf16.mxu0 0
    %1336 = vmatpush1.bf16.msra.mxu0 %v1251
    %1337 = vmatprep.subr.bf16.mxu0 0
    %1338 = vmatpush1.bf16.msra.mxu0 %v1254
    %1339 = vmatprep.subr.bf16.mxu0 0
    %1340 = vmatpush1.bf16.msra.mxu0 %v1257
    %1341 = vmatprep.subr.bf16.mxu0 0
    %1342 = vmatpush1.bf16.msra.mxu0 0
    %1343 = vmatprep.subr.bf16.mxu0 0
    %1344 = vmatpush1.bf16.msra.mxu0 0
    %1345 = vmatprep.subr.bf16.mxu0 0
    %1346 = vmatpush1.bf16.msra.mxu0 0
    %1347 = vmatprep.subr.bf16.mxu0 0
    %1348 = vmatpush1.bf16.msra.mxu0 0
    %1349 = vmatprep.subr.bf16.mxu0 0
    %1350 = vmatpush1.bf16.msra.mxu0 0
    %1351 = vmatprep.subr.bf16.mxu0 0
    %1352 = vmatpush1.bf16.msra.mxu0 0
    %1353 = vmatprep.subr.bf16.mxu0 0
    %1354 = vmatpush1.bf16.msra.mxu0 0
    %1355 = vmatprep.subr.bf16.mxu0 0
    %1356 = vmatpush1.bf16.msra.mxu0 0
    %1357 = vmatprep.mubr.bf16.mxu0 0
    %1358 = vmatmul.mubr.bf16.gmra.mrb[0].mxu0 %v1121
    %v1359 = vpop.f32.mrb[0].mxu0
    %v1360 = vadd.f32 0.0, %v1359
    %v1361 = vpop.f32.mrb[0].mxu0
    %v1362 = vpop.f32.mrb[0].mxu0
    %v1363 = vadd.f32 0.0, %v1362
    %v1364 = vpop.f32.mrb[0].mxu0
    %1365 = vdwg.mxu0
    %v1366 = vld [vmem:[%s11] sm:$0xf]
    %v1367 = vld [vmem:[%s11 + $0x4] sm:$0xf]
    %v1368 = vld [vmem:[%s11 + $0x8] sm:$0xf]
    %v1369 = vld [vmem:[%s11 + $0xc] sm:$0xf]
    %v1370 = vld [vmem:[%s11 + $0x10] sm:$0xf]
    %v1371 = vld [vmem:[%s11 + $0x14] sm:$0xf]
    %v1372 = vld [vmem:[%s11 + $0x18] sm:$0xf]
    %v1373 = vld [vmem:[%s11 + $0x1c] sm:$0xf]
    %v1374 = vld [vmem:[%s11 + $0x20] sm:$0xf]
    %v1375 = vld [vmem:[%s11 + $0x24] sm:$0xf]
    %v1376 = vld [vmem:[%s11 + $0x28] sm:$0xf]
    %v1377 = vld [vmem:[%s11 + $0x2c] sm:$0xf]
    %v1378 = vld [vmem:[%s11 + $0x30] sm:$0xf]
    %v1379 = vld [vmem:[%s11 + $0x34] sm:$0xf]
    %v1380 = vld [vmem:[%s11 + $0x38] sm:$0xf]
    %v1381 = vld [vmem:[%s11 + $0x3c] sm:$0xf]
    %v1398 = vunpack.c.l.b16 %v1366
    %v1399 = vunpack.c.l.b16 %v1367
    %v1400 = vunpack.c.l.b16 %v1368
    %v1401 = vunpack.c.l.b16 %v1369
    %v1402 = vunpack.c.l.b16 %v1370
    %v1403 = vunpack.c.l.b16 %v1371
    %v1404 = vunpack.c.l.b16 %v1372
    %v1405 = vunpack.c.l.b16 %v1373
    %v1406 = vunpack.c.l.b16 %v1374
    %v1407 = vunpack.c.l.b16 %v1375
    %v1408 = vunpack.c.l.b16 %v1376
    %v1409 = vunpack.c.l.b16 %v1377
    %v1410 = vunpack.c.l.b16 %v1378
    %v1411 = vunpack.c.l.b16 %v1379
    %v1412 = vunpack.c.l.b16 %v1380
    %v1413 = vunpack.c.l.b16 %v1381
    %v1414 = vpack.c.b16 %v1399, %v1398
    %v1415 = vpack.c.b16 %v1401, %v1400
    %v1416 = vpack.c.b16 %v1403, %v1402
    %v1417 = vpack.c.b16 %v1405, %v1404
    %v1418 = vpack.c.b16 %v1407, %v1406
    %v1419 = vpack.c.b16 %v1409, %v1408
    %v1420 = vpack.c.b16 %v1411, %v1410
    %v1421 = vpack.c.b16 %v1413, %v1412
    %1430 = vmatprep.subr.bf16.mxu0 0
    %1431 = vmatpush1.bf16.msra.mxu0 %v1414
    %1432 = vmatprep.subr.bf16.mxu0 0
    %1433 = vmatpush1.bf16.msra.mxu0 %v1415
    %1434 = vmatprep.subr.bf16.mxu0 0
    %1435 = vmatpush1.bf16.msra.mxu0 %v1416
    %1436 = vmatprep.subr.bf16.mxu0 0
    %1437 = vmatpush1.bf16.msra.mxu0 %v1417
    %1438 = vmatprep.subr.bf16.mxu0 0
    %1439 = vmatpush1.bf16.msra.mxu0 %v1418
    %1440 = vmatprep.subr.bf16.mxu0 0
    %1441 = vmatpush1.bf16.msra.mxu0 %v1419
    %1442 = vmatprep.subr.bf16.mxu0 0
    %1443 = vmatpush1.bf16.msra.mxu0 %v1420
    %1444 = vmatprep.subr.bf16.mxu0 0
    %1445 = vmatpush1.bf16.msra.mxu0 %v1421
    %1446 = vmatprep.subr.bf16.mxu0 0
    %1447 = vmatpush1.bf16.msra.mxu0 0
    %1448 = vmatprep.subr.bf16.mxu0 0
    %1449 = vmatpush1.bf16.msra.mxu0 0
    %1450 = vmatprep.subr.bf16.mxu0 0
    %1451 = vmatpush1.bf16.msra.mxu0 0
    %1452 = vmatprep.subr.bf16.mxu0 0
    %1453 = vmatpush1.bf16.msra.mxu0 0
    %1454 = vmatprep.subr.bf16.mxu0 0
    %1455 = vmatpush1.bf16.msra.mxu0 0
    %1456 = vmatprep.subr.bf16.mxu0 0
    %1457 = vmatpush1.bf16.msra.mxu0 0
    %1458 = vmatprep.subr.bf16.mxu0 0
    %1459 = vmatpush1.bf16.msra.mxu0 0
    %1460 = vmatprep.subr.bf16.mxu0 0
    %1461 = vmatpush1.bf16.msra.mxu0 0
    %1462 = vmatprep.mubr.bf16.mxu0 0
    %1463 = vmatmul.mubr.bf16.gmra.mrb[0].mxu0 %v1116
    %v1464 = vpop.f32.mrb[0].mxu0
    %v1465 = vadd.f32 0.0, %v1464
    %v1466 = vpop.f32.mrb[0].mxu0
    %v1467 = vpop.f32.mrb[0].mxu0
    %v1468 = vadd.f32 0.0, %v1467
    %v1469 = vpop.f32.mrb[0].mxu0
    %1470 = vmatprep.mubr.bf16.mxu0 0
    %1471 = vmatmul.mubr.bf16.gmra.mrb[0].mxu0 %v1117
    %v1472 = vpop.f32.mrb[0].mxu0
    %v1473 = vadd.f32 0.0, %v1472
    %v1474 = vpop.f32.mrb[0].mxu0
    %v1475 = vpop.f32.mrb[0].mxu0
    %v1476 = vadd.f32 0.0, %v1475
    %v1477 = vpop.f32.mrb[0].mxu0
    %1478 = vmatprep.mubr.bf16.mxu0 0
    %1479 = vmatmul.mubr.bf16.gmra.mrb[0].mxu0 %v1118
    %v1480 = vpop.f32.mrb[0].mxu0
    %v1481 = vadd.f32 0.0, %v1480
    %v1482 = vpop.f32.mrb[0].mxu0
    %v1483 = vpop.f32.mrb[0].mxu0
    %v1484 = vadd.f32 0.0, %v1483
    %v1485 = vpop.f32.mrb[0].mxu0
    %1486 = vdwg.mxu0
    %v1488 = vsel %vm960, %v103, 0
    %v1491 = vsel %vm960, %v104, 0
    %v1494 = vsel %vm960, %v105, 0
    %v1497 = vsel %vm960, %v106, 0
    %v1500 = vsel %vm960, %v107, 0
    %v1503 = vsel %vm960, %v108, 0
    %1505 = vmatprep.subr.mxu0 %v1319
    %1506 = vmatpush1.msra.mxu0 %v1317
    %1507 = vmatprep.subr.mxu0 %v1323
    %1508 = vmatpush1.msra.mxu0 %v1321
    %1509 = vmatprep.subr.mxu0 0.0
    %1510 = vmatpush1.msra.mxu0 0.0
    %1511 = vmatprep.subr.mxu0 0.0
    %1512 = vmatpush1.msra.mxu0 0.0
    %1513 = vmatprep.subr.mxu0 0.0
    %1514 = vmatpush1.msra.mxu0 0.0
    %1515 = vmatprep.subr.mxu0 0.0
    %1516 = vmatpush1.msra.mxu0 0.0
    %1517 = vmatprep.subr.mxu0 0.0
    %1518 = vmatpush1.msra.mxu0 0.0
    %1519 = vmatprep.subr.mxu0 0.0
    %1520 = vmatpush1.msra.mxu0 0.0
    %1521 = vmatprep.subr.mxu0 0.0
    %1522 = vmatpush1.msra.mxu0 0.0
    %1523 = vmatprep.subr.mxu0 0.0
    %1524 = vmatpush1.msra.mxu0 0.0
    %1525 = vmatprep.subr.mxu0 0.0
    %1526 = vmatpush1.msra.mxu0 0.0
    %1527 = vmatprep.subr.mxu0 0.0
    %1528 = vmatpush1.msra.mxu0 0.0
    %1529 = vmatprep.subr.mxu0 0.0
    %1530 = vmatpush1.msra.mxu0 0.0
    %1531 = vmatprep.subr.mxu0 0.0
    %1532 = vmatpush1.msra.mxu0 0.0
    %1533 = vmatprep.subr.mxu0 0.0
    %1534 = vmatpush1.msra.mxu0 0.0
    %1535 = vmatprep.subr.mxu0 0.0
    %1536 = vmatpush1.msra.mxu0 0.0
    %1537 = vmatprep.subr.mxu0 0.0
    %1538 = vmatpush1.msra.mxu0 0.0
    %1539 = vmatprep.subr.mxu0 0.0
    %1540 = vmatpush1.msra.mxu0 0.0
    %1541 = vmatprep.subr.mxu0 0.0
    %1542 = vmatpush1.msra.mxu0 0.0
    %1543 = vmatprep.subr.mxu0 0.0
    %1544 = vmatpush1.msra.mxu0 0.0
    %1545 = vmatprep.subr.mxu0 0.0
    %1546 = vmatpush1.msra.mxu0 0.0
    %1547 = vmatprep.subr.mxu0 0.0
    %1548 = vmatpush1.msra.mxu0 0.0
    %1549 = vmatprep.subr.mxu0 0.0
    %1550 = vmatpush1.msra.mxu0 0.0
    %1551 = vmatprep.subr.mxu0 0.0
    %1552 = vmatpush1.msra.mxu0 0.0
    %1553 = vmatprep.subr.mxu0 0.0
    %1554 = vmatpush1.msra.mxu0 0.0
    %1555 = vmatprep.subr.mxu0 0.0
    %1556 = vmatpush1.msra.mxu0 0.0
    %1557 = vmatprep.subr.mxu0 0.0
    %1558 = vmatpush1.msra.mxu0 0.0
    %1559 = vmatprep.subr.mxu0 0.0
    %1560 = vmatpush1.msra.mxu0 0.0
    %1561 = vmatprep.subr.mxu0 0.0
    %1562 = vmatpush1.msra.mxu0 0.0
    %1563 = vmatprep.subr.mxu0 0.0
    %1564 = vmatpush1.msra.mxu0 0.0
    %1565 = vmatprep.subr.mxu0 0.0
    %1566 = vmatpush1.msra.mxu0 0.0
    %1567 = vmatprep.subr.mxu0 0.0
    %1568 = vmatpush1.msra.mxu0 0.0
    %1569 = vmatprep.mubr.f32.mxu0 0.0
    %1570 = vmatmul.mubr.f32.gmra.mrb[0].mxu0 %v1488
    %v1571 = vpop.f32.mrb[0].mxu0
    %v1572 = vadd.f32 0.0, %v1571
    %v1573 = vpop.f32.mrb[0].mxu0
    %v1574 = vadd.f32 0.0, %v1573
    %1575 = vmatprep.mubr.f32.mxu0 0.0
    %1576 = vmatmul.mubr.f32.gmra.mrb[0].mxu0 %v1491
    %v1577 = vpop.f32.mrb[0].mxu0
    %v1578 = vadd.f32 0.0, %v1577
    %v1579 = vpop.f32.mrb[0].mxu0
    %v1580 = vadd.f32 0.0, %v1579
    %1581 = vmatprep.mubr.f32.mxu0 0.0
    %1582 = vmatmul.mubr.f32.gmra.mrb[0].mxu0 %v1494
    %v1583 = vpop.f32.mrb[0].mxu0
    %v1584 = vadd.f32 0.0, %v1583
    %v1585 = vpop.f32.mrb[0].mxu0
    %v1586 = vadd.f32 0.0, %v1585
    %1587 = vmatprep.mubr.f32.mxu0 0.0
    %1588 = vmatmul.mubr.f32.gmra.mrb[0].mxu0 %v1497
    %v1589 = vpop.f32.mrb[0].mxu0
    %v1590 = vadd.f32 0.0, %v1589
    %v1591 = vpop.f32.mrb[0].mxu0
    %v1592 = vadd.f32 0.0, %v1591
    %1593 = vmatprep.mubr.f32.mxu0 0.0
    %1594 = vmatmul.mubr.f32.gmra.mrb[0].mxu0 %v1500
    %v1595 = vpop.f32.mrb[0].mxu0
    %v1596 = vadd.f32 0.0, %v1595
    %v1597 = vpop.f32.mrb[0].mxu0
    %v1598 = vadd.f32 0.0, %v1597
    %1599 = vmatprep.mubr.f32.mxu0 0.0
    %1600 = vmatmul.mubr.f32.gmra.mrb[0].mxu0 %v1503
    %v1601 = vpop.f32.mrb[0].mxu0
    %v1602 = vadd.f32 0.0, %v1601
    %v1603 = vpop.f32.mrb[0].mxu0
    %v1604 = vadd.f32 0.0, %v1603
    %1605 = vdwg.mxu0
    %1606 = vmatprep.subr.mxu0 0.0
    %1607 = vmatpush1.msra.mxu0 %v1360
    %1608 = vmatprep.subr.mxu0 0.0
    %1609 = vmatpush1.msra.mxu0 %v1363
    %1610 = vmatprep.subr.mxu0 0.0
    %1611 = vmatpush1.msra.mxu0 0.0
    %1612 = vmatprep.subr.mxu0 0.0
    %1613 = vmatpush1.msra.mxu0 0.0
    %1614 = vmatprep.subr.mxu0 0.0
    %1615 = vmatpush1.msra.mxu0 0.0
    %1616 = vmatprep.subr.mxu0 0.0
    %1617 = vmatpush1.msra.mxu0 0.0
    %1618 = vmatprep.subr.mxu0 0.0
    %1619 = vmatpush1.msra.mxu0 0.0
    %1620 = vmatprep.subr.mxu0 0.0
    %1621 = vmatpush1.msra.mxu0 0.0
    %1622 = vmatprep.subr.mxu0 0.0
    %1623 = vmatpush1.msra.mxu0 0.0
    %1624 = vmatprep.subr.mxu0 0.0
    %1625 = vmatpush1.msra.mxu0 0.0
    %1626 = vmatprep.subr.mxu0 0.0
    %1627 = vmatpush1.msra.mxu0 0.0
    %1628 = vmatprep.subr.mxu0 0.0
    %1629 = vmatpush1.msra.mxu0 0.0
    %1630 = vmatprep.subr.mxu0 0.0
    %1631 = vmatpush1.msra.mxu0 0.0
    %1632 = vmatprep.subr.mxu0 0.0
    %1633 = vmatpush1.msra.mxu0 0.0
    %1634 = vmatprep.subr.mxu0 0.0
    %1635 = vmatpush1.msra.mxu0 0.0
    %1636 = vmatprep.subr.mxu0 0.0
    %1637 = vmatpush1.msra.mxu0 0.0
    %1638 = vmatprep.subr.mxu0 0.0
    %1639 = vmatpush1.msra.mxu0 0.0
    %1640 = vmatprep.subr.mxu0 0.0
    %1641 = vmatpush1.msra.mxu0 0.0
    %1642 = vmatprep.subr.mxu0 0.0
    %1643 = vmatpush1.msra.mxu0 0.0
    %1644 = vmatprep.subr.mxu0 0.0
    %1645 = vmatpush1.msra.mxu0 0.0
    %1646 = vmatprep.subr.mxu0 0.0
    %1647 = vmatpush1.msra.mxu0 0.0
    %1648 = vmatprep.subr.mxu0 0.0
    %1649 = vmatpush1.msra.mxu0 0.0
    %1650 = vmatprep.subr.mxu0 0.0
    %1651 = vmatpush1.msra.mxu0 0.0
    %1652 = vmatprep.subr.mxu0 0.0
    %1653 = vmatpush1.msra.mxu0 0.0
    %1654 = vmatprep.subr.mxu0 0.0
    %1655 = vmatpush1.msra.mxu0 0.0
    %1656 = vmatprep.subr.mxu0 0.0
    %1657 = vmatpush1.msra.mxu0 0.0
    %1658 = vmatprep.subr.mxu0 0.0
    %1659 = vmatpush1.msra.mxu0 0.0
    %1660 = vmatprep.subr.mxu0 0.0
    %1661 = vmatpush1.msra.mxu0 0.0
    %1662 = vmatprep.subr.mxu0 0.0
    %1663 = vmatpush1.msra.mxu0 0.0
    %1664 = vmatprep.subr.mxu0 0.0
    %1665 = vmatpush1.msra.mxu0 0.0
    %1666 = vmatprep.subr.mxu0 0.0
    %1667 = vmatpush1.msra.mxu0 0.0
    %1668 = vmatprep.subr.mxu0 0.0
    %1669 = vmatpush1.msra.mxu0 0.0
    %1670 = vmatprep.mubr.f32.mxu0 0.0
    %1671 = vmatmul.mubr.f32.gmra.mrb[0].mxu0 %v962
    %v1672 = vpop.f32.mrb[0].mxu0
    %v1673 = vadd.f32 0.0, %v1672
    %v1674 = vpop.f32.mrb[0].mxu0
    %1675 = vmatprep.mubr.f32.mxu0 0.0
    %1676 = vmatmul.mubr.f32.gmra.mrb[0].mxu0 %v965
    %v1677 = vpop.f32.mrb[0].mxu0
    %v1678 = vadd.f32 0.0, %v1677
    %v1679 = vpop.f32.mrb[0].mxu0
    %1680 = vmatprep.mubr.f32.mxu0 0.0
    %1681 = vmatmul.mubr.f32.gmra.mrb[0].mxu0 %v968
    %v1682 = vpop.f32.mrb[0].mxu0
    %v1683 = vadd.f32 0.0, %v1682
    %v1684 = vpop.f32.mrb[0].mxu0
    %1685 = vmatprep.mubr.f32.mxu0 0.0
    %1686 = vmatmul.mubr.f32.gmra.mrb[0].mxu0 %v971
    %v1687 = vpop.f32.mrb[0].mxu0
    %v1688 = vadd.f32 0.0, %v1687
    %v1689 = vpop.f32.mrb[0].mxu0
    %1690 = vmatprep.mubr.f32.mxu0 0.0
    %1691 = vmatmul.mubr.f32.gmra.mrb[0].mxu0 %v974
    %v1692 = vpop.f32.mrb[0].mxu0
    %v1693 = vadd.f32 0.0, %v1692
    %v1694 = vpop.f32.mrb[0].mxu0
    %1695 = vmatprep.mubr.f32.mxu0 0.0
    %1696 = vmatmul.mubr.f32.gmra.mrb[0].mxu0 %v977
    %v1697 = vpop.f32.mrb[0].mxu0
    %v1698 = vadd.f32 0.0, %v1697
    %v1699 = vpop.f32.mrb[0].mxu0
    %1700 = vdwg.mxu0
    %v1701 = vadd.f32 %v1574, %v1673
    %v1702 = vadd.f32 %v1580, %v1678
    %v1703 = vadd.f32 %v1586, %v1683
    %v1704 = vadd.f32 %v1592, %v1688
    %v1705 = vadd.f32 %v1598, %v1693
    %v1706 = vadd.f32 %v1604, %v1698
    %v1707 = vadd.f32 %v1701, %v1465
    %v1708 = vadd.f32 %v1702, %v1468
    %v1709 = vadd.f32 %v1703, %v1473
    %v1710 = vadd.f32 %v1704, %v1476
    %v1711 = vadd.f32 %v1705, %v1481
    %v1712 = vadd.f32 %v1706, %v1484
    %vm1713 = vcmp.ge.f32.partialorder %v1707, 0.0
    %vm1714 = vcmp.ge.f32.partialorder %v1708, 0.0
    %vm1715 = vcmp.ge.f32.partialorder %v1709, 0.0
    %vm1716 = vcmp.ge.f32.partialorder %v1710, 0.0
    %vm1717 = vcmp.ge.f32.partialorder %v1711, 0.0
    %vm1718 = vcmp.ge.f32.partialorder %v1712, 0.0
    %v1719 = vmul.f32 %v1707, 0.2
    %v1720 = vmul.f32 %v1708, 0.2
    %v1721 = vmul.f32 %v1709, 0.2
    %v1722 = vmul.f32 %v1710, 0.2
    %v1723 = vmul.f32 %v1711, 0.2
    %v1724 = vmul.f32 %v1712, 0.2
    %v1725 = vsel %vm1713, %v1707, %v1719
    %v1726 = vsel %vm1714, %v1708, %v1720
    %v1727 = vsel %vm1715, %v1709, %v1721
    %v1728 = vsel %vm1716, %v1710, %v1722
    %v1729 = vsel %vm1717, %v1711, %v1723
    %v1730 = vsel %vm1718, %v1712, %v1724
    %vm1731 = vcmp.gt.f32.partialorder %v123, 0.0
    %v1732 = vsel %vm1731, 1, 0
    %v1733 = vlaneseq
    %v1734 = vshrl.u32 %v1733, 7
    %v1735 = vsub.s32 0, %v1734
    %v1736 = vrot.slane %v1732, %v1735
    %vm1737 = vcmp.eq.s32.totalorder %v1736, 1
    %v1738 = vsel %vm1737, %v1725, -1e+30
    %v1739 = vsel %vm1737, %v1726, -1e+30
    %v1740 = vsel %vm1737, %v1727, -1e+30
    %v1741 = vsel %vm1737, %v1728, -1e+30
    %v1742 = vsel %vm1737, %v1729, -1e+30
    %v1743 = vsel %vm1737, %v1730, -1e+30
    %1744 = vmax.xlane.f32.xlu0 %v1738
    %v1745 = vpop.xlane.xlu0 %1744
    %1746 = vmax.xlane.f32.xlu0 %v1739
    %v1747 = vpop.xlane.xlu0 %1746
    %1748 = vmax.xlane.f32.xlu0 %v1740
    %v1749 = vpop.xlane.xlu0 %1748
    %1750 = vmax.xlane.f32.xlu0 %v1741
    %v1751 = vpop.xlane.xlu0 %1750
    %1752 = vmax.xlane.f32.xlu0 %v1742
    %v1753 = vpop.xlane.xlu0 %1752
    %1754 = vmax.xlane.f32.xlu0 %v1743
    %v1755 = vpop.xlane.xlu0 %1754
    %vm1756 = vcmp.gt.f32.partialorder %v109, 0.0
    %vm1757 = vcmp.gt.f32.partialorder %v110, 0.0
    %vm1758 = vcmp.gt.f32.partialorder %v111, 0.0
    %vm1759 = vcmp.gt.f32.partialorder %v112, 0.0
    %vm1760 = vcmp.gt.f32.partialorder %v113, 0.0
    %vm1761 = vcmp.gt.f32.partialorder %v114, 0.0
    %v1762 = vsel %vm1756, %v1745, -1e+30
    %v1763 = vsel %vm1757, %v1747, -1e+30
    %v1764 = vsel %vm1758, %v1749, -1e+30
    %v1765 = vsel %vm1759, %v1751, -1e+30
    %v1766 = vsel %vm1760, %v1753, -1e+30
    %v1767 = vsel %vm1761, %v1755, -1e+30
    %v1768 = vsel %vm960, %v1762, -inf
    %v1769 = vsel %vm960, %v1763, -inf
    %v1770 = vsel %vm960, %v1764, -inf
    %v1771 = vsel %vm960, %v1765, -inf
    %v1772 = vsel %vm960, %v1766, -inf
    %v1773 = vmax.f32 %v1768, %v1772
    %v1774 = vsel %vm960, %v1767, -inf
    %v1775 = vmax.f32 %v1769, %v1774
    %v1776 = vmax.f32 %v1773, %v1775
    %v1777 = vmax.f32 %v1770, %v1771
    %v1778 = vmax.f32 %v1776, %v1777
    %v1779 = vrot.slane %v1778, 4
    %v1780 = vmax.f32 %v1778, %v1779
    %v1781 = vrot.slane %v1780, 2
    %v1782 = vmax.f32 %v1780, %v1781
    %v1783 = vrot.slane %v1782, 1
    %v1784 = vmax.f32 %v1782, %v1783
    %v1785 = vmul.f32 %v109, %v1784
    %v1786 = vmul.f32 %v110, %v1784
    %v1787 = vmul.f32 %v111, %v1784
    %v1788 = vmul.f32 %v112, %v1784
    %v1789 = vmul.f32 %v113, %v1784
    %v1790 = vmul.f32 %v114, %v1784
    %v1791 = vsel %vm960, %v1785, 0.0
    %1792 = vadd.xlane.f32.xlu0 %v1791
    %v1793 = vpop.xlane.xlu0 %1792
    %v1794 = vsel %vm960, %v1786, 0.0
    %1795 = vadd.xlane.f32.xlu0 %v1794
    %v1796 = vpop.xlane.xlu0 %1795
    %v1797 = vsel %vm960, %v1787, 0.0
    %1798 = vadd.xlane.f32.xlu0 %v1797
    %v1799 = vpop.xlane.xlu0 %1798
    %v1800 = vsel %vm960, %v1788, 0.0
    %1801 = vadd.xlane.f32.xlu0 %v1800
    %v1802 = vpop.xlane.xlu0 %1801
    %v1803 = vsel %vm960, %v1789, 0.0
    %1804 = vadd.xlane.f32.xlu0 %v1803
    %v1805 = vpop.xlane.xlu0 %1804
    %v1806 = vsel %vm960, %v1790, 0.0
    %1807 = vadd.xlane.f32.xlu0 %v1806
    %v1808 = vpop.xlane.xlu0 %1807
    %v1809 = vlaneseq
    %v1810 = vshrl.u32 %v1809, 7
    %v1811 = vsub.s32 0, %v1810
    %v1812 = vrot.slane %v123, %v1811
    %v1813 = vmul.f32 %v1793, %v1812
    %v1814 = vmul.f32 %v1796, %v1812
    %v1815 = vmul.f32 %v1799, %v1812
    %v1816 = vmul.f32 %v1802, %v1812
    %v1817 = vmul.f32 %v1805, %v1812
    %v1818 = vmul.f32 %v1808, %v1812
    %v1819 = vadd.f32 %v1813, 0.0
    %v1820 = vadd.f32 %v1814, 0.0
    %v1821 = vadd.f32 %v1815, 0.0
    %v1822 = vadd.f32 %v1816, 0.0
    %v1823 = vadd.f32 %v1817, 0.0
    %v1824 = vadd.f32 %v1818, 0.0
    %v1825 = vlaneseq
    %v1826 = vshrl.u32 %v1825, 7
    %v1827 = vsub.s32 1, %v1826
    %v1828 = vrot.slane %v1732, %v1827
    %vm1829 = vcmp.eq.s32.totalorder %v1828, 1
    %v1830 = vsel %vm1829, %v1725, -1e+30
    %v1831 = vsel %vm1829, %v1726, -1e+30
    %v1832 = vsel %vm1829, %v1727, -1e+30
    %v1833 = vsel %vm1829, %v1728, -1e+30
    %v1834 = vsel %vm1829, %v1729, -1e+30
    %v1835 = vsel %vm1829, %v1730, -1e+30
    %1836 = vmax.xlane.f32.xlu0 %v1830
    %v1837 = vpop.xlane.xlu0 %1836
    %1838 = vmax.xlane.f32.xlu0 %v1831
    %v1839 = vpop.xlane.xlu0 %1838
    %1840 = vmax.xlane.f32.xlu0 %v1832
    %v1841 = vpop.xlane.xlu0 %1840
    %1842 = vmax.xlane.f32.xlu0 %v1833
    %v1843 = vpop.xlane.xlu0 %1842
    %1844 = vmax.xlane.f32.xlu0 %v1834
    %v1845 = vpop.xlane.xlu0 %1844
    %1846 = vmax.xlane.f32.xlu0 %v1835
    %v1847 = vpop.xlane.xlu0 %1846
    %v1848 = vsel %vm1756, %v1837, -1e+30
    %v1849 = vsel %vm1757, %v1839, -1e+30
    %v1850 = vsel %vm1758, %v1841, -1e+30
    %v1851 = vsel %vm1759, %v1843, -1e+30
    %v1852 = vsel %vm1760, %v1845, -1e+30
    %v1853 = vsel %vm1761, %v1847, -1e+30
    %v1854 = vsel %vm960, %v1848, -inf
    %v1855 = vsel %vm960, %v1849, -inf
    %v1856 = vsel %vm960, %v1850, -inf
    %v1857 = vsel %vm960, %v1851, -inf
    %v1858 = vsel %vm960, %v1852, -inf
    %v1859 = vmax.f32 %v1854, %v1858
    %v1860 = vsel %vm960, %v1853, -inf
    %v1861 = vmax.f32 %v1855, %v1860
    %v1862 = vmax.f32 %v1859, %v1861
    %v1863 = vmax.f32 %v1856, %v1857
    %v1864 = vmax.f32 %v1862, %v1863
    %v1865 = vrot.slane %v1864, 4
    %v1866 = vmax.f32 %v1864, %v1865
    %v1867 = vrot.slane %v1866, 2
    %v1868 = vmax.f32 %v1866, %v1867
    %v1869 = vrot.slane %v1868, 1
    %v1870 = vmax.f32 %v1868, %v1869
    %v1871 = vmul.f32 %v109, %v1870
    %v1872 = vmul.f32 %v110, %v1870
    %v1873 = vmul.f32 %v111, %v1870
    %v1874 = vmul.f32 %v112, %v1870
    %v1875 = vmul.f32 %v113, %v1870
    %v1876 = vmul.f32 %v114, %v1870
    %v1877 = vsel %vm960, %v1871, 0.0
    %1878 = vadd.xlane.f32.xlu0 %v1877
    %v1879 = vpop.xlane.xlu0 %1878
    %v1880 = vsel %vm960, %v1872, 0.0
    %1881 = vadd.xlane.f32.xlu0 %v1880
    %v1882 = vpop.xlane.xlu0 %1881
    %v1883 = vsel %vm960, %v1873, 0.0
    %1884 = vadd.xlane.f32.xlu0 %v1883
    %v1885 = vpop.xlane.xlu0 %1884
    %v1886 = vsel %vm960, %v1874, 0.0
    %1887 = vadd.xlane.f32.xlu0 %v1886
    %v1888 = vpop.xlane.xlu0 %1887
    %v1889 = vsel %vm960, %v1875, 0.0
    %1890 = vadd.xlane.f32.xlu0 %v1889
    %v1891 = vpop.xlane.xlu0 %1890
    %v1892 = vsel %vm960, %v1876, 0.0
    %1893 = vadd.xlane.f32.xlu0 %v1892
    %v1894 = vpop.xlane.xlu0 %1893
    %v1895 = vlaneseq
    %v1896 = vshrl.u32 %v1895, 7
    %v1897 = vsub.s32 1, %v1896
    %v1898 = vrot.slane %v123, %v1897
    %v1899 = vmul.f32 %v1879, %v1898
    %v1900 = vmul.f32 %v1882, %v1898
    %v1901 = vmul.f32 %v1885, %v1898
    %v1902 = vmul.f32 %v1888, %v1898
    %v1903 = vmul.f32 %v1891, %v1898
    %v1904 = vmul.f32 %v1894, %v1898
    %v1905 = vadd.f32 %v1819, %v1899
    %v1906 = vadd.f32 %v1820, %v1900
    %v1907 = vadd.f32 %v1821, %v1901
    %v1908 = vadd.f32 %v1822, %v1902
    %v1909 = vadd.f32 %v1823, %v1903
    %v1910 = vadd.f32 %v1824, %v1904
    %v1911 = vsub.f32 %v1725, %v1905
    %v1912 = vsub.f32 %v1726, %v1906
    %v1913 = vsub.f32 %v1727, %v1907
    %v1914 = vsub.f32 %v1728, %v1908
    %v1915 = vsub.f32 %v1729, %v1909
    %v1916 = vsub.f32 %v1730, %v1910
    %v1917 = vmin.f32 %v1911, 0.0
    %v1918 = vmin.f32 %v1912, 0.0
    %v1919 = vmin.f32 %v1913, 0.0
    %v1920 = vmin.f32 %v1914, 0.0
    %v1921 = vmin.f32 %v1915, 0.0
    %v1922 = vmin.f32 %v1916, 0.0
    %v1923 = vmul.f32 %v1917, 1.442695
    %v1924 = vpow.pop %v1923
    %v1925 = vmul.f32 %v1918, 1.442695
    %v1926 = vpow.pop %v1925
    %v1927 = vmul.f32 %v1919, 1.442695
    %v1928 = vpow.pop %v1927
    %v1929 = vmul.f32 %v1920, 1.442695
    %v1930 = vpow.pop %v1929
    %v1931 = vmul.f32 %v1921, 1.442695
    %v1932 = vpow.pop %v1931
    %v1933 = vmul.f32 %v1922, 1.442695
    %v1934 = vpow.pop %v1933
    %1935 = vmatprep.subr.mxu0 0.0
    %1936 = vmatpush1.msra.mxu0 %v1924
    %1937 = vmatprep.subr.mxu0 0.0
    %1938 = vmatpush1.msra.mxu0 %v1926
    %1939 = vmatprep.subr.mxu0 0.0
    %1940 = vmatpush1.msra.mxu0 %v1928
    %1941 = vmatprep.subr.mxu0 0.0
    %1942 = vmatpush1.msra.mxu0 %v1930
    %1943 = vmatprep.subr.mxu0 0.0
    %1944 = vmatpush1.msra.mxu0 %v1932
    %1945 = vmatprep.subr.mxu0 0.0
    %1946 = vmatpush1.msra.mxu0 %v1934
    %1947 = vmatprep.subr.mxu0 0.0
    %1948 = vmatpush1.msra.mxu0 0.0
    %1949 = vmatprep.subr.mxu0 0.0
    %1950 = vmatpush1.msra.mxu0 0.0
    %1951 = vmatprep.subr.mxu0 0.0
    %1952 = vmatpush1.msra.mxu0 0.0
    %1953 = vmatprep.subr.mxu0 0.0
    %1954 = vmatpush1.msra.mxu0 0.0
    %1955 = vmatprep.subr.mxu0 0.0
    %1956 = vmatpush1.msra.mxu0 0.0
    %1957 = vmatprep.subr.mxu0 0.0
    %1958 = vmatpush1.msra.mxu0 0.0
    %1959 = vmatprep.subr.mxu0 0.0
    %1960 = vmatpush1.msra.mxu0 0.0
    %1961 = vmatprep.subr.mxu0 0.0
    %1962 = vmatpush1.msra.mxu0 0.0
    %1963 = vmatprep.subr.mxu0 0.0
    %1964 = vmatpush1.msra.mxu0 0.0
    %1965 = vmatprep.subr.mxu0 0.0
    %1966 = vmatpush1.msra.mxu0 0.0
    %1967 = vmatprep.subr.mxu0 0.0
    %1968 = vmatpush1.msra.mxu0 0.0
    %1969 = vmatprep.subr.mxu0 0.0
    %1970 = vmatpush1.msra.mxu0 0.0
    %1971 = vmatprep.subr.mxu0 0.0
    %1972 = vmatpush1.msra.mxu0 0.0
    %1973 = vmatprep.subr.mxu0 0.0
    %1974 = vmatpush1.msra.mxu0 0.0
    %1975 = vmatprep.subr.mxu0 0.0
    %1976 = vmatpush1.msra.mxu0 0.0
    %1977 = vmatprep.subr.mxu0 0.0
    %1978 = vmatpush1.msra.mxu0 0.0
    %1979 = vmatprep.subr.mxu0 0.0
    %1980 = vmatpush1.msra.mxu0 0.0
    %1981 = vmatprep.subr.mxu0 0.0
    %1982 = vmatpush1.msra.mxu0 0.0
    %1983 = vmatprep.subr.mxu0 0.0
    %1984 = vmatpush1.msra.mxu0 0.0
    %1985 = vmatprep.subr.mxu0 0.0
    %1986 = vmatpush1.msra.mxu0 0.0
    %1987 = vmatprep.subr.mxu0 0.0
    %1988 = vmatpush1.msra.mxu0 0.0
    %1989 = vmatprep.subr.mxu0 0.0
    %1990 = vmatpush1.msra.mxu0 0.0
    %1991 = vmatprep.subr.mxu0 0.0
    %1992 = vmatpush1.msra.mxu0 0.0
    %1993 = vmatprep.subr.mxu0 0.0
    %1994 = vmatpush1.msra.mxu0 0.0
    %1995 = vmatprep.subr.mxu0 0.0
    %1996 = vmatpush1.msra.mxu0 0.0
    %1997 = vmatprep.subr.mxu0 0.0
    %1998 = vmatpush1.msra.mxu0 0.0
    %1999 = vmatprep.mubr.f32.mxu0 0.0
    %2000 = vmatmul.mubr.f32.gmra.mrb[0].mxu0 %v868
    %v2001 = vpop.f32.mrb[0].mxu0
    %v2002 = vadd.f32 0.0, %v2001
    %v2003 = vpop.f32.mrb[0].mxu0
    %2004 = vmatprep.mubr.f32.mxu0 0.0
    %2005 = vmatmul.mubr.f32.gmra.mrb[0].mxu0 %v871
    %v2006 = vpop.f32.mrb[0].mxu0
    %v2007 = vadd.f32 0.0, %v2006
    %v2008 = vpop.f32.mrb[0].mxu0
    %2009 = vdwg.mxu0
    %v2010 = vmul.f32 %v1924, %v1572
    %v2011 = vmul.f32 %v1926, %v1578
    %v2012 = vmul.f32 %v1928, %v1584
    %v2013 = vmul.f32 %v1930, %v1590
    %v2014 = vmul.f32 %v1932, %v1596
    %v2015 = vmul.f32 %v1934, %v1602
    %2016 = vmatprep.subr.mxu0 0.0
    %2017 = vmatpush1.msra.mxu0 %v2010
    %2018 = vmatprep.subr.mxu0 0.0
    %2019 = vmatpush1.msra.mxu0 %v2011
    %2020 = vmatprep.subr.mxu0 0.0
    %2021 = vmatpush1.msra.mxu0 %v2012
    %2022 = vmatprep.subr.mxu0 0.0
    %2023 = vmatpush1.msra.mxu0 %v2013
    %2024 = vmatprep.subr.mxu0 0.0
    %2025 = vmatpush1.msra.mxu0 %v2014
    %2026 = vmatprep.subr.mxu0 0.0
    %2027 = vmatpush1.msra.mxu0 %v2015
    %2028 = vmatprep.subr.mxu0 0.0
    %2029 = vmatpush1.msra.mxu0 0.0
    %2030 = vmatprep.subr.mxu0 0.0
    %2031 = vmatpush1.msra.mxu0 0.0
    %2032 = vmatprep.subr.mxu0 0.0
    %2033 = vmatpush1.msra.mxu0 0.0
    %2034 = vmatprep.subr.mxu0 0.0
    %2035 = vmatpush1.msra.mxu0 0.0
    %2036 = vmatprep.subr.mxu0 0.0
    %2037 = vmatpush1.msra.mxu0 0.0
    %2038 = vmatprep.subr.mxu0 0.0
    %2039 = vmatpush1.msra.mxu0 0.0
    %2040 = vmatprep.subr.mxu0 0.0
    %2041 = vmatpush1.msra.mxu0 0.0
    %2042 = vmatprep.subr.mxu0 0.0
    %2043 = vmatpush1.msra.mxu0 0.0
    %2044 = vmatprep.subr.mxu0 0.0
    %2045 = vmatpush1.msra.mxu0 0.0
    %2046 = vmatprep.subr.mxu0 0.0
    %2047 = vmatpush1.msra.mxu0 0.0
    %2048 = vmatprep.subr.mxu0 0.0
    %2049 = vmatpush1.msra.mxu0 0.0
    %2050 = vmatprep.subr.mxu0 0.0
    %2051 = vmatpush1.msra.mxu0 0.0
    %2052 = vmatprep.subr.mxu0 0.0
    %2053 = vmatpush1.msra.mxu0 0.0
    %2054 = vmatprep.subr.mxu0 0.0
    %2055 = vmatpush1.msra.mxu0 0.0
    %2056 = vmatprep.subr.mxu0 0.0
    %2057 = vmatpush1.msra.mxu0 0.0
    %2058 = vmatprep.subr.mxu0 0.0
    %2059 = vmatpush1.msra.mxu0 0.0
    %2060 = vmatprep.subr.mxu0 0.0
    %2061 = vmatpush1.msra.mxu0 0.0
    %2062 = vmatprep.subr.mxu0 0.0
    %2063 = vmatpush1.msra.mxu0 0.0
    %2064 = vmatprep.subr.mxu0 0.0
    %2065 = vmatpush1.msra.mxu0 0.0
    %2066 = vmatprep.subr.mxu0 0.0
    %2067 = vmatpush1.msra.mxu0 0.0
    %2068 = vmatprep.subr.mxu0 0.0
    %2069 = vmatpush1.msra.mxu0 0.0
    %2070 = vmatprep.subr.mxu0 0.0
    %2071 = vmatpush1.msra.mxu0 0.0
    %2072 = vmatprep.subr.mxu0 0.0
    %2073 = vmatpush1.msra.mxu0 0.0
    %2074 = vmatprep.subr.mxu0 0.0
    %2075 = vmatpush1.msra.mxu0 0.0
    %2076 = vmatprep.subr.mxu0 0.0
    %2077 = vmatpush1.msra.mxu0 0.0
    %2078 = vmatprep.subr.mxu0 0.0
    %2079 = vmatpush1.msra.mxu0 0.0
    %2080 = vmatprep.mubr.f32.mxu0 0.0
    %2081 = vmatmul.mubr.f32.gmra.mrb[0].mxu0 %v868
    %v2082 = vpop.f32.mrb[0].mxu0
    %v2083 = vadd.f32 0.0, %v2082
    %v2084 = vpop.f32.mrb[0].mxu0
    %2085 = vmatprep.mubr.f32.mxu0 0.0
    %2086 = vmatmul.mubr.f32.gmra.mrb[0].mxu0 %v871
    %v2087 = vpop.f32.mrb[0].mxu0
    %v2088 = vadd.f32 0.0, %v2087
    %v2089 = vpop.f32.mrb[0].mxu0
    %2090 = vdwg.mxu0
    %v2091 = vrcp.pop %v2002
    %v2092 = vmul.f32 %v2083, %v2091
    %v2093 = vrcp.pop %v2007
    %v2094 = vmul.f32 %v2088, %v2093
    %v2095 = vld [vmem:[%s12] sm:$0x1]
    %v2097 = vlaneseq
    %v2098 = vshrl.u32 %v2097, 7
    %v2099 = vsub.s32 0, %v2098
    %v2100 = vrot.slane %v2095, %v2099
    %v2102 = vadd.f32 %v2092, %v2100
    %v2103 = vadd.f32 %v2094, %v2100
    %v2104 = vmax.f32 %v2102, 0.0
    %v2105 = vmax.f32 %v2103, 0.0
    %v2106 = vpack.c.bf16 %v2105, %v2104
    %s2107 = scalar_lea.vmem [#allocation8], 192
    %v2108 = vld [vmem:[%s2107] sm:$0xff]
    %v2109 = vld [vmem:[%s2107 + $0x8] sm:$0xf]
    %v2110 = vld [vmem:[%s2107 + $0xc] sm:$0xff]
    %v2111 = vld [vmem:[%s2107 + $0x14] sm:$0xf]
    %v2112 = vld [vmem:[%s2107 + $0x18] sm:$0xff]
    %v2113 = vld [vmem:[%s2107 + $0x20] sm:$0xf]
    %v2114 = vld [vmem:[%s2107 + $0x24] sm:$0xff]
    %v2115 = vld [vmem:[%s2107 + $0x2c] sm:$0xf]
    %v2116 = vld [vmem:[%s2107 + $0x30] sm:$0xff]
    %v2117 = vld [vmem:[%s2107 + $0x38] sm:$0xf]
    %v2118 = vld [vmem:[%s2107 + $0x3c] sm:$0xff]
    %v2119 = vld [vmem:[%s2107 + $0x44] sm:$0xf]
    %v2120 = vld [vmem:[%s2107 + $0x48] sm:$0xff]
    %v2121 = vld [vmem:[%s2107 + $0x50] sm:$0xf]
    %v2122 = vld [vmem:[%s2107 + $0x54] sm:$0xff]
    %v2123 = vld [vmem:[%s2107 + $0x5c] sm:$0xf]
    %v2124 = vld [vmem:[%s2107 + $0x60] sm:$0xff]
    %v2125 = vld [vmem:[%s2107 + $0x68] sm:$0xf]
    %v2126 = vld [vmem:[%s2107 + $0x6c] sm:$0xff]
    %v2127 = vld [vmem:[%s2107 + $0x74] sm:$0xf]
    %v2128 = vld [vmem:[%s2107 + $0x78] sm:$0xff]
    %v2129 = vld [vmem:[%s2107 + $0x80] sm:$0xf]
    %v2130 = vld [vmem:[%s2107 + $0x84] sm:$0xff]
    %v2131 = vld [vmem:[%s2107 + $0x8c] sm:$0xf]
    %v2132 = vld [vmem:[%s2107 + $0x90] sm:$0xff]
    %v2133 = vld [vmem:[%s2107 + $0x98] sm:$0xf]
    %v2134 = vld [vmem:[%s2107 + $0x9c] sm:$0xff]
    %v2135 = vld [vmem:[%s2107 + $0xa4] sm:$0xf]
    %v2136 = vld [vmem:[%s2107 + $0xa8] sm:$0xff]
    %v2137 = vld [vmem:[%s2107 + $0xb0] sm:$0xf]
    %v2138 = vld [vmem:[%s2107 + $0xb4] sm:$0xff]
    %v2139 = vld [vmem:[%s2107 + $0xbc] sm:$0xf]
    %v2172 = vunpack.c.l.b16 %v2108
    %v2173 = vunpack.c.h.b16 %v2108
    %v2174 = vunpack.c.l.b16 %v2109
    %v2175 = vunpack.c.l.b16 %v2110
    %v2176 = vunpack.c.h.b16 %v2110
    %v2177 = vunpack.c.l.b16 %v2111
    %v2178 = vunpack.c.l.b16 %v2112
    %v2179 = vunpack.c.h.b16 %v2112
    %v2180 = vunpack.c.l.b16 %v2113
    %v2181 = vunpack.c.l.b16 %v2114
    %v2182 = vunpack.c.h.b16 %v2114
    %v2183 = vunpack.c.l.b16 %v2115
    %v2184 = vunpack.c.l.b16 %v2116
    %v2185 = vunpack.c.h.b16 %v2116
    %v2186 = vunpack.c.l.b16 %v2117
    %v2187 = vunpack.c.l.b16 %v2118
    %v2188 = vunpack.c.h.b16 %v2118
    %v2189 = vunpack.c.l.b16 %v2119
    %v2190 = vunpack.c.l.b16 %v2120
    %v2191 = vunpack.c.h.b16 %v2120
    %v2192 = vunpack.c.l.b16 %v2121
    %v2193 = vunpack.c.l.b16 %v2122
    %v2194 = vunpack.c.h.b16 %v2122
    %v2195 = vunpack.c.l.b16 %v2123
    %v2196 = vunpack.c.l.b16 %v2124
    %v2197 = vunpack.c.h.b16 %v2124
    %v2198 = vunpack.c.l.b16 %v2125
    %v2199 = vunpack.c.l.b16 %v2126
    %v2200 = vunpack.c.h.b16 %v2126
    %v2201 = vunpack.c.l.b16 %v2127
    %v2202 = vunpack.c.l.b16 %v2128
    %v2203 = vunpack.c.h.b16 %v2128
    %v2204 = vunpack.c.l.b16 %v2129
    %v2205 = vunpack.c.l.b16 %v2130
    %v2206 = vunpack.c.h.b16 %v2130
    %v2207 = vunpack.c.l.b16 %v2131
    %v2208 = vunpack.c.l.b16 %v2132
    %v2209 = vunpack.c.h.b16 %v2132
    %v2210 = vunpack.c.l.b16 %v2133
    %v2211 = vunpack.c.l.b16 %v2134
    %v2212 = vunpack.c.h.b16 %v2134
    %v2213 = vunpack.c.l.b16 %v2135
    %v2214 = vunpack.c.l.b16 %v2136
    %v2215 = vunpack.c.h.b16 %v2136
    %v2216 = vunpack.c.l.b16 %v2137
    %v2217 = vunpack.c.l.b16 %v2138
    %v2218 = vunpack.c.h.b16 %v2138
    %v2219 = vunpack.c.l.b16 %v2139
    %v2220 = vpack.c.b16 %v2175, %v2172
    %v2221 = vpack.c.b16 %v2176, %v2173
    %v2222 = vpack.c.b16 %v2177, %v2174
    %v2223 = vpack.c.b16 %v2181, %v2178
    %v2224 = vpack.c.b16 %v2182, %v2179
    %v2225 = vpack.c.b16 %v2183, %v2180
    %v2226 = vpack.c.b16 %v2187, %v2184
    %v2227 = vpack.c.b16 %v2188, %v2185
    %v2228 = vpack.c.b16 %v2189, %v2186
    %v2229 = vpack.c.b16 %v2193, %v2190
    %v2230 = vpack.c.b16 %v2194, %v2191
    %v2231 = vpack.c.b16 %v2195, %v2192
    %v2232 = vpack.c.b16 %v2199, %v2196
    %v2233 = vpack.c.b16 %v2200, %v2197
    %v2234 = vpack.c.b16 %v2201, %v2198
    %v2235 = vpack.c.b16 %v2205, %v2202
    %v2236 = vpack.c.b16 %v2206, %v2203
    %v2237 = vpack.c.b16 %v2207, %v2204
    %v2238 = vpack.c.b16 %v2211, %v2208
    %v2239 = vpack.c.b16 %v2212, %v2209
    %v2240 = vpack.c.b16 %v2213, %v2210
    %v2241 = vpack.c.b16 %v2217, %v2214
    %v2242 = vpack.c.b16 %v2218, %v2215
    %v2243 = vpack.c.b16 %v2219, %v2216
    %2268 = vmatprep.subr.bf16.mxu0 %v2221
    %2269 = vmatpush1.bf16.msra.mxu0 %v2220
    %2270 = vmatprep.subr.bf16.mxu0 %v2224
    %2271 = vmatpush1.bf16.msra.mxu0 %v2223
    %2272 = vmatprep.subr.bf16.mxu0 %v2227
    %2273 = vmatpush1.bf16.msra.mxu0 %v2226
    %2274 = vmatprep.subr.bf16.mxu0 %v2230
    %2275 = vmatpush1.bf16.msra.mxu0 %v2229
    %2276 = vmatprep.subr.bf16.mxu0 %v2233
    %2277 = vmatpush1.bf16.msra.mxu0 %v2232
    %2278 = vmatprep.subr.bf16.mxu0 %v2236
    %2279 = vmatpush1.bf16.msra.mxu0 %v2235
    %2280 = vmatprep.subr.bf16.mxu0 %v2239
    %2281 = vmatpush1.bf16.msra.mxu0 %v2238
    %2282 = vmatprep.subr.bf16.mxu0 %v2242
    %2283 = vmatpush1.bf16.msra.mxu0 %v2241
    %2284 = vmatprep.subr.bf16.mxu0 0
    %2285 = vmatpush1.bf16.msra.mxu0 0
    %2286 = vmatprep.subr.bf16.mxu0 0
    %2287 = vmatpush1.bf16.msra.mxu0 0
    %2288 = vmatprep.subr.bf16.mxu0 0
    %2289 = vmatpush1.bf16.msra.mxu0 0
    %2290 = vmatprep.subr.bf16.mxu0 0
    %2291 = vmatpush1.bf16.msra.mxu0 0
    %2292 = vmatprep.subr.bf16.mxu0 0
    %2293 = vmatpush1.bf16.msra.mxu0 0
    %2294 = vmatprep.subr.bf16.mxu0 0
    %2295 = vmatpush1.bf16.msra.mxu0 0
    %2296 = vmatprep.subr.bf16.mxu0 0
    %2297 = vmatpush1.bf16.msra.mxu0 0
    %2298 = vmatprep.subr.bf16.mxu0 0
    %2299 = vmatpush1.bf16.msra.mxu0 0
    %2300 = vmatprep.mubr.bf16.mxu0 0
    %2301 = vmatmul.mubr.bf16.gmra.mrb[0].mxu0 %v2106
    %v2302 = vpop.f32.mrb[0].mxu0
    %v2303 = vadd.f32 0.0, %v2302
    %v2304 = vpop.f32.mrb[0].mxu0
    %v2305 = vadd.f32 0.0, %v2304
    %v2306 = vpop.f32.mrb[0].mxu0
    %v2307 = vadd.f32 0.0, %v2306
    %v2308 = vpop.f32.mrb[0].mxu0
    %v2309 = vadd.f32 0.0, %v2308
    %2310 = vdwg.mxu0
    %2311 = vmatprep.subr.bf16.mxu0 0
    %2312 = vmatpush1.bf16.msra.mxu0 %v2222
    %2313 = vmatprep.subr.bf16.mxu0 0
    %2314 = vmatpush1.bf16.msra.mxu0 %v2225
    %2315 = vmatprep.subr.bf16.mxu0 0
    %2316 = vmatpush1.bf16.msra.mxu0 %v2228
    %2317 = vmatprep.subr.bf16.mxu0 0
    %2318 = vmatpush1.bf16.msra.mxu0 %v2231
    %2319 = vmatprep.subr.bf16.mxu0 0
    %2320 = vmatpush1.bf16.msra.mxu0 %v2234
    %2321 = vmatprep.subr.bf16.mxu0 0
    %2322 = vmatpush1.bf16.msra.mxu0 %v2237
    %2323 = vmatprep.subr.bf16.mxu0 0
    %2324 = vmatpush1.bf16.msra.mxu0 %v2240
    %2325 = vmatprep.subr.bf16.mxu0 0
    %2326 = vmatpush1.bf16.msra.mxu0 %v2243
    %2327 = vmatprep.subr.bf16.mxu0 0
    %2328 = vmatpush1.bf16.msra.mxu0 0
    %2329 = vmatprep.subr.bf16.mxu0 0
    %2330 = vmatpush1.bf16.msra.mxu0 0
    %2331 = vmatprep.subr.bf16.mxu0 0
    %2332 = vmatpush1.bf16.msra.mxu0 0
    %2333 = vmatprep.subr.bf16.mxu0 0
    %2334 = vmatpush1.bf16.msra.mxu0 0
    %2335 = vmatprep.subr.bf16.mxu0 0
    %2336 = vmatpush1.bf16.msra.mxu0 0
    %2337 = vmatprep.subr.bf16.mxu0 0
    %2338 = vmatpush1.bf16.msra.mxu0 0
    %2339 = vmatprep.subr.bf16.mxu0 0
    %2340 = vmatpush1.bf16.msra.mxu0 0
    %2341 = vmatprep.subr.bf16.mxu0 0
    %2342 = vmatpush1.bf16.msra.mxu0 0
    %2343 = vmatprep.mubr.bf16.mxu0 0
    %2344 = vmatmul.mubr.bf16.gmra.mrb[0].mxu0 %v2106
    %v2345 = vpop.f32.mrb[0].mxu0
    %v2346 = vadd.f32 0.0, %v2345
    %v2347 = vpop.f32.mrb[0].mxu0
    %v2348 = vpop.f32.mrb[0].mxu0
    %v2349 = vadd.f32 0.0, %v2348
    %v2350 = vpop.f32.mrb[0].mxu0
    %2351 = vdwg.mxu0
    %s2352 = scalar_lea.vmem %s11, 64
    %v2353 = vld [vmem:[%s2352] sm:$0xf]
    %v2354 = vld [vmem:[%s2352 + $0x4] sm:$0xf]
    %v2355 = vld [vmem:[%s2352 + $0x8] sm:$0xf]
    %v2356 = vld [vmem:[%s2352 + $0xc] sm:$0xf]
    %v2357 = vld [vmem:[%s2352 + $0x10] sm:$0xf]
    %v2358 = vld [vmem:[%s2352 + $0x14] sm:$0xf]
    %v2359 = vld [vmem:[%s2352 + $0x18] sm:$0xf]
    %v2360 = vld [vmem:[%s2352 + $0x1c] sm:$0xf]
    %v2361 = vld [vmem:[%s2352 + $0x20] sm:$0xf]
    %v2362 = vld [vmem:[%s2352 + $0x24] sm:$0xf]
    %v2363 = vld [vmem:[%s2352 + $0x28] sm:$0xf]
    %v2364 = vld [vmem:[%s2352 + $0x2c] sm:$0xf]
    %v2365 = vld [vmem:[%s2352 + $0x30] sm:$0xf]
    %v2366 = vld [vmem:[%s2352 + $0x34] sm:$0xf]
    %v2367 = vld [vmem:[%s2352 + $0x38] sm:$0xf]
    %v2368 = vld [vmem:[%s2352 + $0x3c] sm:$0xf]
    %v2385 = vunpack.c.l.b16 %v2353
    %v2386 = vunpack.c.l.b16 %v2354
    %v2387 = vunpack.c.l.b16 %v2355
    %v2388 = vunpack.c.l.b16 %v2356
    %v2389 = vunpack.c.l.b16 %v2357
    %v2390 = vunpack.c.l.b16 %v2358
    %v2391 = vunpack.c.l.b16 %v2359
    %v2392 = vunpack.c.l.b16 %v2360
    %v2393 = vunpack.c.l.b16 %v2361
    %v2394 = vunpack.c.l.b16 %v2362
    %v2395 = vunpack.c.l.b16 %v2363
    %v2396 = vunpack.c.l.b16 %v2364
    %v2397 = vunpack.c.l.b16 %v2365
    %v2398 = vunpack.c.l.b16 %v2366
    %v2399 = vunpack.c.l.b16 %v2367
    %v2400 = vunpack.c.l.b16 %v2368
    %v2401 = vpack.c.b16 %v2386, %v2385
    %v2402 = vpack.c.b16 %v2388, %v2387
    %v2403 = vpack.c.b16 %v2390, %v2389
    %v2404 = vpack.c.b16 %v2392, %v2391
    %v2405 = vpack.c.b16 %v2394, %v2393
    %v2406 = vpack.c.b16 %v2396, %v2395
    %v2407 = vpack.c.b16 %v2398, %v2397
    %v2408 = vpack.c.b16 %v2400, %v2399
    %2417 = vmatprep.subr.bf16.mxu0 0
    %2418 = vmatpush1.bf16.msra.mxu0 %v2401
    %2419 = vmatprep.subr.bf16.mxu0 0
    %2420 = vmatpush1.bf16.msra.mxu0 %v2402
    %2421 = vmatprep.subr.bf16.mxu0 0
    %2422 = vmatpush1.bf16.msra.mxu0 %v2403
    %2423 = vmatprep.subr.bf16.mxu0 0
    %2424 = vmatpush1.bf16.msra.mxu0 %v2404
    %2425 = vmatprep.subr.bf16.mxu0 0
    %2426 = vmatpush1.bf16.msra.mxu0 %v2405
    %2427 = vmatprep.subr.bf16.mxu0 0
    %2428 = vmatpush1.bf16.msra.mxu0 %v2406
    %2429 = vmatprep.subr.bf16.mxu0 0
    %2430 = vmatpush1.bf16.msra.mxu0 %v2407
    %2431 = vmatprep.subr.bf16.mxu0 0
    %2432 = vmatpush1.bf16.msra.mxu0 %v2408
    %2433 = vmatprep.subr.bf16.mxu0 0
    %2434 = vmatpush1.bf16.msra.mxu0 0
    %2435 = vmatprep.subr.bf16.mxu0 0
    %2436 = vmatpush1.bf16.msra.mxu0 0
    %2437 = vmatprep.subr.bf16.mxu0 0
    %2438 = vmatpush1.bf16.msra.mxu0 0
    %2439 = vmatprep.subr.bf16.mxu0 0
    %2440 = vmatpush1.bf16.msra.mxu0 0
    %2441 = vmatprep.subr.bf16.mxu0 0
    %2442 = vmatpush1.bf16.msra.mxu0 0
    %2443 = vmatprep.subr.bf16.mxu0 0
    %2444 = vmatpush1.bf16.msra.mxu0 0
    %2445 = vmatprep.subr.bf16.mxu0 0
    %2446 = vmatpush1.bf16.msra.mxu0 0
    %2447 = vmatprep.subr.bf16.mxu0 0
    %2448 = vmatpush1.bf16.msra.mxu0 0
    %2449 = vmatprep.mubr.bf16.mxu0 0
    %2450 = vmatmul.mubr.bf16.gmra.mrb[0].mxu0 %v1116
    %v2451 = vpop.f32.mrb[0].mxu0
    %v2452 = vadd.f32 0.0, %v2451
    %v2453 = vpop.f32.mrb[0].mxu0
    %v2454 = vpop.f32.mrb[0].mxu0
    %v2455 = vadd.f32 0.0, %v2454
    %v2456 = vpop.f32.mrb[0].mxu0
    %2457 = vmatprep.mubr.bf16.mxu0 0
    %2458 = vmatmul.mubr.bf16.gmra.mrb[0].mxu0 %v1117
    %v2459 = vpop.f32.mrb[0].mxu0
    %v2460 = vadd.f32 0.0, %v2459
    %v2461 = vpop.f32.mrb[0].mxu0
    %v2462 = vpop.f32.mrb[0].mxu0
    %v2463 = vadd.f32 0.0, %v2462
    %v2464 = vpop.f32.mrb[0].mxu0
    %2465 = vmatprep.mubr.bf16.mxu0 0
    %2466 = vmatmul.mubr.bf16.gmra.mrb[0].mxu0 %v1118
    %v2467 = vpop.f32.mrb[0].mxu0
    %v2468 = vadd.f32 0.0, %v2467
    %v2469 = vpop.f32.mrb[0].mxu0
    %v2470 = vpop.f32.mrb[0].mxu0
    %v2471 = vadd.f32 0.0, %v2470
    %v2472 = vpop.f32.mrb[0].mxu0
    %2473 = vdwg.mxu0
    %2474 = vmatprep.subr.mxu0 %v2305
    %2475 = vmatpush1.msra.mxu0 %v2303
    %2476 = vmatprep.subr.mxu0 %v2309
    %2477 = vmatpush1.msra.mxu0 %v2307
    %2478 = vmatprep.subr.mxu0 0.0
    %2479 = vmatpush1.msra.mxu0 0.0
    %2480 = vmatprep.subr.mxu0 0.0
    %2481 = vmatpush1.msra.mxu0 0.0
    %2482 = vmatprep.subr.mxu0 0.0
    %2483 = vmatpush1.msra.mxu0 0.0
    %2484 = vmatprep.subr.mxu0 0.0
    %2485 = vmatpush1.msra.mxu0 0.0
    %2486 = vmatprep.subr.mxu0 0.0
    %2487 = vmatpush1.msra.mxu0 0.0
    %2488 = vmatprep.subr.mxu0 0.0
    %2489 = vmatpush1.msra.mxu0 0.0
    %2490 = vmatprep.subr.mxu0 0.0
    %2491 = vmatpush1.msra.mxu0 0.0
    %2492 = vmatprep.subr.mxu0 0.0
    %2493 = vmatpush1.msra.mxu0 0.0
    %2494 = vmatprep.subr.mxu0 0.0
    %2495 = vmatpush1.msra.mxu0 0.0
    %2496 = vmatprep.subr.mxu0 0.0
    %2497 = vmatpush1.msra.mxu0 0.0
    %2498 = vmatprep.subr.mxu0 0.0
    %2499 = vmatpush1.msra.mxu0 0.0
    %2500 = vmatprep.subr.mxu0 0.0
    %2501 = vmatpush1.msra.mxu0 0.0
    %2502 = vmatprep.subr.mxu0 0.0
    %2503 = vmatpush1.msra.mxu0 0.0
    %2504 = vmatprep.subr.mxu0 0.0
    %2505 = vmatpush1.msra.mxu0 0.0
    %2506 = vmatprep.subr.mxu0 0.0
    %2507 = vmatpush1.msra.mxu0 0.0
    %2508 = vmatprep.subr.mxu0 0.0
    %2509 = vmatpush1.msra.mxu0 0.0
    %2510 = vmatprep.subr.mxu0 0.0
    %2511 = vmatpush1.msra.mxu0 0.0
    %2512 = vmatprep.subr.mxu0 0.0
    %2513 = vmatpush1.msra.mxu0 0.0
    %2514 = vmatprep.subr.mxu0 0.0
    %2515 = vmatpush1.msra.mxu0 0.0
    %2516 = vmatprep.subr.mxu0 0.0
    %2517 = vmatpush1.msra.mxu0 0.0
    %2518 = vmatprep.subr.mxu0 0.0
    %2519 = vmatpush1.msra.mxu0 0.0
    %2520 = vmatprep.subr.mxu0 0.0
    %2521 = vmatpush1.msra.mxu0 0.0
    %2522 = vmatprep.subr.mxu0 0.0
    %2523 = vmatpush1.msra.mxu0 0.0
    %2524 = vmatprep.subr.mxu0 0.0
    %2525 = vmatpush1.msra.mxu0 0.0
    %2526 = vmatprep.subr.mxu0 0.0
    %2527 = vmatpush1.msra.mxu0 0.0
    %2528 = vmatprep.subr.mxu0 0.0
    %2529 = vmatpush1.msra.mxu0 0.0
    %2530 = vmatprep.subr.mxu0 0.0
    %2531 = vmatpush1.msra.mxu0 0.0
    %2532 = vmatprep.subr.mxu0 0.0
    %2533 = vmatpush1.msra.mxu0 0.0
    %2534 = vmatprep.subr.mxu0 0.0
    %2535 = vmatpush1.msra.mxu0 0.0
    %2536 = vmatprep.subr.mxu0 0.0
    %2537 = vmatpush1.msra.mxu0 0.0
    %2538 = vmatprep.mubr.f32.mxu0 0.0
    %2539 = vmatmul.mubr.f32.gmra.mrb[0].mxu0 %v1488
    %v2540 = vpop.f32.mrb[0].mxu0
    %v2541 = vadd.f32 0.0, %v2540
    %v2542 = vpop.f32.mrb[0].mxu0
    %v2543 = vadd.f32 0.0, %v2542
    %2544 = vmatprep.mubr.f32.mxu0 0.0
    %2545 = vmatmul.mubr.f32.gmra.mrb[0].mxu0 %v1491
    %v2546 = vpop.f32.mrb[0].mxu0
    %v2547 = vadd.f32 0.0, %v2546
    %v2548 = vpop.f32.mrb[0].mxu0
    %v2549 = vadd.f32 0.0, %v2548
    %2550 = vmatprep.mubr.f32.mxu0 0.0
    %2551 = vmatmul.mubr.f32.gmra.mrb[0].mxu0 %v1494
    %v2552 = vpop.f32.mrb[0].mxu0
    %v2553 = vadd.f32 0.0, %v2552
    %v2554 = vpop.f32.mrb[0].mxu0
    %v2555 = vadd.f32 0.0, %v2554
    %2556 = vmatprep.mubr.f32.mxu0 0.0
    %2557 = vmatmul.mubr.f32.gmra.mrb[0].mxu0 %v1497
    %v2558 = vpop.f32.mrb[0].mxu0
    %v2559 = vadd.f32 0.0, %v2558
    %v2560 = vpop.f32.mrb[0].mxu0
    %v2561 = vadd.f32 0.0, %v2560
    %2562 = vmatprep.mubr.f32.mxu0 0.0
    %2563 = vmatmul.mubr.f32.gmra.mrb[0].mxu0 %v1500
    %v2564 = vpop.f32.mrb[0].mxu0
    %v2565 = vadd.f32 0.0, %v2564
    %v2566 = vpop.f32.mrb[0].mxu0
    %v2567 = vadd.f32 0.0, %v2566
    %2568 = vmatprep.mubr.f32.mxu0 0.0
    %2569 = vmatmul.mubr.f32.gmra.mrb[0].mxu0 %v1503
    %v2570 = vpop.f32.mrb[0].mxu0
    %v2571 = vadd.f32 0.0, %v2570
    %v2572 = vpop.f32.mrb[0].mxu0
    %v2573 = vadd.f32 0.0, %v2572
    %2574 = vdwg.mxu0
    %2575 = vmatprep.subr.mxu0 0.0
    %2576 = vmatpush1.msra.mxu0 %v2346
    %2577 = vmatprep.subr.mxu0 0.0
    %2578 = vmatpush1.msra.mxu0 %v2349
    %2579 = vmatprep.subr.mxu0 0.0
    %2580 = vmatpush1.msra.mxu0 0.0
    %2581 = vmatprep.subr.mxu0 0.0
    %2582 = vmatpush1.msra.mxu0 0.0
    %2583 = vmatprep.subr.mxu0 0.0
    %2584 = vmatpush1.msra.mxu0 0.0
    %2585 = vmatprep.subr.mxu0 0.0
    %2586 = vmatpush1.msra.mxu0 0.0
    %2587 = vmatprep.subr.mxu0 0.0
    %2588 = vmatpush1.msra.mxu0 0.0
    %2589 = vmatprep.subr.mxu0 0.0
    %2590 = vmatpush1.msra.mxu0 0.0
    %2591 = vmatprep.subr.mxu0 0.0
    %2592 = vmatpush1.msra.mxu0 0.0
    %2593 = vmatprep.subr.mxu0 0.0
    %2594 = vmatpush1.msra.mxu0 0.0
    %2595 = vmatprep.subr.mxu0 0.0
    %2596 = vmatpush1.msra.mxu0 0.0
    %2597 = vmatprep.subr.mxu0 0.0
    %2598 = vmatpush1.msra.mxu0 0.0
    %2599 = vmatprep.subr.mxu0 0.0
    %2600 = vmatpush1.msra.mxu0 0.0
    %2601 = vmatprep.subr.mxu0 0.0
    %2602 = vmatpush1.msra.mxu0 0.0
    %2603 = vmatprep.subr.mxu0 0.0
    %2604 = vmatpush1.msra.mxu0 0.0
    %2605 = vmatprep.subr.mxu0 0.0
    %2606 = vmatpush1.msra.mxu0 0.0
    %2607 = vmatprep.subr.mxu0 0.0
    %2608 = vmatpush1.msra.mxu0 0.0
    %2609 = vmatprep.subr.mxu0 0.0
    %2610 = vmatpush1.msra.mxu0 0.0
    %2611 = vmatprep.subr.mxu0 0.0
    %2612 = vmatpush1.msra.mxu0 0.0
    %2613 = vmatprep.subr.mxu0 0.0
    %2614 = vmatpush1.msra.mxu0 0.0
    %2615 = vmatprep.subr.mxu0 0.0
    %2616 = vmatpush1.msra.mxu0 0.0
    %2617 = vmatprep.subr.mxu0 0.0
    %2618 = vmatpush1.msra.mxu0 0.0
    %2619 = vmatprep.subr.mxu0 0.0
    %2620 = vmatpush1.msra.mxu0 0.0
    %2621 = vmatprep.subr.mxu0 0.0
    %2622 = vmatpush1.msra.mxu0 0.0
    %2623 = vmatprep.subr.mxu0 0.0
    %2624 = vmatpush1.msra.mxu0 0.0
    %2625 = vmatprep.subr.mxu0 0.0
    %2626 = vmatpush1.msra.mxu0 0.0
    %2627 = vmatprep.subr.mxu0 0.0
    %2628 = vmatpush1.msra.mxu0 0.0
    %2629 = vmatprep.subr.mxu0 0.0
    %2630 = vmatpush1.msra.mxu0 0.0
    %2631 = vmatprep.subr.mxu0 0.0
    %2632 = vmatpush1.msra.mxu0 0.0
    %2633 = vmatprep.subr.mxu0 0.0
    %2634 = vmatpush1.msra.mxu0 0.0
    %2635 = vmatprep.subr.mxu0 0.0
    %2636 = vmatpush1.msra.mxu0 0.0
    %2637 = vmatprep.subr.mxu0 0.0
    %2638 = vmatpush1.msra.mxu0 0.0
    %2639 = vmatprep.mubr.f32.mxu0 0.0
    %2640 = vmatmul.mubr.f32.gmra.mrb[0].mxu0 %v962
    %v2641 = vpop.f32.mrb[0].mxu0
    %v2642 = vadd.f32 0.0, %v2641
    %v2643 = vpop.f32.mrb[0].mxu0
    %2644 = vmatprep.mubr.f32.mxu0 0.0
    %2645 = vmatmul.mubr.f32.gmra.mrb[0].mxu0 %v965
    %v2646 = vpop.f32.mrb[0].mxu0
    %v2647 = vadd.f32 0.0, %v2646
    %v2648 = vpop.f32.mrb[0].mxu0
    %2649 = vmatprep.mubr.f32.mxu0 0.0
    %2650 = vmatmul.mubr.f32.gmra.mrb[0].mxu0 %v968
    %v2651 = vpop.f32.mrb[0].mxu0
    %v2652 = vadd.f32 0.0, %v2651
    %v2653 = vpop.f32.mrb[0].mxu0
    %2654 = vmatprep.mubr.f32.mxu0 0.0
    %2655 = vmatmul.mubr.f32.gmra.mrb[0].mxu0 %v971
    %v2656 = vpop.f32.mrb[0].mxu0
    %v2657 = vadd.f32 0.0, %v2656
    %v2658 = vpop.f32.mrb[0].mxu0
    %2659 = vmatprep.mubr.f32.mxu0 0.0
    %2660 = vmatmul.mubr.f32.gmra.mrb[0].mxu0 %v974
    %v2661 = vpop.f32.mrb[0].mxu0
    %v2662 = vadd.f32 0.0, %v2661
    %v2663 = vpop.f32.mrb[0].mxu0
    %2664 = vmatprep.mubr.f32.mxu0 0.0
    %2665 = vmatmul.mubr.f32.gmra.mrb[0].mxu0 %v977
    %v2666 = vpop.f32.mrb[0].mxu0
    %v2667 = vadd.f32 0.0, %v2666
    %v2668 = vpop.f32.mrb[0].mxu0
    %2669 = vdwg.mxu0
    %v2670 = vadd.f32 %v2543, %v2642
    %v2671 = vadd.f32 %v2549, %v2647
    %v2672 = vadd.f32 %v2555, %v2652
    %v2673 = vadd.f32 %v2561, %v2657
    %v2674 = vadd.f32 %v2567, %v2662
    %v2675 = vadd.f32 %v2573, %v2667
    %v2676 = vadd.f32 %v2670, %v2452
    %v2677 = vadd.f32 %v2671, %v2455
    %v2678 = vadd.f32 %v2672, %v2460
    %v2679 = vadd.f32 %v2673, %v2463
    %v2680 = vadd.f32 %v2674, %v2468
    %v2681 = vadd.f32 %v2675, %v2471
    %vm2682 = vcmp.ge.f32.partialorder %v2676, 0.0
    %vm2683 = vcmp.ge.f32.partialorder %v2677, 0.0
    %vm2684 = vcmp.ge.f32.partialorder %v2678, 0.0
    %vm2685 = vcmp.ge.f32.partialorder %v2679, 0.0
    %vm2686 = vcmp.ge.f32.partialorder %v2680, 0.0
    %vm2687 = vcmp.ge.f32.partialorder %v2681, 0.0
    %v2688 = vmul.f32 %v2676, 0.2
    %v2689 = vmul.f32 %v2677, 0.2
    %v2690 = vmul.f32 %v2678, 0.2
    %v2691 = vmul.f32 %v2679, 0.2
    %v2692 = vmul.f32 %v2680, 0.2
    %v2693 = vmul.f32 %v2681, 0.2
    %v2694 = vsel %vm2682, %v2676, %v2688
    %v2695 = vsel %vm2683, %v2677, %v2689
    %v2696 = vsel %vm2684, %v2678, %v2690
    %v2697 = vsel %vm2685, %v2679, %v2691
    %v2698 = vsel %vm2686, %v2680, %v2692
    %v2699 = vsel %vm2687, %v2681, %v2693
    %v2700 = vsel %vm1737, %v2694, -1e+30
    %v2701 = vsel %vm1737, %v2695, -1e+30
    %v2702 = vsel %vm1737, %v2696, -1e+30
    %v2703 = vsel %vm1737, %v2697, -1e+30
    %v2704 = vsel %vm1737, %v2698, -1e+30
    %v2705 = vsel %vm1737, %v2699, -1e+30
    %2706 = vmax.xlane.f32.xlu0 %v2700
    %v2707 = vpop.xlane.xlu0 %2706
    %2708 = vmax.xlane.f32.xlu0 %v2701
    %v2709 = vpop.xlane.xlu0 %2708
    %2710 = vmax.xlane.f32.xlu0 %v2702
    %v2711 = vpop.xlane.xlu0 %2710
    %2712 = vmax.xlane.f32.xlu0 %v2703
    %v2713 = vpop.xlane.xlu0 %2712
    %2714 = vmax.xlane.f32.xlu0 %v2704
    %v2715 = vpop.xlane.xlu0 %2714
    %2716 = vmax.xlane.f32.xlu0 %v2705
    %v2717 = vpop.xlane.xlu0 %2716
    %v2718 = vsel %vm1756, %v2707, -1e+30
    %v2719 = vsel %vm1757, %v2709, -1e+30
    %v2720 = vsel %vm1758, %v2711, -1e+30
    %v2721 = vsel %vm1759, %v2713, -1e+30
    %v2722 = vsel %vm1760, %v2715, -1e+30
    %v2723 = vsel %vm1761, %v2717, -1e+30
    %v2724 = vsel %vm960, %v2718, -inf
    %v2725 = vsel %vm960, %v2719, -inf
    %v2726 = vsel %vm960, %v2720, -inf
    %v2727 = vsel %vm960, %v2721, -inf
    %v2728 = vsel %vm960, %v2722, -inf
    %v2729 = vmax.f32 %v2724, %v2728
    %v2730 = vsel %vm960, %v2723, -inf
    %v2731 = vmax.f32 %v2725, %v2730
    %v2732 = vmax.f32 %v2729, %v2731
    %v2733 = vmax.f32 %v2726, %v2727
    %v2734 = vmax.f32 %v2732, %v2733
    %v2735 = vrot.slane %v2734, 4
    %v2736 = vmax.f32 %v2734, %v2735
    %v2737 = vrot.slane %v2736, 2
    %v2738 = vmax.f32 %v2736, %v2737
    %v2739 = vrot.slane %v2738, 1
    %v2740 = vmax.f32 %v2738, %v2739
    %v2741 = vmul.f32 %v109, %v2740
    %v2742 = vmul.f32 %v110, %v2740
    %v2743 = vmul.f32 %v111, %v2740
    %v2744 = vmul.f32 %v112, %v2740
    %v2745 = vmul.f32 %v113, %v2740
    %v2746 = vmul.f32 %v114, %v2740
    %v2747 = vsel %vm960, %v2741, 0.0
    %2748 = vadd.xlane.f32.xlu0 %v2747
    %v2749 = vpop.xlane.xlu0 %2748
    %v2750 = vsel %vm960, %v2742, 0.0
    %2751 = vadd.xlane.f32.xlu0 %v2750
    %v2752 = vpop.xlane.xlu0 %2751
    %v2753 = vsel %vm960, %v2743, 0.0
    %2754 = vadd.xlane.f32.xlu0 %v2753
    %v2755 = vpop.xlane.xlu0 %2754
    %v2756 = vsel %vm960, %v2744, 0.0
    %2757 = vadd.xlane.f32.xlu0 %v2756
    %v2758 = vpop.xlane.xlu0 %2757
    %v2759 = vsel %vm960, %v2745, 0.0
    %2760 = vadd.xlane.f32.xlu0 %v2759
    %v2761 = vpop.xlane.xlu0 %2760
    %v2762 = vsel %vm960, %v2746, 0.0
    %2763 = vadd.xlane.f32.xlu0 %v2762
    %v2764 = vpop.xlane.xlu0 %2763
    %v2765 = vmul.f32 %v2749, %v1812
    %v2766 = vmul.f32 %v2752, %v1812
    %v2767 = vmul.f32 %v2755, %v1812
    %v2768 = vmul.f32 %v2758, %v1812
    %v2769 = vmul.f32 %v2761, %v1812
    %v2770 = vmul.f32 %v2764, %v1812
    %v2771 = vadd.f32 %v2765, 0.0
    %v2772 = vadd.f32 %v2766, 0.0
    %v2773 = vadd.f32 %v2767, 0.0
    %v2774 = vadd.f32 %v2768, 0.0
    %v2775 = vadd.f32 %v2769, 0.0
    %v2776 = vadd.f32 %v2770, 0.0
    %v2777 = vsel %vm1829, %v2694, -1e+30
    %v2778 = vsel %vm1829, %v2695, -1e+30
    %v2779 = vsel %vm1829, %v2696, -1e+30
    %v2780 = vsel %vm1829, %v2697, -1e+30
    %v2781 = vsel %vm1829, %v2698, -1e+30
    %v2782 = vsel %vm1829, %v2699, -1e+30
    %2783 = vmax.xlane.f32.xlu0 %v2777
    %v2784 = vpop.xlane.xlu0 %2783
    %2785 = vmax.xlane.f32.xlu0 %v2778
    %v2786 = vpop.xlane.xlu0 %2785
    %2787 = vmax.xlane.f32.xlu0 %v2779
    %v2788 = vpop.xlane.xlu0 %2787
    %2789 = vmax.xlane.f32.xlu0 %v2780
    %v2790 = vpop.xlane.xlu0 %2789
    %2791 = vmax.xlane.f32.xlu0 %v2781
    %v2792 = vpop.xlane.xlu0 %2791
    %2793 = vmax.xlane.f32.xlu0 %v2782
    %v2794 = vpop.xlane.xlu0 %2793
    %v2795 = vsel %vm1756, %v2784, -1e+30
    %v2796 = vsel %vm1757, %v2786, -1e+30
    %v2797 = vsel %vm1758, %v2788, -1e+30
    %v2798 = vsel %vm1759, %v2790, -1e+30
    %v2799 = vsel %vm1760, %v2792, -1e+30
    %v2800 = vsel %vm1761, %v2794, -1e+30
    %v2801 = vsel %vm960, %v2795, -inf
    %v2802 = vsel %vm960, %v2796, -inf
    %v2803 = vsel %vm960, %v2797, -inf
    %v2804 = vsel %vm960, %v2798, -inf
    %v2805 = vsel %vm960, %v2799, -inf
    %v2806 = vmax.f32 %v2801, %v2805
    %v2807 = vsel %vm960, %v2800, -inf
    %v2808 = vmax.f32 %v2802, %v2807
    %v2809 = vmax.f32 %v2806, %v2808
    %v2810 = vmax.f32 %v2803, %v2804
    %v2811 = vmax.f32 %v2809, %v2810
    %v2812 = vrot.slane %v2811, 4
    %v2813 = vmax.f32 %v2811, %v2812
    %v2814 = vrot.slane %v2813, 2
    %v2815 = vmax.f32 %v2813, %v2814
    %v2816 = vrot.slane %v2815, 1
    %v2817 = vmax.f32 %v2815, %v2816
    %v2818 = vmul.f32 %v109, %v2817
    %v2819 = vmul.f32 %v110, %v2817
    %v2820 = vmul.f32 %v111, %v2817
    %v2821 = vmul.f32 %v112, %v2817
    %v2822 = vmul.f32 %v113, %v2817
    %v2823 = vmul.f32 %v114, %v2817
    %v2824 = vsel %vm960, %v2818, 0.0
    %2825 = vadd.xlane.f32.xlu0 %v2824
    %v2826 = vpop.xlane.xlu0 %2825
    %v2827 = vsel %vm960, %v2819, 0.0
    %2828 = vadd.xlane.f32.xlu0 %v2827
    %v2829 = vpop.xlane.xlu0 %2828
    %v2830 = vsel %vm960, %v2820, 0.0
    %2831 = vadd.xlane.f32.xlu0 %v2830
    %v2832 = vpop.xlane.xlu0 %2831
    %v2833 = vsel %vm960, %v2821, 0.0
    %2834 = vadd.xlane.f32.xlu0 %v2833
    %v2835 = vpop.xlane.xlu0 %2834
    %v2836 = vsel %vm960, %v2822, 0.0
    %2837 = vadd.xlane.f32.xlu0 %v2836
    %v2838 = vpop.xlane.xlu0 %2837
    %v2839 = vsel %vm960, %v2823, 0.0
    %2840 = vadd.xlane.f32.xlu0 %v2839
    %v2841 = vpop.xlane.xlu0 %2840
    %v2842 = vmul.f32 %v2826, %v1898
    %v2843 = vmul.f32 %v2829, %v1898
    %v2844 = vmul.f32 %v2832, %v1898
    %v2845 = vmul.f32 %v2835, %v1898
    %v2846 = vmul.f32 %v2838, %v1898
    %v2847 = vmul.f32 %v2841, %v1898
    %v2848 = vadd.f32 %v2771, %v2842
    %v2849 = vadd.f32 %v2772, %v2843
    %v2850 = vadd.f32 %v2773, %v2844
    %v2851 = vadd.f32 %v2774, %v2845
    %v2852 = vadd.f32 %v2775, %v2846
    %v2853 = vadd.f32 %v2776, %v2847
    %v2854 = vsub.f32 %v2694, %v2848
    %v2855 = vsub.f32 %v2695, %v2849
    %v2856 = vsub.f32 %v2696, %v2850
    %v2857 = vsub.f32 %v2697, %v2851
    %v2858 = vsub.f32 %v2698, %v2852
    %v2859 = vsub.f32 %v2699, %v2853
    %v2860 = vmin.f32 %v2854, 0.0
    %v2861 = vmin.f32 %v2855, 0.0
    %v2862 = vmin.f32 %v2856, 0.0
    %v2863 = vmin.f32 %v2857, 0.0
    %v2864 = vmin.f32 %v2858, 0.0
    %v2865 = vmin.f32 %v2859, 0.0
    %v2866 = vmul.f32 %v2860, 1.442695
    %v2867 = vpow.pop %v2866
    %v2868 = vmul.f32 %v2861, 1.442695
    %v2869 = vpow.pop %v2868
    %v2870 = vmul.f32 %v2862, 1.442695
    %v2871 = vpow.pop %v2870
    %v2872 = vmul.f32 %v2863, 1.442695
    %v2873 = vpow.pop %v2872
    %v2874 = vmul.f32 %v2864, 1.442695
    %v2875 = vpow.pop %v2874
    %v2876 = vmul.f32 %v2865, 1.442695
    %v2877 = vpow.pop %v2876
    %2878 = vmatprep.subr.mxu0 0.0
    %2879 = vmatpush1.msra.mxu0 %v2867
    %2880 = vmatprep.subr.mxu0 0.0
    %2881 = vmatpush1.msra.mxu0 %v2869
    %2882 = vmatprep.subr.mxu0 0.0
    %2883 = vmatpush1.msra.mxu0 %v2871
    %2884 = vmatprep.subr.mxu0 0.0
    %2885 = vmatpush1.msra.mxu0 %v2873
    %2886 = vmatprep.subr.mxu0 0.0
    %2887 = vmatpush1.msra.mxu0 %v2875
    %2888 = vmatprep.subr.mxu0 0.0
    %2889 = vmatpush1.msra.mxu0 %v2877
    %2890 = vmatprep.subr.mxu0 0.0
    %2891 = vmatpush1.msra.mxu0 0.0
    %2892 = vmatprep.subr.mxu0 0.0
    %2893 = vmatpush1.msra.mxu0 0.0
    %2894 = vmatprep.subr.mxu0 0.0
    %2895 = vmatpush1.msra.mxu0 0.0
    %2896 = vmatprep.subr.mxu0 0.0
    %2897 = vmatpush1.msra.mxu0 0.0
    %2898 = vmatprep.subr.mxu0 0.0
    %2899 = vmatpush1.msra.mxu0 0.0
    %2900 = vmatprep.subr.mxu0 0.0
    %2901 = vmatpush1.msra.mxu0 0.0
    %2902 = vmatprep.subr.mxu0 0.0
    %2903 = vmatpush1.msra.mxu0 0.0
    %2904 = vmatprep.subr.mxu0 0.0
    %2905 = vmatpush1.msra.mxu0 0.0
    %2906 = vmatprep.subr.mxu0 0.0
    %2907 = vmatpush1.msra.mxu0 0.0
    %2908 = vmatprep.subr.mxu0 0.0
    %2909 = vmatpush1.msra.mxu0 0.0
    %2910 = vmatprep.subr.mxu0 0.0
    %2911 = vmatpush1.msra.mxu0 0.0
    %2912 = vmatprep.subr.mxu0 0.0
    %2913 = vmatpush1.msra.mxu0 0.0
    %2914 = vmatprep.subr.mxu0 0.0
    %2915 = vmatpush1.msra.mxu0 0.0
    %2916 = vmatprep.subr.mxu0 0.0
    %2917 = vmatpush1.msra.mxu0 0.0
    %2918 = vmatprep.subr.mxu0 0.0
    %2919 = vmatpush1.msra.mxu0 0.0
    %2920 = vmatprep.subr.mxu0 0.0
    %2921 = vmatpush1.msra.mxu0 0.0
    %2922 = vmatprep.subr.mxu0 0.0
    %2923 = vmatpush1.msra.mxu0 0.0
    %2924 = vmatprep.subr.mxu0 0.0
    %2925 = vmatpush1.msra.mxu0 0.0
    %2926 = vmatprep.subr.mxu0 0.0
    %2927 = vmatpush1.msra.mxu0 0.0
    %2928 = vmatprep.subr.mxu0 0.0
    %2929 = vmatpush1.msra.mxu0 0.0
    %2930 = vmatprep.subr.mxu0 0.0
    %2931 = vmatpush1.msra.mxu0 0.0
    %2932 = vmatprep.subr.mxu0 0.0
    %2933 = vmatpush1.msra.mxu0 0.0
    %2934 = vmatprep.subr.mxu0 0.0
    %2935 = vmatpush1.msra.mxu0 0.0
    %2936 = vmatprep.subr.mxu0 0.0
    %2937 = vmatpush1.msra.mxu0 0.0
    %2938 = vmatprep.subr.mxu0 0.0
    %2939 = vmatpush1.msra.mxu0 0.0
    %2940 = vmatprep.subr.mxu0 0.0
    %2941 = vmatpush1.msra.mxu0 0.0
    %2942 = vmatprep.mubr.f32.mxu0 0.0
    %2943 = vmatmul.mubr.f32.gmra.mrb[0].mxu0 %v868
    %v2944 = vpop.f32.mrb[0].mxu0
    %v2945 = vadd.f32 0.0, %v2944
    %v2946 = vpop.f32.mrb[0].mxu0
    %2947 = vmatprep.mubr.f32.mxu0 0.0
    %2948 = vmatmul.mubr.f32.gmra.mrb[0].mxu0 %v871
    %v2949 = vpop.f32.mrb[0].mxu0
    %v2950 = vadd.f32 0.0, %v2949
    %v2951 = vpop.f32.mrb[0].mxu0
    %2952 = vdwg.mxu0
    %v2953 = vmul.f32 %v2867, %v2541
    %v2954 = vmul.f32 %v2869, %v2547
    %v2955 = vmul.f32 %v2871, %v2553
    %v2956 = vmul.f32 %v2873, %v2559
    %v2957 = vmul.f32 %v2875, %v2565
    %v2958 = vmul.f32 %v2877, %v2571
    %2959 = vmatprep.subr.mxu0 0.0
    %2960 = vmatpush1.msra.mxu0 %v2953
    %2961 = vmatprep.subr.mxu0 0.0
    %2962 = vmatpush1.msra.mxu0 %v2954
    %2963 = vmatprep.subr.mxu0 0.0
    %2964 = vmatpush1.msra.mxu0 %v2955
    %2965 = vmatprep.subr.mxu0 0.0
    %2966 = vmatpush1.msra.mxu0 %v2956
    %2967 = vmatprep.subr.mxu0 0.0
    %2968 = vmatpush1.msra.mxu0 %v2957
    %2969 = vmatprep.subr.mxu0 0.0
    %2970 = vmatpush1.msra.mxu0 %v2958
    %2971 = vmatprep.subr.mxu0 0.0
    %2972 = vmatpush1.msra.mxu0 0.0
    %2973 = vmatprep.subr.mxu0 0.0
    %2974 = vmatpush1.msra.mxu0 0.0
    %2975 = vmatprep.subr.mxu0 0.0
    %2976 = vmatpush1.msra.mxu0 0.0
    %2977 = vmatprep.subr.mxu0 0.0
    %2978 = vmatpush1.msra.mxu0 0.0
    %2979 = vmatprep.subr.mxu0 0.0
    %2980 = vmatpush1.msra.mxu0 0.0
    %2981 = vmatprep.subr.mxu0 0.0
    %2982 = vmatpush1.msra.mxu0 0.0
    %2983 = vmatprep.subr.mxu0 0.0
    %2984 = vmatpush1.msra.mxu0 0.0
    %2985 = vmatprep.subr.mxu0 0.0
    %2986 = vmatpush1.msra.mxu0 0.0
    %2987 = vmatprep.subr.mxu0 0.0
    %2988 = vmatpush1.msra.mxu0 0.0
    %2989 = vmatprep.subr.mxu0 0.0
    %2990 = vmatpush1.msra.mxu0 0.0
    %2991 = vmatprep.subr.mxu0 0.0
    %2992 = vmatpush1.msra.mxu0 0.0
    %2993 = vmatprep.subr.mxu0 0.0
    %2994 = vmatpush1.msra.mxu0 0.0
    %2995 = vmatprep.subr.mxu0 0.0
    %2996 = vmatpush1.msra.mxu0 0.0
    %2997 = vmatprep.subr.mxu0 0.0
    %2998 = vmatpush1.msra.mxu0 0.0
    %2999 = vmatprep.subr.mxu0 0.0
    %3000 = vmatpush1.msra.mxu0 0.0
    %3001 = vmatprep.subr.mxu0 0.0
    %3002 = vmatpush1.msra.mxu0 0.0
    %3003 = vmatprep.subr.mxu0 0.0
    %3004 = vmatpush1.msra.mxu0 0.0
    %3005 = vmatprep.subr.mxu0 0.0
    %3006 = vmatpush1.msra.mxu0 0.0
    %3007 = vmatprep.subr.mxu0 0.0
    %3008 = vmatpush1.msra.mxu0 0.0
    %3009 = vmatprep.subr.mxu0 0.0
    %3010 = vmatpush1.msra.mxu0 0.0
    %3011 = vmatprep.subr.mxu0 0.0
    %3012 = vmatpush1.msra.mxu0 0.0
    %3013 = vmatprep.subr.mxu0 0.0
    %3014 = vmatpush1.msra.mxu0 0.0
    %3015 = vmatprep.subr.mxu0 0.0
    %3016 = vmatpush1.msra.mxu0 0.0
    %3017 = vmatprep.subr.mxu0 0.0
    %3018 = vmatpush1.msra.mxu0 0.0
    %3019 = vmatprep.subr.mxu0 0.0
    %3020 = vmatpush1.msra.mxu0 0.0
    %3021 = vmatprep.subr.mxu0 0.0
    %3022 = vmatpush1.msra.mxu0 0.0
    %3023 = vmatprep.mubr.f32.mxu0 0.0
    %3024 = vmatmul.mubr.f32.gmra.mrb[0].mxu0 %v868
    %v3025 = vpop.f32.mrb[0].mxu0
    %v3026 = vadd.f32 0.0, %v3025
    %v3027 = vpop.f32.mrb[0].mxu0
    %3028 = vmatprep.mubr.f32.mxu0 0.0
    %3029 = vmatmul.mubr.f32.gmra.mrb[0].mxu0 %v871
    %v3030 = vpop.f32.mrb[0].mxu0
    %v3031 = vadd.f32 0.0, %v3030
    %v3032 = vpop.f32.mrb[0].mxu0
    %3033 = vdwg.mxu0
    %v3034 = vrcp.pop %v2945
    %v3035 = vmul.f32 %v3026, %v3034
    %v3036 = vrcp.pop %v2950
    %v3037 = vmul.f32 %v3031, %v3036
    %s3038 = scalar_lea.vmem %s12, 1
    %v3039 = vld [vmem:[%s3038] sm:$0x1]
    %v3041 = vlaneseq
    %v3042 = vshrl.u32 %v3041, 7
    %v3043 = vsub.s32 0, %v3042
    %v3044 = vrot.slane %v3039, %v3043
    %v3046 = vadd.f32 %v3035, %v3044
    %v3047 = vadd.f32 %v3037, %v3044
    %v3048 = vmax.f32 %v3046, 0.0
    %v3049 = vmax.f32 %v3047, 0.0
    %v3050 = vpack.c.bf16 %v3049, %v3048
    %v3051 = vld [vmem:[%s13] sm:$0xf]
    %v3052 = vld [vmem:[%s13 + $0x4] sm:$0xf]
    %v3053 = vld [vmem:[%s13 + $0x8] sm:$0xf]
    %v3054 = vld [vmem:[%s13 + $0xc] sm:$0xf]
    %v3055 = vld [vmem:[%s13 + $0x10] sm:$0xf]
    %v3056 = vld [vmem:[%s13 + $0x14] sm:$0xf]
    %v3057 = vld [vmem:[%s13 + $0x18] sm:$0xf]
    %v3058 = vld [vmem:[%s13 + $0x1c] sm:$0xf]
    %v3059 = vld [vmem:[%s13 + $0x20] sm:$0xf]
    %v3060 = vld [vmem:[%s13 + $0x24] sm:$0xf]
    %v3061 = vld [vmem:[%s13 + $0x28] sm:$0xf]
    %v3062 = vld [vmem:[%s13 + $0x2c] sm:$0xf]
    %v3063 = vld [vmem:[%s13 + $0x30] sm:$0xf]
    %v3064 = vld [vmem:[%s13 + $0x34] sm:$0xf]
    %v3065 = vld [vmem:[%s13 + $0x38] sm:$0xf]
    %v3066 = vld [vmem:[%s13 + $0x3c] sm:$0xf]
    %v3067 = vld [vmem:[%s14] sm:$0x1]
    %v3069 = vlaneseq
    %v3070 = vshrl.u32 %v3069, 7
    %v3071 = vsub.s32 0, %v3070
    %v3072 = vrot.slane %v3067, %v3071
    %v3090 = vunpack.c.l.b16 %v3051
    %v3091 = vunpack.c.l.b16 %v3052
    %v3092 = vunpack.c.l.b16 %v3053
    %v3093 = vunpack.c.l.b16 %v3054
    %v3094 = vunpack.c.l.b16 %v3055
    %v3095 = vunpack.c.l.b16 %v3056
    %v3096 = vunpack.c.l.b16 %v3057
    %v3097 = vunpack.c.l.b16 %v3058
    %v3098 = vunpack.c.l.b16 %v3059
    %v3099 = vunpack.c.l.b16 %v3060
    %v3100 = vunpack.c.l.b16 %v3061
    %v3101 = vunpack.c.l.b16 %v3062
    %v3102 = vunpack.c.l.b16 %v3063
    %v3103 = vunpack.c.l.b16 %v3064
    %v3104 = vunpack.c.l.b16 %v3065
    %v3105 = vunpack.c.l.b16 %v3066
    %v3106 = vpack.c.b16 %v3091, %v3090
    %v3107 = vpack.c.b16 %v3093, %v3092
    %v3108 = vpack.c.b16 %v3095, %v3094
    %v3109 = vpack.c.b16 %v3097, %v3096
    %v3110 = vpack.c.b16 %v3099, %v3098
    %v3111 = vpack.c.b16 %v3101, %v3100
    %v3112 = vpack.c.b16 %v3103, %v3102
    %v3113 = vpack.c.b16 %v3105, %v3104
    %3122 = vmatprep.subr.bf16.mxu0 0
    %3123 = vmatpush1.bf16.msra.mxu0 %v3106
    %3124 = vmatprep.subr.bf16.mxu0 0
    %3125 = vmatpush1.bf16.msra.mxu0 %v3107
    %3126 = vmatprep.subr.bf16.mxu0 0
    %3127 = vmatpush1.bf16.msra.mxu0 %v3108
    %3128 = vmatprep.subr.bf16.mxu0 0
    %3129 = vmatpush1.bf16.msra.mxu0 %v3109
    %3130 = vmatprep.subr.bf16.mxu0 0
    %3131 = vmatpush1.bf16.msra.mxu0 %v3110
    %3132 = vmatprep.subr.bf16.mxu0 0
    %3133 = vmatpush1.bf16.msra.mxu0 %v3111
    %3134 = vmatprep.subr.bf16.mxu0 0
    %3135 = vmatpush1.bf16.msra.mxu0 %v3112
    %3136 = vmatprep.subr.bf16.mxu0 0
    %3137 = vmatpush1.bf16.msra.mxu0 %v3113
    %3138 = vmatprep.subr.bf16.mxu0 0
    %3139 = vmatpush1.bf16.msra.mxu0 0
    %3140 = vmatprep.subr.bf16.mxu0 0
    %3141 = vmatpush1.bf16.msra.mxu0 0
    %3142 = vmatprep.subr.bf16.mxu0 0
    %3143 = vmatpush1.bf16.msra.mxu0 0
    %3144 = vmatprep.subr.bf16.mxu0 0
    %3145 = vmatpush1.bf16.msra.mxu0 0
    %3146 = vmatprep.subr.bf16.mxu0 0
    %3147 = vmatpush1.bf16.msra.mxu0 0
    %3148 = vmatprep.subr.bf16.mxu0 0
    %3149 = vmatpush1.bf16.msra.mxu0 0
    %3150 = vmatprep.subr.bf16.mxu0 0
    %3151 = vmatpush1.bf16.msra.mxu0 0
    %3152 = vmatprep.subr.bf16.mxu0 0
    %3153 = vmatpush1.bf16.msra.mxu0 0
    %3154 = vmatprep.mubr.bf16.mxu0 0
    %3155 = vmatmul.mubr.bf16.gmra.mrb[0].mxu0 %v3050
    %v3156 = vpop.f32.mrb[0].mxu0
    %v3157 = vadd.f32 %v3072, %v3156
    %v3158 = vpop.f32.mrb[0].mxu0
    %v3159 = vpop.f32.mrb[0].mxu0
    %v3160 = vadd.f32 %v3072, %v3159
    %v3161 = vpop.f32.mrb[0].mxu0
    %3162 = vdwg.mxu0
    %3163 = vst [vmem:[#allocation10] sm:$0xff] %v3157
    %3164 = vst [vmem:[#allocation10 + $0x8] sm:$0xff] %v3160
    // Predicated region
    $region78: #{tpu_custom_call.1} parent=1 // pred_check
      _
    $region79: #{tpu_custom_call.1} parent=1 // pred_check_branch
      %3166 = sbr.rel (0) target = $region81
    $region80: #{tpu_custom_call.1} parent=1 // pred_region
      %s3168 = ssub.s32 256, 256
      %3169 = vsyncadd [#allocation4], %s3168
      %s3170 = sshll.u32 [#allocation10], 4
      %s3171 = int_to_ptr.vmem [resolvable:$true] %s3170
      %3176 = dma.vmem_to_hbm [thread:$0]  %s3171, 256, %s15, [#allocation4], 128, 128, 8
    $region81: #{tpu_custom_call.1} parent=1 // pred_fallthru
      _
    // Predicated region
    $region82: #{tpu_custom_call.1} parent=1 // pred_check
      _
    $region83: #{tpu_custom_call.1} parent=1 // pred_check_branch
      %3178 = sbr.rel (0) target = $region85
    $region84: #{tpu_custom_call.1} parent=1 // pred_region
      %3179 = dma.done [#allocation4], 256
    $region85: #{tpu_custom_call.1} parent=1 // pred_fallthru
      _
    %3180 = vsyncpa [#allocation3], 1
    %3181 = vsyncpa [#allocation6], 1
    %3182 = vsyncpa [#allocation9], 1
    %3183 = vsyncpa [#allocation4], 1

</llo_original>
